<compile_context>
chip_gen: v7x
topology: tpu7x:2x2x1
jax: 0.10.0
libtpu: 0.0.40
codegen_flags: <defaults>
</compile_context>

<pallas_src>
import jax
import jax.numpy as jnp
import numpy as np
from jax import lax
from jax.experimental import pallas as pl
from jax.experimental.pallas import tpu as pltpu

HI = lax.Precision.HIGHEST          # only used by the pure-JAX reference

# ----------------- small, forward-consistent hyper-parameters ---------------
B = 2                      # batch_size
NPRATIO = 1
CDD = NPRATIO + 1          # cdd_size = 2
HIS = 3                    # his_size
L = 18                     # title_size / signal_length (18 -> 6 -> 2 => 16*2*2 = 64)
E = 32                     # embedding_dim
F = 16                     # filter_num
V = 50                     # vocab size
P1 = L // 3                # 6  (after first MaxPool(3,3))
P2 = P1 // 3               # 2  (after second MaxPool(3,3))
C1 = 32                    # SeqCNN conv1 out channels
C2 = 16                    # SeqCNN conv2 out channels

NC = B * CDD               # candidate titles               (4)
NH = B * HIS               # clicked titles                 (6)
NTOT = NC + NH             # titles encoded by the news CNN (10)
NIMG = B * CDD * HIS       # number of L x L fusion images  (12)
RIMG = NIMG * L            # stacked image rows             (216)

K1, N1 = 3 * L, 3 * P1 * C1          # conv1 band:  (54, 576)
K2, N2 = 3 * P1 * C1, 3 * P2 * C2    # conv2 band: (576, 96)
G1 = P1 * C1               # 192 (lane group after stage-1 j-pool)
G2 = P2 * C2               # 32  (lane group after stage-2 j-pool)


# ------------------------- host-side (init-time) tables ----------------------
def _band_indicator(width, pool):
    """IND[e, p, jcol] = 1 iff unpadded input column p feeds tap e (= dj) of
    output column j, with output columns ordered jcol = (j%3)*pool + j//3 so
    the stride-3 max-pool over j becomes 3 contiguous lane slices."""
    ind = np.zeros((3, width, width), np.float32)
    for jcol in range(width):
        r, p = jcol // pool, jcol % pool
        j = 3 * p + r
        for e in range(3):
            src = j + e - 1                    # pad=1; out-of-range taps hit zeros
            if 0 <= src < width:
                ind[e, src, jcol] = 1.0
    return ind


IND1 = _band_indicator(L, P1)    # [3, 18, 18]
IND2 = _band_indicator(P1, P2)   # [3, 6, 6]

# row position within each 18-row image/title block (shared by both slabs)
ROWPOS = (np.arange(RIMG, dtype=np.int32) % L).reshape(RIMG, 1)


def _head_selectors():
    """Selector matrices for the head.

    Final pooled features for image m = (b*HIS + h)*CDD + c live (uncompacted)
    at rows m*L + 9*ph of the [RIMG, G2] slab.  SELC0/SELC9 pick the ph=0/ph=1
    rows into candidate columns; BSELT sums the rows of each batch.
    """
    s0 = np.zeros((RIMG, CDD), np.float32)
    s9 = np.zeros((RIMG, CDD), np.float32)
    bs = np.zeros((B, RIMG), np.float32)
    for b in range(B):
        for h in range(HIS):
            for c in range(CDD):
                m = (b * HIS + h) * CDD + c
                s0[m * L + 0, c] = 1.0                 # ph = 0 row
                s9[m * L + 9, c] = 1.0                 # ph = 1 row (i = 3*3*ph)
                bs[b, m * L:(m + 1) * L] = 1.0
    return s0, s9, bs


SELC0, SELC9, BSELT = _head_selectors()


def prepare_gca_weights(params):
    """One-time (model-init) weight preparation, hoisted out of the per-call
    forward: banded conv weights, tiled biases, folded mean/Linear head."""
    wc = jnp.transpose(params['w_cnn'], (2, 1, 0)).reshape(3 * E, F)
    bc = params['b_cnn'].reshape(1, F)

    # SeqCNN banded weights: rows = (di, input col[, in-ch]), cols = (j%3, pj, ch)
    w1b = jnp.einsum('epj,ode->dpjo', jnp.asarray(IND1),
                     params['w1'][:, 0, :, :]).reshape(K1, N1)
    b1w = jnp.tile(params['b1'], 3 * P1).reshape(1, N1)
    w2b = jnp.einsum('epj,oide->dpijo', jnp.asarray(IND2),
                     params['w2']).reshape(K2, N2)
    b2w = jnp.tile(params['b2'], 3 * P2).reshape(1, N2)

    # Linear(64,1): PyTorch flatten order is (ch, ph, pw); permute to the
    # kernel's (pw, ch) lane order, one column per ph, with 1/HIS mean folded.
    wl_r = params['wl'][0].reshape(C2, P2, P2)                 # [ch, ph, pw]
    wh = jnp.transpose(wl_r, (2, 0, 1)).reshape(P2 * C2, P2) * (1.0 / HIS)

    return {
        'emb': params['emb'],
        'wc': wc, 'bc': bc, 'w1b': w1b, 'b1w': b1w, 'w2b': w2b, 'b2w': b2w,
        'wh': wh, 'bl': params['bl'].reshape(1, 1),
        'selc0': jnp.asarray(SELC0), 'selc9': jnp.asarray(SELC9),
        'bselT': jnp.asarray(BSELT), 'rowpos': jnp.asarray(ROWPOS),
    }


# --------------------------- the single fused kernel -------------------------
def _gca_fused_kernel(x_ref, rp_ref, wc_ref, bc_ref, w1_ref, b1_ref,
                      w2_ref, b2_ref, wh_ref, s0_ref, s9_ref, bs_ref,
                      bl_ref, o_ref):
    f32 = jnp.float32

    def shift_up(a, k):        # row r <- row r + k   (zeros appended at bottom)
        return jnp.concatenate(
            [a[k:, :], jnp.zeros((k, a.shape[1]), a.dtype)], axis=0)

    def shift_down(a, k):      # row r <- row r - k   (zeros at top)
        return jnp.concatenate(
            [jnp.zeros((k, a.shape[1]), a.dtype), a[:a.shape[0] - k, :]], axis=0)

    rp = rp_ref[...]                                   # [RIMG, 1] row pos in 18-row block
    rp_news = rp[:NTOT * L]                            # [180, 1] (180 = 10 * L)

    # ---- news 1d-CNN: one (180, 3E) @ (3E, F) matmul, slab-wide row taps ----
    x = x_ref[...]                                     # [NTOT*L, E]
    prev = jnp.where(rp_news == 0, 0.0, shift_down(x, 1))
    nxt = jnp.where(rp_news == L - 1, 0.0, shift_up(x, 1))
    xb = jnp.concatenate([prev, x, nxt], axis=1)       # [180, 96]
    y = jnp.maximum(
        jnp.dot(xb, wc_ref[...], preferred_element_type=f32) + bc_ref[...], 0.0)

    # ---- fusion: ONE matmul, then the per-batch diagonal blocks -------------
    fus = lax.dot_general(y[:NC * L, :], y[NC * L:, :],
                          (((1,), (1,)), ((), ())),
                          preferred_element_type=f32)  # [72, 108]
    blocks = []
    for b in range(B):
        rows = fus[b * CDD * L:(b + 1) * CDD * L, :]   # [CDD*L, NH*L]
        for h in range(HIS):
            c0 = (b * HIS + h) * L
            blocks.append(rows[:, c0:c0 + L])          # [CDD*L, L]
    img = jnp.concatenate(blocks, axis=0)              # [RIMG, L]; image m=(b,h,c)

    # ---- SeqCNN stage 1: Conv2d(1->32,3x3,pad1) + ReLU + MaxPool(3,3) -------
    prev = jnp.where(rp == 0, 0.0, shift_down(img, 1))
    nxt = jnp.where(rp == L - 1, 0.0, shift_up(img, 1))
    x1 = jnp.concatenate([prev, img, nxt], axis=1)     # [RIMG, 3L]
    o1 = jnp.maximum(
        jnp.dot(x1, w1_ref[...], preferred_element_type=f32) + b1_ref[...], 0.0)
    pj1 = jnp.maximum(jnp.maximum(o1[:, :G1], o1[:, G1:2 * G1]), o1[:, 2 * G1:])
    p1 = jnp.maximum(jnp.maximum(pj1, shift_up(pj1, 1)), shift_up(pj1, 2))
    # p1 holds the pooled (pi, pj, ch) map at rows m*L + 3*pi; other rows unused

    # ---- SeqCNN stage 2: Conv2d(32->16,3x3,pad1) + ReLU + MaxPool(3,3) ------
    prev = jnp.where(rp == 0, 0.0, shift_down(p1, 3))
    nxt = jnp.where(rp == L - 3, 0.0, shift_up(p1, 3))
    x2 = jnp.concatenate([prev, p1, nxt], axis=1)      # [RIMG, 3*G1]
    o2 = jnp.maximum(
        jnp.dot(x2, w2_ref[...], preferred_element_type=f32) + b2_ref[...], 0.0)
    pj2 = jnp.maximum(jnp.maximum(o2[:, :G2], o2[:, G2:2 * G2]), o2[:, 2 * G2:])
    p2 = jnp.maximum(jnp.maximum(pj2, shift_up(pj2, 3)), shift_up(pj2, 6))
    # p2 holds final (ph, pw, ch) features at rows m*L + 9*ph

    # ---- head: mean over his + Linear(64,1) (selector matmuls) + log_softmax
    t = jnp.dot(p2, wh_ref[...], preferred_element_type=f32)      # [RIMG, P2]
    contrib = t[:, 0:1] * s0_ref[...] + t[:, 1:2] * s9_ref[...]   # [RIMG, CDD]
    score = (jnp.dot(bs_ref[...], contrib, preferred_element_type=f32)
             + bl_ref[...])                                       # [B, CDD]
    if CDD > 1:                                                   # log_softmax(dim=1)
        z = score - jnp.max(score, axis=-1, keepdims=True)
        o_ref[...] = z - jnp.log(jnp.sum(jnp.exp(z), axis=-1, keepdims=True))
    else:                                                         # sigmoid
        o_ref[...] = 1.0 / (1.0 + jnp.exp(-score))


# ------------------------------ full forward ---------------------------------
@jax.jit
def gca_forward_pallas(cand_ids, click_ids, prep):
    # per-call work is just the embedding gather + stacking (cand first)
    ids = jnp.concatenate(
        [cand_ids.reshape(NC, L), click_ids.reshape(NH, L)], axis=0)
    x = prep['emb'][ids].reshape(NTOT * L, E)          # [180, 32]

    vmem = pl.BlockSpec(memory_space=pltpu.VMEM)
    return pl.pallas_call(
        _gca_fused_kernel,
        out_shape=jax.ShapeDtypeStruct((B, CDD), jnp.float32),
        in_specs=[vmem] * 13,
        out_specs=vmem,
    )(x, prep['rowpos'], prep['wc'], prep['bc'], prep['w1b'], prep['b1w'],
      prep['w2b'], prep['b2w'], prep['wh'], prep['selc0'], prep['selc9'],
      prep['bselT'], prep['bl'])


# --------------------- pure-JAX reference (PyTorch semantics) ----------------
def gca_forward_reference(cand_ids, click_ids, params):
    emb, w_cnn, b_cnn = params['emb'], params['w_cnn'], params['b_cnn']

    def enc(ids):
        bb, xx, ll = ids.shape
        xe = emb[ids].reshape(bb * xx, ll, E).transpose(0, 2, 1)  # [N, E, L]
        y = lax.conv_general_dilated(xe, w_cnn, (1,), ((1, 1),),
                                     dimension_numbers=('NCH', 'OIH', 'NCH'),
                                     precision=HI)
        y = y + b_cnn[None, :, None]
        y = jnp.transpose(y, (0, 2, 1)).reshape(bb, xx, ll, F)
        return jnp.maximum(y, 0.0)

    cdd, his = enc(cand_ids), enc(click_ids)
    fus = jnp.einsum('bclf,bhmf->bchlm', cdd, his, precision=HI)
    img = fus.reshape(B * CDD * HIS, 1, L, L)

    def conv2d(x, w, b):
        y = lax.conv_general_dilated(x, w, (1, 1), ((1, 1), (1, 1)),
                                     dimension_numbers=('NCHW', 'OIHW', 'NCHW'),
                                     precision=HI)
        return y + b[None, :, None, None]

    def maxpool3(x):
        return lax.reduce_window(x, -jnp.inf, lax.max,
                                 (1, 1, 3, 3), (1, 1, 3, 3), 'VALID')

    y = maxpool3(jnp.maximum(conv2d(img, params['w1'], params['b1']), 0.0))
    y = maxpool3(jnp.maximum(conv2d(y, params['w2'], params['b2']), 0.0))
    fv = jnp.mean(y.reshape(B, CDD, HIS, -1), axis=2)            # NCHW flatten
    score = fv @ params['wl'][0] + params['bl'][0]
    return jax.nn.log_softmax(score, axis=1) if CDD > 1 else jax.nn.sigmoid(score)


if __name__ == "__main__":
    key = jax.random.PRNGKey(0)
    ks = jax.random.split(key, 11)
    params = {
        'emb':   jax.random.normal(ks[0], (V, E), jnp.float32) * 0.3,
        'w_cnn': jax.random.normal(ks[1], (F, E, 3), jnp.float32) * 0.1,
        'b_cnn': jax.random.normal(ks[2], (F,), jnp.float32) * 0.1,
        'w1':    jax.random.normal(ks[3], (C1, 1, 3, 3), jnp.float32) * 0.2,
        'b1':    jax.random.normal(ks[4], (C1,), jnp.float32) * 0.1,
        'w2':    jax.random.normal(ks[5], (C2, C1, 3, 3), jnp.float32) * 0.1,
        'b2':    jax.random.normal(ks[6], (C2,), jnp.float32) * 0.1,
        'wl':    jax.random.normal(ks[7], (1, 64), jnp.float32) * 0.2,
        'bl':    jax.random.normal(ks[8], (1,), jnp.float32) * 0.1,
    }
    cand_ids = jax.random.randint(ks[9], (B, CDD, L), 0, V, dtype=jnp.int32)
    click_ids = jax.random.randint(ks[10], (B, HIS, L), 0, V, dtype=jnp.int32)

    prep = prepare_gca_weights(params)     # once, at init (hoisted per review)
    score = jax.block_until_ready(gca_forward_pallas(cand_ids, click_ids, prep))
    ref = jax.block_until_ready(gca_forward_reference(cand_ids, click_ids, params))
    # kernel uses default MXU precision vs an f32 HIGHEST reference -> 3e-2
    np.testing.assert_allclose(np.asarray(score), np.asarray(ref),
                               rtol=3e-2, atol=3e-2)
    print("KERNEL_OK")
</pallas_src>

<mosaic_0001>
module attributes {stable_mosaic.version = 11 : i64} {
  func.func @_gca_fused_kernel(%arg0: memref<180x32xf32, #tpu.memory_space<vmem>>, %arg1: memref<216x1xi32, #tpu.memory_space<vmem>>, %arg2: memref<96x16xf32, #tpu.memory_space<vmem>>, %arg3: memref<1x16xf32, #tpu.memory_space<vmem>>, %arg4: memref<54x576xf32, #tpu.memory_space<vmem>>, %arg5: memref<1x576xf32, #tpu.memory_space<vmem>>, %arg6: memref<576x96xf32, #tpu.memory_space<vmem>>, %arg7: memref<1x96xf32, #tpu.memory_space<vmem>>, %arg8: memref<32x2xf32, #tpu.memory_space<vmem>>, %arg9: memref<216x2xf32, #tpu.memory_space<vmem>>, %arg10: memref<216x2xf32, #tpu.memory_space<vmem>>, %arg11: memref<2x216xf32, #tpu.memory_space<vmem>>, %arg12: memref<1x1xf32, #tpu.memory_space<vmem>>, %arg13: memref<2x2xf32, #tpu.memory_space<vmem>>) attributes {dimension_semantics = [], scalar_prefetch = 0 : i64, scratch_operands = 0 : i64, tpu.core_type = #tpu.core_type<tc>} {
    %c0 = arith.constant 0 : index
    %c0_0 = arith.constant 0 : index
    %0 = vector.load %arg1[%c0, %c0_0] : memref<216x1xi32, #tpu.memory_space<vmem>>, vector<216x1xi32>
    %1 = vector.extract_strided_slice %0 {offsets = [0, 0], sizes = [180, 1], strides = [1, 1]} : vector<216x1xi32> to vector<180x1xi32>
    %c0_1 = arith.constant 0 : index
    %c0_2 = arith.constant 0 : index
    %2 = vector.load %arg0[%c0_1, %c0_2] : memref<180x32xf32, #tpu.memory_space<vmem>>, vector<180x32xf32>
    %c0_i32 = arith.constant 0 : i32
    %3 = vector.broadcast %c0_i32 : i32 to vector<180x1xi32>
    %4 = arith.cmpi eq, %1, %3 : vector<180x1xi32>
    %cst = arith.constant 0.000000e+00 : f32
    %5 = vector.broadcast %cst : f32 to vector<1x32xf32>
    %6 = vector.extract_strided_slice %2 {offsets = [0, 0], sizes = [179, 32], strides = [1, 1]} : vector<180x32xf32> to vector<179x32xf32>
    %7 = tpu.concatenate %5, %6 in 0 : vector<1x32xf32>, vector<179x32xf32> -> vector<180x32xf32>
    %cst_3 = arith.constant 0.000000e+00 : f32
    %8 = vector.shape_cast %4 : vector<180x1xi1> to vector<180x1xi1>
    %9 = vector.broadcast %8 : vector<180x1xi1> to vector<180x32xi1>
    %10 = vector.broadcast %cst_3 : f32 to vector<180x32xf32>
    %11 = arith.select %9, %10, %7 : vector<180x32xi1>, vector<180x32xf32>
    %c17_i32 = arith.constant 17 : i32
    %12 = vector.broadcast %c17_i32 : i32 to vector<180x1xi32>
    %13 = arith.cmpi eq, %1, %12 : vector<180x1xi32>
    %14 = vector.extract_strided_slice %2 {offsets = [1, 0], sizes = [179, 32], strides = [1, 1]} : vector<180x32xf32> to vector<179x32xf32>
    %cst_4 = arith.constant 0.000000e+00 : f32
    %15 = vector.broadcast %cst_4 : f32 to vector<1x32xf32>
    %16 = tpu.concatenate %14, %15 in 0 : vector<179x32xf32>, vector<1x32xf32> -> vector<180x32xf32>
    %cst_5 = arith.constant 0.000000e+00 : f32
    %17 = vector.shape_cast %13 : vector<180x1xi1> to vector<180x1xi1>
    %18 = vector.broadcast %17 : vector<180x1xi1> to vector<180x32xi1>
    %19 = vector.broadcast %cst_5 : f32 to vector<180x32xf32>
    %20 = arith.select %18, %19, %16 : vector<180x32xi1>, vector<180x32xf32>
    %21 = tpu.concatenate %11, %2, %20 in 1 : vector<180x32xf32>, vector<180x32xf32>, vector<180x32xf32> -> vector<180x96xf32>
    %c0_6 = arith.constant 0 : index
    %c0_7 = arith.constant 0 : index
    %22 = vector.load %arg2[%c0_6, %c0_7] : memref<96x16xf32, #tpu.memory_space<vmem>>, vector<96x16xf32>
    %cst_8 = arith.constant dense<0.000000e+00> : vector<180x16xf32>
    %23 = tpu.matmul %21, %22, %cst_8 {dimension_numbers = #tpu.dot_dimension_numbers<[1], [0], [0], [1], [0, 0, 1, 1], [], []>} : vector<180x96xf32>, vector<96x16xf32>, vector<180x16xf32> -> vector<180x16xf32>
    %c0_9 = arith.constant 0 : index
    %c0_10 = arith.constant 0 : index
    %24 = vector.load %arg3[%c0_9, %c0_10] : memref<1x16xf32, #tpu.memory_space<vmem>>, vector<1x16xf32>
    %25 = vector.broadcast %24 : vector<1x16xf32> to vector<180x16xf32>
    %26 = arith.addf %23, %25 : vector<180x16xf32>
    %cst_11 = arith.constant 0.000000e+00 : f32
    %27 = vector.broadcast %cst_11 : f32 to vector<180x16xf32>
    %28 = arith.maximumf %26, %27 : vector<180x16xf32>
    %29 = vector.extract_strided_slice %28 {offsets = [0, 0], sizes = [72, 16], strides = [1, 1]} : vector<180x16xf32> to vector<72x16xf32>
    %30 = vector.extract_strided_slice %28 {offsets = [72, 0], sizes = [108, 16], strides = [1, 1]} : vector<180x16xf32> to vector<108x16xf32>
    %cst_12 = arith.constant dense<0.000000e+00> : vector<72x108xf32>
    %31 = tpu.matmul %29, %30, %cst_12 {dimension_numbers = #tpu.dot_dimension_numbers<[1], [1], [0], [0], [0, 0, 1, 0], [], []>} : vector<72x16xf32>, vector<108x16xf32>, vector<72x108xf32> -> vector<72x108xf32>
    %32 = vector.extract_strided_slice %31 {offsets = [0, 0], sizes = [36, 108], strides = [1, 1]} : vector<72x108xf32> to vector<36x108xf32>
    %33 = vector.extract_strided_slice %32 {offsets = [0, 0], sizes = [36, 18], strides = [1, 1]} : vector<36x108xf32> to vector<36x18xf32>
    %34 = vector.extract_strided_slice %32 {offsets = [0, 18], sizes = [36, 18], strides = [1, 1]} : vector<36x108xf32> to vector<36x18xf32>
    %35 = vector.extract_strided_slice %32 {offsets = [0, 36], sizes = [36, 18], strides = [1, 1]} : vector<36x108xf32> to vector<36x18xf32>
    %36 = vector.extract_strided_slice %31 {offsets = [36, 0], sizes = [36, 108], strides = [1, 1]} : vector<72x108xf32> to vector<36x108xf32>
    %37 = vector.extract_strided_slice %36 {offsets = [0, 54], sizes = [36, 18], strides = [1, 1]} : vector<36x108xf32> to vector<36x18xf32>
    %38 = vector.extract_strided_slice %36 {offsets = [0, 72], sizes = [36, 18], strides = [1, 1]} : vector<36x108xf32> to vector<36x18xf32>
    %39 = vector.extract_strided_slice %36 {offsets = [0, 90], sizes = [36, 18], strides = [1, 1]} : vector<36x108xf32> to vector<36x18xf32>
    %40 = tpu.concatenate %33, %34, %35, %37, %38, %39 in 0 : vector<36x18xf32>, vector<36x18xf32>, vector<36x18xf32>, vector<36x18xf32>, vector<36x18xf32>, vector<36x18xf32> -> vector<216x18xf32>
    %c0_i32_13 = arith.constant 0 : i32
    %41 = vector.broadcast %c0_i32_13 : i32 to vector<216x1xi32>
    %42 = arith.cmpi eq, %0, %41 : vector<216x1xi32>
    %cst_14 = arith.constant 0.000000e+00 : f32
    %43 = vector.broadcast %cst_14 : f32 to vector<1x18xf32>
    %44 = vector.extract_strided_slice %40 {offsets = [0, 0], sizes = [215, 18], strides = [1, 1]} : vector<216x18xf32> to vector<215x18xf32>
    %45 = tpu.concatenate %43, %44 in 0 : vector<1x18xf32>, vector<215x18xf32> -> vector<216x18xf32>
    %cst_15 = arith.constant 0.000000e+00 : f32
    %46 = vector.shape_cast %42 : vector<216x1xi1> to vector<216x1xi1>
    %47 = vector.broadcast %46 : vector<216x1xi1> to vector<216x18xi1>
    %48 = vector.broadcast %cst_15 : f32 to vector<216x18xf32>
    %49 = arith.select %47, %48, %45 : vector<216x18xi1>, vector<216x18xf32>
    %c17_i32_16 = arith.constant 17 : i32
    %50 = vector.broadcast %c17_i32_16 : i32 to vector<216x1xi32>
    %51 = arith.cmpi eq, %0, %50 : vector<216x1xi32>
    %52 = vector.extract_strided_slice %40 {offsets = [1, 0], sizes = [215, 18], strides = [1, 1]} : vector<216x18xf32> to vector<215x18xf32>
    %cst_17 = arith.constant 0.000000e+00 : f32
    %53 = vector.broadcast %cst_17 : f32 to vector<1x18xf32>
    %54 = tpu.concatenate %52, %53 in 0 : vector<215x18xf32>, vector<1x18xf32> -> vector<216x18xf32>
    %cst_18 = arith.constant 0.000000e+00 : f32
    %55 = vector.shape_cast %51 : vector<216x1xi1> to vector<216x1xi1>
    %56 = vector.broadcast %55 : vector<216x1xi1> to vector<216x18xi1>
    %57 = vector.broadcast %cst_18 : f32 to vector<216x18xf32>
    %58 = arith.select %56, %57, %54 : vector<216x18xi1>, vector<216x18xf32>
    %59 = tpu.concatenate %49, %40, %58 in 1 : vector<216x18xf32>, vector<216x18xf32>, vector<216x18xf32> -> vector<216x54xf32>
    %c0_19 = arith.constant 0 : index
    %c0_20 = arith.constant 0 : index
    %60 = vector.load %arg4[%c0_19, %c0_20] : memref<54x576xf32, #tpu.memory_space<vmem>>, vector<54x576xf32>
    %cst_21 = arith.constant dense<0.000000e+00> : vector<216x576xf32>
    %61 = tpu.matmul %59, %60, %cst_21 {dimension_numbers = #tpu.dot_dimension_numbers<[1], [0], [0], [1], [0, 0, 1, 1], [], []>} : vector<216x54xf32>, vector<54x576xf32>, vector<216x576xf32> -> vector<216x576xf32>
    %c0_22 = arith.constant 0 : index
    %c0_23 = arith.constant 0 : index
    %62 = vector.load %arg5[%c0_22, %c0_23] : memref<1x576xf32, #tpu.memory_space<vmem>>, vector<1x576xf32>
    %63 = vector.broadcast %62 : vector<1x576xf32> to vector<216x576xf32>
    %64 = arith.addf %61, %63 : vector<216x576xf32>
    %cst_24 = arith.constant 0.000000e+00 : f32
    %65 = vector.broadcast %cst_24 : f32 to vector<216x576xf32>
    %66 = arith.maximumf %64, %65 : vector<216x576xf32>
    %67 = vector.extract_strided_slice %66 {offsets = [0, 0], sizes = [216, 192], strides = [1, 1]} : vector<216x576xf32> to vector<216x192xf32>
    %68 = vector.extract_strided_slice %66 {offsets = [0, 192], sizes = [216, 192], strides = [1, 1]} : vector<216x576xf32> to vector<216x192xf32>
    %69 = arith.maximumf %67, %68 : vector<216x192xf32>
    %70 = vector.extract_strided_slice %66 {offsets = [0, 384], sizes = [216, 192], strides = [1, 1]} : vector<216x576xf32> to vector<216x192xf32>
    %71 = arith.maximumf %69, %70 : vector<216x192xf32>
    %72 = vector.extract_strided_slice %71 {offsets = [1, 0], sizes = [215, 192], strides = [1, 1]} : vector<216x192xf32> to vector<215x192xf32>
    %cst_25 = arith.constant 0.000000e+00 : f32
    %73 = vector.broadcast %cst_25 : f32 to vector<1x192xf32>
    %74 = tpu.concatenate %72, %73 in 0 : vector<215x192xf32>, vector<1x192xf32> -> vector<216x192xf32>
    %75 = arith.maximumf %71, %74 : vector<216x192xf32>
    %76 = vector.extract_strided_slice %71 {offsets = [2, 0], sizes = [214, 192], strides = [1, 1]} : vector<216x192xf32> to vector<214x192xf32>
    %cst_26 = arith.constant 0.000000e+00 : f32
    %77 = vector.broadcast %cst_26 : f32 to vector<2x192xf32>
    %78 = tpu.concatenate %76, %77 in 0 : vector<214x192xf32>, vector<2x192xf32> -> vector<216x192xf32>
    %79 = arith.maximumf %75, %78 : vector<216x192xf32>
    %c0_i32_27 = arith.constant 0 : i32
    %80 = vector.broadcast %c0_i32_27 : i32 to vector<216x1xi32>
    %81 = arith.cmpi eq, %0, %80 : vector<216x1xi32>
    %cst_28 = arith.constant 0.000000e+00 : f32
    %82 = vector.broadcast %cst_28 : f32 to vector<3x192xf32>
    %83 = vector.extract_strided_slice %79 {offsets = [0, 0], sizes = [213, 192], strides = [1, 1]} : vector<216x192xf32> to vector<213x192xf32>
    %84 = tpu.concatenate %82, %83 in 0 : vector<3x192xf32>, vector<213x192xf32> -> vector<216x192xf32>
    %cst_29 = arith.constant 0.000000e+00 : f32
    %85 = vector.shape_cast %81 : vector<216x1xi1> to vector<216x1xi1>
    %86 = vector.broadcast %85 : vector<216x1xi1> to vector<216x192xi1>
    %87 = vector.broadcast %cst_29 : f32 to vector<216x192xf32>
    %88 = arith.select %86, %87, %84 : vector<216x192xi1>, vector<216x192xf32>
    %c15_i32 = arith.constant 15 : i32
    %89 = vector.broadcast %c15_i32 : i32 to vector<216x1xi32>
    %90 = arith.cmpi eq, %0, %89 : vector<216x1xi32>
    %91 = vector.extract_strided_slice %79 {offsets = [3, 0], sizes = [213, 192], strides = [1, 1]} : vector<216x192xf32> to vector<213x192xf32>
    %cst_30 = arith.constant 0.000000e+00 : f32
    %92 = vector.broadcast %cst_30 : f32 to vector<3x192xf32>
    %93 = tpu.concatenate %91, %92 in 0 : vector<213x192xf32>, vector<3x192xf32> -> vector<216x192xf32>
    %cst_31 = arith.constant 0.000000e+00 : f32
    %94 = vector.shape_cast %90 : vector<216x1xi1> to vector<216x1xi1>
    %95 = vector.broadcast %94 : vector<216x1xi1> to vector<216x192xi1>
    %96 = vector.broadcast %cst_31 : f32 to vector<216x192xf32>
    %97 = arith.select %95, %96, %93 : vector<216x192xi1>, vector<216x192xf32>
    %98 = tpu.concatenate %88, %79, %97 in 1 : vector<216x192xf32>, vector<216x192xf32>, vector<216x192xf32> -> vector<216x576xf32>
    %c0_32 = arith.constant 0 : index
    %c0_33 = arith.constant 0 : index
    %99 = vector.load %arg6[%c0_32, %c0_33] : memref<576x96xf32, #tpu.memory_space<vmem>>, vector<576x96xf32>
    %cst_34 = arith.constant dense<0.000000e+00> : vector<216x96xf32>
    %100 = tpu.matmul %98, %99, %cst_34 {dimension_numbers = #tpu.dot_dimension_numbers<[1], [0], [0], [1], [0, 0, 1, 1], [], []>} : vector<216x576xf32>, vector<576x96xf32>, vector<216x96xf32> -> vector<216x96xf32>
    %c0_35 = arith.constant 0 : index
    %c0_36 = arith.constant 0 : index
    %101 = vector.load %arg7[%c0_35, %c0_36] : memref<1x96xf32, #tpu.memory_space<vmem>>, vector<1x96xf32>
    %102 = vector.broadcast %101 : vector<1x96xf32> to vector<216x96xf32>
    %103 = arith.addf %100, %102 : vector<216x96xf32>
    %cst_37 = arith.constant 0.000000e+00 : f32
    %104 = vector.broadcast %cst_37 : f32 to vector<216x96xf32>
    %105 = arith.maximumf %103, %104 : vector<216x96xf32>
    %106 = vector.extract_strided_slice %105 {offsets = [0, 0], sizes = [216, 32], strides = [1, 1]} : vector<216x96xf32> to vector<216x32xf32>
    %107 = vector.extract_strided_slice %105 {offsets = [0, 32], sizes = [216, 32], strides = [1, 1]} : vector<216x96xf32> to vector<216x32xf32>
    %108 = arith.maximumf %106, %107 : vector<216x32xf32>
    %109 = vector.extract_strided_slice %105 {offsets = [0, 64], sizes = [216, 32], strides = [1, 1]} : vector<216x96xf32> to vector<216x32xf32>
    %110 = arith.maximumf %108, %109 : vector<216x32xf32>
    %111 = vector.extract_strided_slice %110 {offsets = [3, 0], sizes = [213, 32], strides = [1, 1]} : vector<216x32xf32> to vector<213x32xf32>
    %cst_38 = arith.constant 0.000000e+00 : f32
    %112 = vector.broadcast %cst_38 : f32 to vector<3x32xf32>
    %113 = tpu.concatenate %111, %112 in 0 : vector<213x32xf32>, vector<3x32xf32> -> vector<216x32xf32>
    %114 = arith.maximumf %110, %113 : vector<216x32xf32>
    %115 = vector.extract_strided_slice %110 {offsets = [6, 0], sizes = [210, 32], strides = [1, 1]} : vector<216x32xf32> to vector<210x32xf32>
    %cst_39 = arith.constant 0.000000e+00 : f32
    %116 = vector.broadcast %cst_39 : f32 to vector<6x32xf32>
    %117 = tpu.concatenate %115, %116 in 0 : vector<210x32xf32>, vector<6x32xf32> -> vector<216x32xf32>
    %118 = arith.maximumf %114, %117 : vector<216x32xf32>
    %c0_40 = arith.constant 0 : index
    %c0_41 = arith.constant 0 : index
    %119 = vector.load %arg8[%c0_40, %c0_41] : memref<32x2xf32, #tpu.memory_space<vmem>>, vector<32x2xf32>
    %cst_42 = arith.constant dense<0.000000e+00> : vector<216x2xf32>
    %120 = tpu.matmul %118, %119, %cst_42 {dimension_numbers = #tpu.dot_dimension_numbers<[1], [0], [0], [1], [0, 0, 1, 1], [], []>} : vector<216x32xf32>, vector<32x2xf32>, vector<216x2xf32> -> vector<216x2xf32>
    %121 = vector.extract_strided_slice %120 {offsets = [0, 0], sizes = [216, 1], strides = [1, 1]} : vector<216x2xf32> to vector<216x1xf32>
    %c0_43 = arith.constant 0 : index
    %c0_44 = arith.constant 0 : index
    %122 = vector.load %arg9[%c0_43, %c0_44] : memref<216x2xf32, #tpu.memory_space<vmem>>, vector<216x2xf32>
    %123 = vector.broadcast %121 : vector<216x1xf32> to vector<216x2xf32>
    %124 = arith.mulf %123, %122 : vector<216x2xf32>
    %125 = vector.extract_strided_slice %120 {offsets = [0, 1], sizes = [216, 1], strides = [1, 1]} : vector<216x2xf32> to vector<216x1xf32>
    %c0_45 = arith.constant 0 : index
    %c0_46 = arith.constant 0 : index
    %126 = vector.load %arg10[%c0_45, %c0_46] : memref<216x2xf32, #tpu.memory_space<vmem>>, vector<216x2xf32>
    %127 = vector.broadcast %125 : vector<216x1xf32> to vector<216x2xf32>
    %128 = arith.mulf %127, %126 : vector<216x2xf32>
    %129 = arith.addf %124, %128 : vector<216x2xf32>
    %c0_47 = arith.constant 0 : index
    %c0_48 = arith.constant 0 : index
    %130 = vector.load %arg11[%c0_47, %c0_48] : memref<2x216xf32, #tpu.memory_space<vmem>>, vector<2x216xf32>
    %cst_49 = arith.constant dense<0.000000e+00> : vector<2x2xf32>
    %131 = tpu.matmul %130, %129, %cst_49 {dimension_numbers = #tpu.dot_dimension_numbers<[1], [0], [0], [1], [0, 0, 1, 1], [], []>} : vector<2x216xf32>, vector<216x2xf32>, vector<2x2xf32> -> vector<2x2xf32>
    %c0_50 = arith.constant 0 : index
    %c0_51 = arith.constant 0 : index
    %132 = vector.load %arg12[%c0_50, %c0_51] : memref<1x1xf32, #tpu.memory_space<vmem>>, vector<1x1xf32>
    %133 = vector.broadcast %132 : vector<1x1xf32> to vector<2x2xf32>
    %134 = arith.addf %131, %133 : vector<2x2xf32>
    %cst_52 = arith.constant dense<0xFF800000> : vector<2xf32>
    %135 = vector.multi_reduction <maximumf>, %134, %cst_52 [1] : vector<2x2xf32> to vector<2xf32>
    %136 = vector.shape_cast %135 : vector<2xf32> to vector<2x1xf32>
    %137 = vector.broadcast %136 : vector<2x1xf32> to vector<2x2xf32>
    %138 = arith.subf %134, %137 : vector<2x2xf32>
    %139 = math.exp %138 : vector<2x2xf32>
    %cst_53 = arith.constant dense<0.000000e+00> : vector<2xf32>
    %140 = vector.multi_reduction <add>, %139, %cst_53 [1] : vector<2x2xf32> to vector<2xf32>
    %141 = vector.shape_cast %140 : vector<2xf32> to vector<2x1xf32>
    %142 = math.log %141 : vector<2x1xf32>
    %143 = vector.broadcast %142 : vector<2x1xf32> to vector<2x2xf32>
    %144 = arith.subf %138, %143 : vector<2x2xf32>
    %c0_54 = arith.constant 0 : index
    %c0_55 = arith.constant 0 : index
    %145 = vector.load %arg13[%c0_54, %c0_55] : memref<2x2xf32, #tpu.memory_space<vmem>>, vector<2x2xf32>
    tpu.vector_store %arg13[%c0_54, %c0_55], %144 {strides = array<i32>} : memref<2x2xf32, #tpu.memory_space<vmem>>, vector<2x2xf32>,
    return
  }
}

</mosaic_0001>

<llo_original>
// kernel: gca_forward_pallas.1
$region0: #{gca_forward_pallas.1}
  #allocation0 [shape = 'u32[]', space=smem, size = 0x4, offset = 0x4, fixed_abs, tag = 'smem constant byte address 0x4 - core index']
  #allocation1 [shape = 'u32[144,128]{1,0:T(1,128)}', space=vmem, size = 0x12000, scoped, tag = 'internal scratch']
  #allocation2 [shape = 'f32[1,1]{1,0:T(1,128)S(1)}', space=vmem, size = 0x200, scoped, tag = 'scoped memory for gca_forward_pallas.1']
  %s0 = inlined_call_operand.vmem [shape: f32[180,32], index: 0, kind: input, shape index: {}]
  %s1 = inlined_call_operand.vmem [shape: s32[216,1], index: 1, kind: input, shape index: {}]
  %s2 = inlined_call_operand.vmem [shape: f32[96,16], index: 2, kind: input, shape index: {}]
  %s3 = inlined_call_operand.vmem [shape: f32[1,16], index: 3, kind: input, shape index: {}]
  %s4 = inlined_call_operand.vmem [shape: f32[54,576], index: 4, kind: input, shape index: {}]
  %s5 = inlined_call_operand.vmem [shape: f32[1,576], index: 5, kind: input, shape index: {}]
  %s6 = inlined_call_operand.vmem [shape: f32[576,96], index: 6, kind: input, shape index: {}]
  %s7 = inlined_call_operand.vmem [shape: f32[1,96], index: 7, kind: input, shape index: {}]
  %s8 = inlined_call_operand.vmem [shape: f32[32,2], index: 8, kind: input, shape index: {}]
  %s9 = inlined_call_operand.vmem [shape: f32[216,2], index: 9, kind: input, shape index: {}]
  %s10 = inlined_call_operand.vmem [shape: f32[216,2], index: 10, kind: input, shape index: {}]
  %s11 = inlined_call_operand.vmem [shape: f32[2,216], index: 11, kind: input, shape index: {}]
  %s12 = inlined_call_operand.<no memory space> [shape: f32[1,1], index: 12, kind: input, shape index: {}]
  %s13 = inlined_call_operand.hbm [shape: f32[2,2], index: 13, kind: output, shape index: {}]
  %s14 = sld [smem:[#allocation0]]
  $region62: #{gca_forward_pallas.1} parent=0
    _
  %s16 = ssub.s32 1, %s14
  %s17 = scalar_select 0, %s16, %s14
  %v18 = vstv %s12
  %19 = vst [vmem:[#allocation2] sm:$0x1] %v18
  $region1: #{gca_forward_pallas.1} parent=0
    #allocation3 [shape = 'u8[1024]{0}', space=vmem, size = 0x400, scoped, tag = 'output window, operand 0, single buffered']
    #allocation4 [shape = 's32[1]{0}', space=sflag, size = 0x4, scoped, tag = 'scoped memory for gca_forward_pallas.1']
    %20 = vsyncpa [#allocation4], 0
    // Predicated region
    $region2: #{gca_forward_pallas.1} parent=1 // pred_check
      _
    $region3: #{gca_forward_pallas.1} parent=1 // pred_check_branch
      %22 = sbr.rel (0) target = $region5
    $region4: #{gca_forward_pallas.1} parent=1 // pred_region
      _
    $region5: #{gca_forward_pallas.1} parent=1 // pred_fallthru
      _
    // Predicated region
    $region6: #{gca_forward_pallas.1} parent=1 // pred_check
      _
    $region7: #{gca_forward_pallas.1} parent=1 // pred_check_branch
      %24 = sbr.rel (0) target = $region9
    $region8: #{gca_forward_pallas.1} parent=1 // pred_region
      _
    $region9: #{gca_forward_pallas.1} parent=1 // pred_fallthru
      _
    // Predicated region
    $region10: #{gca_forward_pallas.1} parent=1 // pred_check
      _
    $region11: #{gca_forward_pallas.1} parent=1 // pred_check_branch
      %26 = sbr.rel (0) target = $region13
    $region12: #{gca_forward_pallas.1} parent=1 // pred_region
      _
    $region13: #{gca_forward_pallas.1} parent=1 // pred_fallthru
      _
    // Predicated region
    $region14: #{gca_forward_pallas.1} parent=1 // pred_check
      _
    $region15: #{gca_forward_pallas.1} parent=1 // pred_check_branch
      %28 = sbr.rel (0) target = $region17
    $region16: #{gca_forward_pallas.1} parent=1 // pred_region
      _
    $region17: #{gca_forward_pallas.1} parent=1 // pred_fallthru
      _
    // Predicated region
    $region18: #{gca_forward_pallas.1} parent=1 // pred_check
      _
    $region19: #{gca_forward_pallas.1} parent=1 // pred_check_branch
      %30 = sbr.rel (0) target = $region21
    $region20: #{gca_forward_pallas.1} parent=1 // pred_region
      _
    $region21: #{gca_forward_pallas.1} parent=1 // pred_fallthru
      _
    // Predicated region
    $region22: #{gca_forward_pallas.1} parent=1 // pred_check
      _
    $region23: #{gca_forward_pallas.1} parent=1 // pred_check_branch
      %32 = sbr.rel (0) target = $region25
    $region24: #{gca_forward_pallas.1} parent=1 // pred_region
      _
    $region25: #{gca_forward_pallas.1} parent=1 // pred_fallthru
      _
    // Predicated region
    $region26: #{gca_forward_pallas.1} parent=1 // pred_check
      _
    $region27: #{gca_forward_pallas.1} parent=1 // pred_check_branch
      %34 = sbr.rel (0) target = $region29
    $region28: #{gca_forward_pallas.1} parent=1 // pred_region
      _
    $region29: #{gca_forward_pallas.1} parent=1 // pred_fallthru
      _
    // Predicated region
    $region30: #{gca_forward_pallas.1} parent=1 // pred_check
      _
    $region31: #{gca_forward_pallas.1} parent=1 // pred_check_branch
      %36 = sbr.rel (0) target = $region33
    $region32: #{gca_forward_pallas.1} parent=1 // pred_region
      _
    $region33: #{gca_forward_pallas.1} parent=1 // pred_fallthru
      _
    // Predicated region
    $region34: #{gca_forward_pallas.1} parent=1 // pred_check
      _
    $region35: #{gca_forward_pallas.1} parent=1 // pred_check_branch
      %38 = sbr.rel (0) target = $region37
    $region36: #{gca_forward_pallas.1} parent=1 // pred_region
      _
    $region37: #{gca_forward_pallas.1} parent=1 // pred_fallthru
      _
    // Predicated region
    $region38: #{gca_forward_pallas.1} parent=1 // pred_check
      _
    $region39: #{gca_forward_pallas.1} parent=1 // pred_check_branch
      %40 = sbr.rel (0) target = $region41
    $region40: #{gca_forward_pallas.1} parent=1 // pred_region
      _
    $region41: #{gca_forward_pallas.1} parent=1 // pred_fallthru
      _
    // Predicated region
    $region42: #{gca_forward_pallas.1} parent=1 // pred_check
      _
    $region43: #{gca_forward_pallas.1} parent=1 // pred_check_branch
      %42 = sbr.rel (0) target = $region45
    $region44: #{gca_forward_pallas.1} parent=1 // pred_region
      _
    $region45: #{gca_forward_pallas.1} parent=1 // pred_fallthru
      _
    // Predicated region
    $region46: #{gca_forward_pallas.1} parent=1 // pred_check
      _
    $region47: #{gca_forward_pallas.1} parent=1 // pred_check_branch
      %44 = sbr.rel (0) target = $region49
    $region48: #{gca_forward_pallas.1} parent=1 // pred_region
      _
    $region49: #{gca_forward_pallas.1} parent=1 // pred_fallthru
      _
    // Predicated region
    $region50: #{gca_forward_pallas.1} parent=1 // pred_check
      _
    $region51: #{gca_forward_pallas.1} parent=1 // pred_check_branch
      %46 = sbr.rel (0) target = $region53
    $region52: #{gca_forward_pallas.1} parent=1 // pred_region
      _
    $region53: #{gca_forward_pallas.1} parent=1 // pred_fallthru
      _
    %v47 = vld [vmem:[%s1] sm:$0xff]
    %v48 = vld [vmem:[%s1 + $0x8] sm:$0xff]
    %v49 = vld [vmem:[%s1 + $0x10] sm:$0xff]
    %v50 = vld [vmem:[%s1 + $0x18] sm:$0xff]
    %v51 = vld [vmem:[%s1 + $0x20] sm:$0xff]
    %v52 = vld [vmem:[%s1 + $0x28] sm:$0xff]
    %v53 = vld [vmem:[%s1 + $0x30] sm:$0xff]
    %v54 = vld [vmem:[%s1 + $0x38] sm:$0xff]
    %v55 = vld [vmem:[%s1 + $0x40] sm:$0xff]
    %v56 = vld [vmem:[%s1 + $0x48] sm:$0xff]
    %v57 = vld [vmem:[%s1 + $0x50] sm:$0xff]
    %v58 = vld [vmem:[%s1 + $0x58] sm:$0xff]
    %v59 = vld [vmem:[%s1 + $0x60] sm:$0xff]
    %v60 = vld [vmem:[%s1 + $0x68] sm:$0xff]
    %v61 = vld [vmem:[%s1 + $0x70] sm:$0xff]
    %v62 = vld [vmem:[%s1 + $0x78] sm:$0xff]
    %v63 = vld [vmem:[%s1 + $0x80] sm:$0xff]
    %v64 = vld [vmem:[%s1 + $0x88] sm:$0xff]
    %v65 = vld [vmem:[%s1 + $0x90] sm:$0xff]
    %v66 = vld [vmem:[%s1 + $0x98] sm:$0xff]
    %v67 = vld [vmem:[%s1 + $0xa0] sm:$0xff]
    %v68 = vld [vmem:[%s1 + $0xa8] sm:$0xff]
    %v69 = vld [vmem:[%s1 + $0xb0] sm:$0xff]
    %v70 = vld [vmem:[%s1 + $0xb8] sm:$0xff]
    %v71 = vld [vmem:[%s1 + $0xc0] sm:$0xff]
    %v72 = vld [vmem:[%s1 + $0xc8] sm:$0xff]
    %v73 = vld [vmem:[%s1 + $0xd0] sm:$0xff]
    %v74 = vld [vmem:[%s0] sm:$0xff]
    %v75 = vld [vmem:[%s0 + $0x8] sm:$0xff]
    %v76 = vld [vmem:[%s0 + $0x10] sm:$0xff]
    %v77 = vld [vmem:[%s0 + $0x18] sm:$0xff]
    %v78 = vld [vmem:[%s0 + $0x20] sm:$0xff]
    %v79 = vld [vmem:[%s0 + $0x28] sm:$0xff]
    %v80 = vld [vmem:[%s0 + $0x30] sm:$0xff]
    %v81 = vld [vmem:[%s0 + $0x38] sm:$0xff]
    %v82 = vld [vmem:[%s0 + $0x40] sm:$0xff]
    %v83 = vld [vmem:[%s0 + $0x48] sm:$0xff]
    %v84 = vld [vmem:[%s0 + $0x50] sm:$0xff]
    %v85 = vld [vmem:[%s0 + $0x58] sm:$0xff]
    %v86 = vld [vmem:[%s0 + $0x60] sm:$0xff]
    %v87 = vld [vmem:[%s0 + $0x68] sm:$0xff]
    %v88 = vld [vmem:[%s0 + $0x70] sm:$0xff]
    %v89 = vld [vmem:[%s0 + $0x78] sm:$0xff]
    %v90 = vld [vmem:[%s0 + $0x80] sm:$0xff]
    %v91 = vld [vmem:[%s0 + $0x88] sm:$0xff]
    %v92 = vld [vmem:[%s0 + $0x90] sm:$0xff]
    %v93 = vld [vmem:[%s0 + $0x98] sm:$0xff]
    %v94 = vld [vmem:[%s0 + $0xa0] sm:$0xff]
    %v95 = vld [vmem:[%s0 + $0xa8] sm:$0xff]
    %v96 = vld [vmem:[%s0 + $0xb0] sm:$0xf]
    %vm97 = vcmp.eq.s32.totalorder %v47, 0
    %vm98 = vcmp.eq.s32.totalorder %v48, 0
    %vm99 = vcmp.eq.s32.totalorder %v49, 0
    %vm100 = vcmp.eq.s32.totalorder %v50, 0
    %vm101 = vcmp.eq.s32.totalorder %v51, 0
    %vm102 = vcmp.eq.s32.totalorder %v52, 0
    %vm103 = vcmp.eq.s32.totalorder %v53, 0
    %vm104 = vcmp.eq.s32.totalorder %v54, 0
    %vm105 = vcmp.eq.s32.totalorder %v55, 0
    %vm106 = vcmp.eq.s32.totalorder %v56, 0
    %vm107 = vcmp.eq.s32.totalorder %v57, 0
    %vm108 = vcmp.eq.s32.totalorder %v58, 0
    %vm109 = vcmp.eq.s32.totalorder %v59, 0
    %vm110 = vcmp.eq.s32.totalorder %v60, 0
    %vm111 = vcmp.eq.s32.totalorder %v61, 0
    %vm112 = vcmp.eq.s32.totalorder %v62, 0
    %vm113 = vcmp.eq.s32.totalorder %v63, 0
    %vm114 = vcmp.eq.s32.totalorder %v64, 0
    %vm115 = vcmp.eq.s32.totalorder %v65, 0
    %vm116 = vcmp.eq.s32.totalorder %v66, 0
    %vm117 = vcmp.eq.s32.totalorder %v67, 0
    %vm118 = vcmp.eq.s32.totalorder %v68, 0
    %vm119 = vcmp.eq.s32.totalorder %v69, 0
    %vm143 = vcmask 1040384
    %v144 = vrot.slane %v74, 7
    %v145 = vrot.slane %v75, 7
    %v146 = vsel %vm143, %v144, %v145
    %v147 = vrot.slane %v76, 7
    %v148 = vsel %vm143, %v145, %v147
    %v149 = vrot.slane %v77, 7
    %v150 = vsel %vm143, %v147, %v149
    %v151 = vrot.slane %v78, 7
    %v152 = vsel %vm143, %v149, %v151
    %v153 = vrot.slane %v79, 7
    %v154 = vsel %vm143, %v151, %v153
    %v155 = vrot.slane %v80, 7
    %v156 = vsel %vm143, %v153, %v155
    %v157 = vrot.slane %v81, 7
    %v158 = vsel %vm143, %v155, %v157
    %v159 = vrot.slane %v82, 7
    %v160 = vsel %vm143, %v157, %v159
    %v161 = vrot.slane %v83, 7
    %v162 = vsel %vm143, %v159, %v161
    %v163 = vrot.slane %v84, 7
    %v164 = vsel %vm143, %v161, %v163
    %v165 = vrot.slane %v85, 7
    %v166 = vsel %vm143, %v163, %v165
    %v167 = vrot.slane %v86, 7
    %v168 = vsel %vm143, %v165, %v167
    %v169 = vrot.slane %v87, 7
    %v170 = vsel %vm143, %v167, %v169
    %v171 = vrot.slane %v88, 7
    %v172 = vsel %vm143, %v169, %v171
    %v173 = vrot.slane %v89, 7
    %v174 = vsel %vm143, %v171, %v173
    %v175 = vrot.slane %v90, 7
    %v176 = vsel %vm143, %v173, %v175
    %v177 = vrot.slane %v91, 7
    %v178 = vsel %vm143, %v175, %v177
    %v179 = vrot.slane %v92, 7
    %v180 = vsel %vm143, %v177, %v179
    %v181 = vrot.slane %v93, 7
    %v182 = vsel %vm143, %v179, %v181
    %v183 = vrot.slane %v94, 7
    %v184 = vsel %vm143, %v181, %v183
    %v185 = vrot.slane %v95, 7
    %v186 = vsel %vm143, %v183, %v185
    %v187 = vrot.slane %v96, 7
    %v188 = vsel %vm143, %v185, %v187
    %v212 = vsel %vm143, 0.0, %v144
    %v213 = vsel %vm97, 1, 0
    %v214 = vsel %vm98, 1, 0
    %v215 = vsel %vm99, 1, 0
    %v216 = vsel %vm100, 1, 0
    %v217 = vsel %vm101, 1, 0
    %v218 = vsel %vm102, 1, 0
    %v219 = vsel %vm103, 1, 0
    %v220 = vsel %vm104, 1, 0
    %v221 = vsel %vm105, 1, 0
    %v222 = vsel %vm106, 1, 0
    %v223 = vsel %vm107, 1, 0
    %v224 = vsel %vm108, 1, 0
    %v225 = vsel %vm109, 1, 0
    %v226 = vsel %vm110, 1, 0
    %v227 = vsel %vm111, 1, 0
    %v228 = vsel %vm112, 1, 0
    %v229 = vsel %vm113, 1, 0
    %v230 = vsel %vm114, 1, 0
    %v231 = vsel %vm115, 1, 0
    %v232 = vsel %vm116, 1, 0
    %v233 = vsel %vm117, 1, 0
    %v234 = vsel %vm118, 1, 0
    %v235 = vsel %vm119, 1, 0
    %236 = vset.pattern.permute.xlu0 0
    %237 = vperm.xlu0 %236, %v213
    %v238 = vpop.permute.xlu0 %237
    %239 = vset.pattern.permute.xlu0 0
    %240 = vperm.xlu0 %239, %v214
    %v241 = vpop.permute.xlu0 %240
    %242 = vset.pattern.permute.xlu0 0
    %243 = vperm.xlu0 %242, %v215
    %v244 = vpop.permute.xlu0 %243
    %245 = vset.pattern.permute.xlu0 0
    %246 = vperm.xlu0 %245, %v216
    %v247 = vpop.permute.xlu0 %246
    %248 = vset.pattern.permute.xlu0 0
    %249 = vperm.xlu0 %248, %v217
    %v250 = vpop.permute.xlu0 %249
    %251 = vset.pattern.permute.xlu0 0
    %252 = vperm.xlu0 %251, %v218
    %v253 = vpop.permute.xlu0 %252
    %254 = vset.pattern.permute.xlu0 0
    %255 = vperm.xlu0 %254, %v219
    %v256 = vpop.permute.xlu0 %255
    %257 = vset.pattern.permute.xlu0 0
    %258 = vperm.xlu0 %257, %v220
    %v259 = vpop.permute.xlu0 %258
    %260 = vset.pattern.permute.xlu0 0
    %261 = vperm.xlu0 %260, %v221
    %v262 = vpop.permute.xlu0 %261
    %263 = vset.pattern.permute.xlu0 0
    %264 = vperm.xlu0 %263, %v222
    %v265 = vpop.permute.xlu0 %264
    %266 = vset.pattern.permute.xlu0 0
    %267 = vperm.xlu0 %266, %v223
    %v268 = vpop.permute.xlu0 %267
    %269 = vset.pattern.permute.xlu0 0
    %270 = vperm.xlu0 %269, %v224
    %v271 = vpop.permute.xlu0 %270
    %272 = vset.pattern.permute.xlu0 0
    %273 = vperm.xlu0 %272, %v225
    %v274 = vpop.permute.xlu0 %273
    %275 = vset.pattern.permute.xlu0 0
    %276 = vperm.xlu0 %275, %v226
    %v277 = vpop.permute.xlu0 %276
    %278 = vset.pattern.permute.xlu0 0
    %279 = vperm.xlu0 %278, %v227
    %v280 = vpop.permute.xlu0 %279
    %281 = vset.pattern.permute.xlu0 0
    %282 = vperm.xlu0 %281, %v228
    %v283 = vpop.permute.xlu0 %282
    %284 = vset.pattern.permute.xlu0 0
    %285 = vperm.xlu0 %284, %v229
    %v286 = vpop.permute.xlu0 %285
    %287 = vset.pattern.permute.xlu0 0
    %288 = vperm.xlu0 %287, %v230
    %v289 = vpop.permute.xlu0 %288
    %290 = vset.pattern.permute.xlu0 0
    %291 = vperm.xlu0 %290, %v231
    %v292 = vpop.permute.xlu0 %291
    %293 = vset.pattern.permute.xlu0 0
    %294 = vperm.xlu0 %293, %v232
    %v295 = vpop.permute.xlu0 %294
    %296 = vset.pattern.permute.xlu0 0
    %297 = vperm.xlu0 %296, %v233
    %v298 = vpop.permute.xlu0 %297
    %299 = vset.pattern.permute.xlu0 0
    %300 = vperm.xlu0 %299, %v234
    %v301 = vpop.permute.xlu0 %300
    %302 = vset.pattern.permute.xlu0 0
    %303 = vperm.xlu0 %302, %v235
    %v304 = vpop.permute.xlu0 %303
    %vm305 = vcmp.eq.s32.totalorder %v238, 1
    %vm306 = vcmp.eq.s32.totalorder %v241, 1
    %vm307 = vcmp.eq.s32.totalorder %v244, 1
    %vm308 = vcmp.eq.s32.totalorder %v247, 1
    %vm309 = vcmp.eq.s32.totalorder %v250, 1
    %vm310 = vcmp.eq.s32.totalorder %v253, 1
    %vm311 = vcmp.eq.s32.totalorder %v256, 1
    %vm312 = vcmp.eq.s32.totalorder %v259, 1
    %vm313 = vcmp.eq.s32.totalorder %v262, 1
    %vm314 = vcmp.eq.s32.totalorder %v265, 1
    %vm315 = vcmp.eq.s32.totalorder %v268, 1
    %vm316 = vcmp.eq.s32.totalorder %v271, 1
    %vm317 = vcmp.eq.s32.totalorder %v274, 1
    %vm318 = vcmp.eq.s32.totalorder %v277, 1
    %vm319 = vcmp.eq.s32.totalorder %v280, 1
    %vm320 = vcmp.eq.s32.totalorder %v283, 1
    %vm321 = vcmp.eq.s32.totalorder %v286, 1
    %vm322 = vcmp.eq.s32.totalorder %v289, 1
    %vm323 = vcmp.eq.s32.totalorder %v292, 1
    %vm324 = vcmp.eq.s32.totalorder %v295, 1
    %vm325 = vcmp.eq.s32.totalorder %v298, 1
    %vm326 = vcmp.eq.s32.totalorder %v301, 1
    %vm327 = vcmp.eq.s32.totalorder %v304, 1
    %v328 = vsel %vm305, 0.0, %v212
    %v329 = vsel %vm306, 0.0, %v146
    %v330 = vsel %vm307, 0.0, %v148
    %v331 = vsel %vm308, 0.0, %v150
    %v332 = vsel %vm309, 0.0, %v152
    %v333 = vsel %vm310, 0.0, %v154
    %v334 = vsel %vm311, 0.0, %v156
    %v335 = vsel %vm312, 0.0, %v158
    %v336 = vsel %vm313, 0.0, %v160
    %v337 = vsel %vm314, 0.0, %v162
    %v338 = vsel %vm315, 0.0, %v164
    %v339 = vsel %vm316, 0.0, %v166
    %v340 = vsel %vm317, 0.0, %v168
    %v341 = vsel %vm318, 0.0, %v170
    %v342 = vsel %vm319, 0.0, %v172
    %v343 = vsel %vm320, 0.0, %v174
    %v344 = vsel %vm321, 0.0, %v176
    %v345 = vsel %vm322, 0.0, %v178
    %v346 = vsel %vm323, 0.0, %v180
    %v347 = vsel %vm324, 0.0, %v182
    %v348 = vsel %vm325, 0.0, %v184
    %v349 = vsel %vm326, 0.0, %v186
    %v350 = vsel %vm327, 0.0, %v188
    %vm351 = vcmp.eq.s32.totalorder %v47, 17
    %vm352 = vcmp.eq.s32.totalorder %v48, 17
    %vm353 = vcmp.eq.s32.totalorder %v49, 17
    %vm354 = vcmp.eq.s32.totalorder %v50, 17
    %vm355 = vcmp.eq.s32.totalorder %v51, 17
    %vm356 = vcmp.eq.s32.totalorder %v52, 17
    %vm357 = vcmp.eq.s32.totalorder %v53, 17
    %vm358 = vcmp.eq.s32.totalorder %v54, 17
    %vm359 = vcmp.eq.s32.totalorder %v55, 17
    %vm360 = vcmp.eq.s32.totalorder %v56, 17
    %vm361 = vcmp.eq.s32.totalorder %v57, 17
    %vm362 = vcmp.eq.s32.totalorder %v58, 17
    %vm363 = vcmp.eq.s32.totalorder %v59, 17
    %vm364 = vcmp.eq.s32.totalorder %v60, 17
    %vm365 = vcmp.eq.s32.totalorder %v61, 17
    %vm366 = vcmp.eq.s32.totalorder %v62, 17
    %vm367 = vcmp.eq.s32.totalorder %v63, 17
    %vm368 = vcmp.eq.s32.totalorder %v64, 17
    %vm369 = vcmp.eq.s32.totalorder %v65, 17
    %vm370 = vcmp.eq.s32.totalorder %v66, 17
    %vm371 = vcmp.eq.s32.totalorder %v67, 17
    %vm372 = vcmp.eq.s32.totalorder %v68, 17
    %vm373 = vcmp.eq.s32.totalorder %v69, 17
    %vm374 = vcmask 1046528
    %v375 = vrot.slane %v74, 1
    %v376 = vrot.slane %v75, 1
    %v377 = vsel %vm374, %v375, %v376
    %v378 = vrot.slane %v76, 1
    %v379 = vsel %vm374, %v376, %v378
    %v380 = vrot.slane %v77, 1
    %v381 = vsel %vm374, %v378, %v380
    %v382 = vrot.slane %v78, 1
    %v383 = vsel %vm374, %v380, %v382
    %v384 = vrot.slane %v79, 1
    %v385 = vsel %vm374, %v382, %v384
    %v386 = vrot.slane %v80, 1
    %v387 = vsel %vm374, %v384, %v386
    %v388 = vrot.slane %v81, 1
    %v389 = vsel %vm374, %v386, %v388
    %v390 = vrot.slane %v82, 1
    %v391 = vsel %vm374, %v388, %v390
    %v392 = vrot.slane %v83, 1
    %v393 = vsel %vm374, %v390, %v392
    %v394 = vrot.slane %v84, 1
    %v395 = vsel %vm374, %v392, %v394
    %v396 = vrot.slane %v85, 1
    %v397 = vsel %vm374, %v394, %v396
    %v398 = vrot.slane %v86, 1
    %v399 = vsel %vm374, %v396, %v398
    %v400 = vrot.slane %v87, 1
    %v401 = vsel %vm374, %v398, %v400
    %v402 = vrot.slane %v88, 1
    %v403 = vsel %vm374, %v400, %v402
    %v404 = vrot.slane %v89, 1
    %v405 = vsel %vm374, %v402, %v404
    %v406 = vrot.slane %v90, 1
    %v407 = vsel %vm374, %v404, %v406
    %v408 = vrot.slane %v91, 1
    %v409 = vsel %vm374, %v406, %v408
    %v410 = vrot.slane %v92, 1
    %v411 = vsel %vm374, %v408, %v410
    %v412 = vrot.slane %v93, 1
    %v413 = vsel %vm374, %v410, %v412
    %v414 = vrot.slane %v94, 1
    %v415 = vsel %vm374, %v412, %v414
    %v416 = vrot.slane %v95, 1
    %v417 = vsel %vm374, %v414, %v416
    %v418 = vrot.slane %v96, 1
    %v419 = vsel %vm374, %v416, %v418
    %vm443 = vcmask 1042432
    %v444 = vsel %vm443, %v418, 0.0
    %v445 = vsel %vm351, 1, 0
    %v446 = vsel %vm352, 1, 0
    %v447 = vsel %vm353, 1, 0
    %v448 = vsel %vm354, 1, 0
    %v449 = vsel %vm355, 1, 0
    %v450 = vsel %vm356, 1, 0
    %v451 = vsel %vm357, 1, 0
    %v452 = vsel %vm358, 1, 0
    %v453 = vsel %vm359, 1, 0
    %v454 = vsel %vm360, 1, 0
    %v455 = vsel %vm361, 1, 0
    %v456 = vsel %vm362, 1, 0
    %v457 = vsel %vm363, 1, 0
    %v458 = vsel %vm364, 1, 0
    %v459 = vsel %vm365, 1, 0
    %v460 = vsel %vm366, 1, 0
    %v461 = vsel %vm367, 1, 0
    %v462 = vsel %vm368, 1, 0
    %v463 = vsel %vm369, 1, 0
    %v464 = vsel %vm370, 1, 0
    %v465 = vsel %vm371, 1, 0
    %v466 = vsel %vm372, 1, 0
    %v467 = vsel %vm373, 1, 0
    %468 = vset.pattern.permute.xlu0 0
    %469 = vperm.xlu0 %468, %v445
    %v470 = vpop.permute.xlu0 %469
    %471 = vset.pattern.permute.xlu0 0
    %472 = vperm.xlu0 %471, %v446
    %v473 = vpop.permute.xlu0 %472
    %474 = vset.pattern.permute.xlu0 0
    %475 = vperm.xlu0 %474, %v447
    %v476 = vpop.permute.xlu0 %475
    %477 = vset.pattern.permute.xlu0 0
    %478 = vperm.xlu0 %477, %v448
    %v479 = vpop.permute.xlu0 %478
    %480 = vset.pattern.permute.xlu0 0
    %481 = vperm.xlu0 %480, %v449
    %v482 = vpop.permute.xlu0 %481
    %483 = vset.pattern.permute.xlu0 0
    %484 = vperm.xlu0 %483, %v450
    %v485 = vpop.permute.xlu0 %484
    %486 = vset.pattern.permute.xlu0 0
    %487 = vperm.xlu0 %486, %v451
    %v488 = vpop.permute.xlu0 %487
    %489 = vset.pattern.permute.xlu0 0
    %490 = vperm.xlu0 %489, %v452
    %v491 = vpop.permute.xlu0 %490
    %492 = vset.pattern.permute.xlu0 0
    %493 = vperm.xlu0 %492, %v453
    %v494 = vpop.permute.xlu0 %493
    %495 = vset.pattern.permute.xlu0 0
    %496 = vperm.xlu0 %495, %v454
    %v497 = vpop.permute.xlu0 %496
    %498 = vset.pattern.permute.xlu0 0
    %499 = vperm.xlu0 %498, %v455
    %v500 = vpop.permute.xlu0 %499
    %501 = vset.pattern.permute.xlu0 0
    %502 = vperm.xlu0 %501, %v456
    %v503 = vpop.permute.xlu0 %502
    %504 = vset.pattern.permute.xlu0 0
    %505 = vperm.xlu0 %504, %v457
    %v506 = vpop.permute.xlu0 %505
    %507 = vset.pattern.permute.xlu0 0
    %508 = vperm.xlu0 %507, %v458
    %v509 = vpop.permute.xlu0 %508
    %510 = vset.pattern.permute.xlu0 0
    %511 = vperm.xlu0 %510, %v459
    %v512 = vpop.permute.xlu0 %511
    %513 = vset.pattern.permute.xlu0 0
    %514 = vperm.xlu0 %513, %v460
    %v515 = vpop.permute.xlu0 %514
    %516 = vset.pattern.permute.xlu0 0
    %517 = vperm.xlu0 %516, %v461
    %v518 = vpop.permute.xlu0 %517
    %519 = vset.pattern.permute.xlu0 0
    %520 = vperm.xlu0 %519, %v462
    %v521 = vpop.permute.xlu0 %520
    %522 = vset.pattern.permute.xlu0 0
    %523 = vperm.xlu0 %522, %v463
    %v524 = vpop.permute.xlu0 %523
    %525 = vset.pattern.permute.xlu0 0
    %526 = vperm.xlu0 %525, %v464
    %v527 = vpop.permute.xlu0 %526
    %528 = vset.pattern.permute.xlu0 0
    %529 = vperm.xlu0 %528, %v465
    %v530 = vpop.permute.xlu0 %529
    %531 = vset.pattern.permute.xlu0 0
    %532 = vperm.xlu0 %531, %v466
    %v533 = vpop.permute.xlu0 %532
    %534 = vset.pattern.permute.xlu0 0
    %535 = vperm.xlu0 %534, %v467
    %v536 = vpop.permute.xlu0 %535
    %vm537 = vcmp.eq.s32.totalorder %v470, 1
    %vm538 = vcmp.eq.s32.totalorder %v473, 1
    %vm539 = vcmp.eq.s32.totalorder %v476, 1
    %vm540 = vcmp.eq.s32.totalorder %v479, 1
    %vm541 = vcmp.eq.s32.totalorder %v482, 1
    %vm542 = vcmp.eq.s32.totalorder %v485, 1
    %vm543 = vcmp.eq.s32.totalorder %v488, 1
    %vm544 = vcmp.eq.s32.totalorder %v491, 1
    %vm545 = vcmp.eq.s32.totalorder %v494, 1
    %vm546 = vcmp.eq.s32.totalorder %v497, 1
    %vm547 = vcmp.eq.s32.totalorder %v500, 1
    %vm548 = vcmp.eq.s32.totalorder %v503, 1
    %vm549 = vcmp.eq.s32.totalorder %v506, 1
    %vm550 = vcmp.eq.s32.totalorder %v509, 1
    %vm551 = vcmp.eq.s32.totalorder %v512, 1
    %vm552 = vcmp.eq.s32.totalorder %v515, 1
    %vm553 = vcmp.eq.s32.totalorder %v518, 1
    %vm554 = vcmp.eq.s32.totalorder %v521, 1
    %vm555 = vcmp.eq.s32.totalorder %v524, 1
    %vm556 = vcmp.eq.s32.totalorder %v527, 1
    %vm557 = vcmp.eq.s32.totalorder %v530, 1
    %vm558 = vcmp.eq.s32.totalorder %v533, 1
    %vm559 = vcmp.eq.s32.totalorder %v536, 1
    %v560 = vsel %vm537, 0.0, %v377
    %v561 = vsel %vm538, 0.0, %v379
    %v562 = vsel %vm539, 0.0, %v381
    %v563 = vsel %vm540, 0.0, %v383
    %v564 = vsel %vm541, 0.0, %v385
    %v565 = vsel %vm542, 0.0, %v387
    %v566 = vsel %vm543, 0.0, %v389
    %v567 = vsel %vm544, 0.0, %v391
    %v568 = vsel %vm545, 0.0, %v393
    %v569 = vsel %vm546, 0.0, %v395
    %v570 = vsel %vm547, 0.0, %v397
    %v571 = vsel %vm548, 0.0, %v399
    %v572 = vsel %vm549, 0.0, %v401
    %v573 = vsel %vm550, 0.0, %v403
    %v574 = vsel %vm551, 0.0, %v405
    %v575 = vsel %vm552, 0.0, %v407
    %v576 = vsel %vm553, 0.0, %v409
    %v577 = vsel %vm554, 0.0, %v411
    %v578 = vsel %vm555, 0.0, %v413
    %v579 = vsel %vm556, 0.0, %v415
    %v580 = vsel %vm557, 0.0, %v417
    %v581 = vsel %vm558, 0.0, %v419
    %v582 = vsel %vm559, 0.0, %v444
    %583 = vrot.lane.b32.xlu0 %v74, 32
    %v584 = vpop.permute.xlu0 %583
    %585 = vrot.lane.b32.xlu0 %v75, 32
    %v586 = vpop.permute.xlu0 %585
    %587 = vrot.lane.b32.xlu0 %v76, 32
    %v588 = vpop.permute.xlu0 %587
    %589 = vrot.lane.b32.xlu0 %v77, 32
    %v590 = vpop.permute.xlu0 %589
    %591 = vrot.lane.b32.xlu0 %v78, 32
    %v592 = vpop.permute.xlu0 %591
    %593 = vrot.lane.b32.xlu0 %v79, 32
    %v594 = vpop.permute.xlu0 %593
    %595 = vrot.lane.b32.xlu0 %v80, 32
    %v596 = vpop.permute.xlu0 %595
    %597 = vrot.lane.b32.xlu0 %v81, 32
    %v598 = vpop.permute.xlu0 %597
    %599 = vrot.lane.b32.xlu0 %v82, 32
    %v600 = vpop.permute.xlu0 %599
    %601 = vrot.lane.b32.xlu0 %v83, 32
    %v602 = vpop.permute.xlu0 %601
    %603 = vrot.lane.b32.xlu0 %v84, 32
    %v604 = vpop.permute.xlu0 %603
    %605 = vrot.lane.b32.xlu0 %v85, 32
    %v606 = vpop.permute.xlu0 %605
    %607 = vrot.lane.b32.xlu0 %v86, 32
    %v608 = vpop.permute.xlu0 %607
    %609 = vrot.lane.b32.xlu0 %v87, 32
    %v610 = vpop.permute.xlu0 %609
    %611 = vrot.lane.b32.xlu0 %v88, 32
    %v612 = vpop.permute.xlu0 %611
    %613 = vrot.lane.b32.xlu0 %v89, 32
    %v614 = vpop.permute.xlu0 %613
    %615 = vrot.lane.b32.xlu0 %v90, 32
    %v616 = vpop.permute.xlu0 %615
    %617 = vrot.lane.b32.xlu0 %v91, 32
    %v618 = vpop.permute.xlu0 %617
    %619 = vrot.lane.b32.xlu0 %v92, 32
    %v620 = vpop.permute.xlu0 %619
    %621 = vrot.lane.b32.xlu0 %v93, 32
    %v622 = vpop.permute.xlu0 %621
    %623 = vrot.lane.b32.xlu0 %v94, 32
    %v624 = vpop.permute.xlu0 %623
    %625 = vrot.lane.b32.xlu0 %v95, 32
    %v626 = vpop.permute.xlu0 %625
    %627 = vrot.lane.b32.xlu0 %v96, 32
    %v628 = vpop.permute.xlu0 %627
    %675 = vrot.lane.b32.xlu0 %v560, 64
    %v676 = vpop.permute.xlu0 %675
    %677 = vrot.lane.b32.xlu0 %v561, 64
    %v678 = vpop.permute.xlu0 %677
    %679 = vrot.lane.b32.xlu0 %v562, 64
    %v680 = vpop.permute.xlu0 %679
    %681 = vrot.lane.b32.xlu0 %v563, 64
    %v682 = vpop.permute.xlu0 %681
    %683 = vrot.lane.b32.xlu0 %v564, 64
    %v684 = vpop.permute.xlu0 %683
    %685 = vrot.lane.b32.xlu0 %v565, 64
    %v686 = vpop.permute.xlu0 %685
    %687 = vrot.lane.b32.xlu0 %v566, 64
    %v688 = vpop.permute.xlu0 %687
    %689 = vrot.lane.b32.xlu0 %v567, 64
    %v690 = vpop.permute.xlu0 %689
    %691 = vrot.lane.b32.xlu0 %v568, 64
    %v692 = vpop.permute.xlu0 %691
    %693 = vrot.lane.b32.xlu0 %v569, 64
    %v694 = vpop.permute.xlu0 %693
    %695 = vrot.lane.b32.xlu0 %v570, 64
    %v696 = vpop.permute.xlu0 %695
    %697 = vrot.lane.b32.xlu0 %v571, 64
    %v698 = vpop.permute.xlu0 %697
    %699 = vrot.lane.b32.xlu0 %v572, 64
    %v700 = vpop.permute.xlu0 %699
    %701 = vrot.lane.b32.xlu0 %v573, 64
    %v702 = vpop.permute.xlu0 %701
    %703 = vrot.lane.b32.xlu0 %v574, 64
    %v704 = vpop.permute.xlu0 %703
    %705 = vrot.lane.b32.xlu0 %v575, 64
    %v706 = vpop.permute.xlu0 %705
    %707 = vrot.lane.b32.xlu0 %v576, 64
    %v708 = vpop.permute.xlu0 %707
    %709 = vrot.lane.b32.xlu0 %v577, 64
    %v710 = vpop.permute.xlu0 %709
    %711 = vrot.lane.b32.xlu0 %v578, 64
    %v712 = vpop.permute.xlu0 %711
    %713 = vrot.lane.b32.xlu0 %v579, 64
    %v714 = vpop.permute.xlu0 %713
    %715 = vrot.lane.b32.xlu0 %v580, 64
    %v716 = vpop.permute.xlu0 %715
    %717 = vrot.lane.b32.xlu0 %v581, 64
    %v718 = vpop.permute.xlu0 %717
    %719 = vrot.lane.b32.xlu0 %v582, 64
    %v720 = vpop.permute.xlu0 %719
    %vm744 = vcmask 261120
    %v745 = vsel %vm744, %v328, %v584
    %v746 = vsel %vm744, %v329, %v586
    %v747 = vsel %vm744, %v330, %v588
    %v748 = vsel %vm744, %v331, %v590
    %v749 = vsel %vm744, %v332, %v592
    %v750 = vsel %vm744, %v333, %v594
    %v751 = vsel %vm744, %v334, %v596
    %v752 = vsel %vm744, %v335, %v598
    %v753 = vsel %vm744, %v336, %v600
    %v754 = vsel %vm744, %v337, %v602
    %v755 = vsel %vm744, %v338, %v604
    %v756 = vsel %vm744, %v339, %v606
    %v757 = vsel %vm744, %v340, %v608
    %v758 = vsel %vm744, %v341, %v610
    %v759 = vsel %vm744, %v342, %v612
    %v760 = vsel %vm744, %v343, %v614
    %v761 = vsel %vm744, %v344, %v616
    %v762 = vsel %vm744, %v345, %v618
    %v763 = vsel %vm744, %v346, %v620
    %v764 = vsel %vm744, %v347, %v622
    %v765 = vsel %vm744, %v348, %v624
    %v766 = vsel %vm744, %v349, %v626
    %v767 = vsel %vm744, %v350, %v628
    %vm768 = vcmask 523264
    %v769 = vsel %vm768, %v745, %v676
    %v770 = vsel %vm768, %v746, %v678
    %v771 = vsel %vm768, %v747, %v680
    %v772 = vsel %vm768, %v748, %v682
    %v773 = vsel %vm768, %v749, %v684
    %v774 = vsel %vm768, %v750, %v686
    %v775 = vsel %vm768, %v751, %v688
    %v776 = vsel %vm768, %v752, %v690
    %v777 = vsel %vm768, %v753, %v692
    %v778 = vsel %vm768, %v754, %v694
    %v779 = vsel %vm768, %v755, %v696
    %v780 = vsel %vm768, %v756, %v698
    %v781 = vsel %vm768, %v757, %v700
    %v782 = vsel %vm768, %v758, %v702
    %v783 = vsel %vm768, %v759, %v704
    %v784 = vsel %vm768, %v760, %v706
    %v785 = vsel %vm768, %v761, %v708
    %v786 = vsel %vm768, %v762, %v710
    %v787 = vsel %vm768, %v763, %v712
    %v788 = vsel %vm768, %v764, %v714
    %v789 = vsel %vm768, %v765, %v716
    %v790 = vsel %vm768, %v766, %v718
    %v791 = vsel %vm768, %v767, %v720
    %v792 = vld [vmem:[%s2] sm:$0xff]
    %v793 = vld [vmem:[%s2 + $0x8] sm:$0xff]
    %v794 = vld [vmem:[%s2 + $0x10] sm:$0xff]
    %v795 = vld [vmem:[%s2 + $0x18] sm:$0xff]
    %v796 = vld [vmem:[%s2 + $0x20] sm:$0xff]
    %v797 = vld [vmem:[%s2 + $0x28] sm:$0xff]
    %v798 = vld [vmem:[%s2 + $0x30] sm:$0xff]
    %v799 = vld [vmem:[%s2 + $0x38] sm:$0xff]
    %v800 = vld [vmem:[%s2 + $0x40] sm:$0xff]
    %v801 = vld [vmem:[%s2 + $0x48] sm:$0xff]
    %v802 = vld [vmem:[%s2 + $0x50] sm:$0xff]
    %v803 = vld [vmem:[%s2 + $0x58] sm:$0xff]
    %v804 = vld [vmem:[%s3] sm:$0x1]
    %v806 = vlaneseq
    %v807 = vshrl.u32 %v806, 7
    %v808 = vsub.s32 0, %v807
    %v809 = vrot.slane %v804, %v808
    %vm811 = vcmask 785408
    %v813 = vsel %vm811, %v769, 0
    %v816 = vsel %vm811, %v770, 0
    %v819 = vsel %vm811, %v771, 0
    %v822 = vsel %vm811, %v772, 0
    %v825 = vsel %vm811, %v773, 0
    %v828 = vsel %vm811, %v774, 0
    %v831 = vsel %vm811, %v775, 0
    %v834 = vsel %vm811, %v776, 0
    %v837 = vsel %vm811, %v777, 0
    %v840 = vsel %vm811, %v778, 0
    %v843 = vsel %vm811, %v779, 0
    %v846 = vsel %vm811, %v780, 0
    %v849 = vsel %vm811, %v781, 0
    %v852 = vsel %vm811, %v782, 0
    %v855 = vsel %vm811, %v783, 0
    %v858 = vsel %vm811, %v784, 0
    %v861 = vsel %vm811, %v785, 0
    %v864 = vsel %vm811, %v786, 0
    %v867 = vsel %vm811, %v787, 0
    %v870 = vsel %vm811, %v788, 0
    %v873 = vsel %vm811, %v789, 0
    %v876 = vsel %vm811, %v790, 0
    %v879 = vsel %vm811, %v791, 0
    %881 = vmatprep.subr.mxu0 0.0
    %882 = vmatpush1.msra.mxu0 %v792
    %883 = vmatprep.subr.mxu0 0.0
    %884 = vmatpush1.msra.mxu0 %v793
    %885 = vmatprep.subr.mxu0 0.0
    %886 = vmatpush1.msra.mxu0 %v794
    %887 = vmatprep.subr.mxu0 0.0
    %888 = vmatpush1.msra.mxu0 %v795
    %889 = vmatprep.subr.mxu0 0.0
    %890 = vmatpush1.msra.mxu0 %v796
    %891 = vmatprep.subr.mxu0 0.0
    %892 = vmatpush1.msra.mxu0 %v797
    %893 = vmatprep.subr.mxu0 0.0
    %894 = vmatpush1.msra.mxu0 %v798
    %895 = vmatprep.subr.mxu0 0.0
    %896 = vmatpush1.msra.mxu0 %v799
    %897 = vmatprep.subr.mxu0 0.0
    %898 = vmatpush1.msra.mxu0 %v800
    %899 = vmatprep.subr.mxu0 0.0
    %900 = vmatpush1.msra.mxu0 %v801
    %901 = vmatprep.subr.mxu0 0.0
    %902 = vmatpush1.msra.mxu0 %v802
    %903 = vmatprep.subr.mxu0 0.0
    %904 = vmatpush1.msra.mxu0 %v803
    %905 = vmatprep.subr.mxu0 0.0
    %906 = vmatpush1.msra.mxu0 0.0
    %907 = vmatprep.subr.mxu0 0.0
    %908 = vmatpush1.msra.mxu0 0.0
    %909 = vmatprep.subr.mxu0 0.0
    %910 = vmatpush1.msra.mxu0 0.0
    %911 = vmatprep.subr.mxu0 0.0
    %912 = vmatpush1.msra.mxu0 0.0
    %913 = vmatprep.subr.mxu0 0.0
    %914 = vmatpush1.msra.mxu0 0.0
    %915 = vmatprep.subr.mxu0 0.0
    %916 = vmatpush1.msra.mxu0 0.0
    %917 = vmatprep.subr.mxu0 0.0
    %918 = vmatpush1.msra.mxu0 0.0
    %919 = vmatprep.subr.mxu0 0.0
    %920 = vmatpush1.msra.mxu0 0.0
    %921 = vmatprep.subr.mxu0 0.0
    %922 = vmatpush1.msra.mxu0 0.0
    %923 = vmatprep.subr.mxu0 0.0
    %924 = vmatpush1.msra.mxu0 0.0
    %925 = vmatprep.subr.mxu0 0.0
    %926 = vmatpush1.msra.mxu0 0.0
    %927 = vmatprep.subr.mxu0 0.0
    %928 = vmatpush1.msra.mxu0 0.0
    %929 = vmatprep.subr.mxu0 0.0
    %930 = vmatpush1.msra.mxu0 0.0
    %931 = vmatprep.subr.mxu0 0.0
    %932 = vmatpush1.msra.mxu0 0.0
    %933 = vmatprep.subr.mxu0 0.0
    %934 = vmatpush1.msra.mxu0 0.0
    %935 = vmatprep.subr.mxu0 0.0
    %936 = vmatpush1.msra.mxu0 0.0
    %937 = vmatprep.subr.mxu0 0.0
    %938 = vmatpush1.msra.mxu0 0.0
    %939 = vmatprep.subr.mxu0 0.0
    %940 = vmatpush1.msra.mxu0 0.0
    %941 = vmatprep.subr.mxu0 0.0
    %942 = vmatpush1.msra.mxu0 0.0
    %943 = vmatprep.subr.mxu0 0.0
    %944 = vmatpush1.msra.mxu0 0.0
    %945 = vmatprep.mubr.f32.mxu0 0.0
    %946 = vmatmul.mubr.f32.gmra.mrb[0].mxu0 %v813
    %v947 = vpop.f32.mrb[0].mxu0
    %v948 = vadd.f32 %v809, %v947
    %v949 = vpop.f32.mrb[0].mxu0
    %950 = vmatprep.mubr.f32.mxu0 0.0
    %951 = vmatmul.mubr.f32.gmra.mrb[0].mxu0 %v816
    %v952 = vpop.f32.mrb[0].mxu0
    %v953 = vadd.f32 %v809, %v952
    %v954 = vpop.f32.mrb[0].mxu0
    %955 = vmatprep.mubr.f32.mxu0 0.0
    %956 = vmatmul.mubr.f32.gmra.mrb[0].mxu0 %v819
    %v957 = vpop.f32.mrb[0].mxu0
    %v958 = vadd.f32 %v809, %v957
    %v959 = vpop.f32.mrb[0].mxu0
    %960 = vmatprep.mubr.f32.mxu0 0.0
    %961 = vmatmul.mubr.f32.gmra.mrb[0].mxu0 %v822
    %v962 = vpop.f32.mrb[0].mxu0
    %v963 = vadd.f32 %v809, %v962
    %v964 = vpop.f32.mrb[0].mxu0
    %965 = vmatprep.mubr.f32.mxu0 0.0
    %966 = vmatmul.mubr.f32.gmra.mrb[0].mxu0 %v825
    %v967 = vpop.f32.mrb[0].mxu0
    %v968 = vadd.f32 %v809, %v967
    %v969 = vpop.f32.mrb[0].mxu0
    %970 = vmatprep.mubr.f32.mxu0 0.0
    %971 = vmatmul.mubr.f32.gmra.mrb[0].mxu0 %v828
    %v972 = vpop.f32.mrb[0].mxu0
    %v973 = vadd.f32 %v809, %v972
    %v974 = vpop.f32.mrb[0].mxu0
    %975 = vmatprep.mubr.f32.mxu0 0.0
    %976 = vmatmul.mubr.f32.gmra.mrb[0].mxu0 %v831
    %v977 = vpop.f32.mrb[0].mxu0
    %v978 = vadd.f32 %v809, %v977
    %v979 = vpop.f32.mrb[0].mxu0
    %980 = vmatprep.mubr.f32.mxu0 0.0
    %981 = vmatmul.mubr.f32.gmra.mrb[0].mxu0 %v834
    %v982 = vpop.f32.mrb[0].mxu0
    %v983 = vadd.f32 %v809, %v982
    %v984 = vpop.f32.mrb[0].mxu0
    %985 = vmatprep.mubr.f32.mxu0 0.0
    %986 = vmatmul.mubr.f32.gmra.mrb[0].mxu0 %v837
    %v987 = vpop.f32.mrb[0].mxu0
    %v988 = vadd.f32 %v809, %v987
    %v989 = vpop.f32.mrb[0].mxu0
    %990 = vmatprep.mubr.f32.mxu0 0.0
    %991 = vmatmul.mubr.f32.gmra.mrb[0].mxu0 %v840
    %v992 = vpop.f32.mrb[0].mxu0
    %v993 = vadd.f32 %v809, %v992
    %v994 = vpop.f32.mrb[0].mxu0
    %995 = vmatprep.mubr.f32.mxu0 0.0
    %996 = vmatmul.mubr.f32.gmra.mrb[0].mxu0 %v843
    %v997 = vpop.f32.mrb[0].mxu0
    %v998 = vadd.f32 %v809, %v997
    %v999 = vpop.f32.mrb[0].mxu0
    %1000 = vmatprep.mubr.f32.mxu0 0.0
    %1001 = vmatmul.mubr.f32.gmra.mrb[0].mxu0 %v846
    %v1002 = vpop.f32.mrb[0].mxu0
    %v1003 = vadd.f32 %v809, %v1002
    %v1004 = vpop.f32.mrb[0].mxu0
    %1005 = vmatprep.mubr.f32.mxu0 0.0
    %1006 = vmatmul.mubr.f32.gmra.mrb[0].mxu0 %v849
    %v1007 = vpop.f32.mrb[0].mxu0
    %v1008 = vadd.f32 %v809, %v1007
    %v1009 = vpop.f32.mrb[0].mxu0
    %1010 = vmatprep.mubr.f32.mxu0 0.0
    %1011 = vmatmul.mubr.f32.gmra.mrb[0].mxu0 %v852
    %v1012 = vpop.f32.mrb[0].mxu0
    %v1013 = vadd.f32 %v809, %v1012
    %v1014 = vpop.f32.mrb[0].mxu0
    %1015 = vmatprep.mubr.f32.mxu0 0.0
    %1016 = vmatmul.mubr.f32.gmra.mrb[0].mxu0 %v855
    %v1017 = vpop.f32.mrb[0].mxu0
    %v1018 = vadd.f32 %v809, %v1017
    %v1019 = vpop.f32.mrb[0].mxu0
    %1020 = vmatprep.mubr.f32.mxu0 0.0
    %1021 = vmatmul.mubr.f32.gmra.mrb[0].mxu0 %v858
    %v1022 = vpop.f32.mrb[0].mxu0
    %v1023 = vadd.f32 %v809, %v1022
    %v1024 = vpop.f32.mrb[0].mxu0
    %1025 = vmatprep.mubr.f32.mxu0 0.0
    %1026 = vmatmul.mubr.f32.gmra.mrb[0].mxu0 %v861
    %v1027 = vpop.f32.mrb[0].mxu0
    %v1028 = vadd.f32 %v809, %v1027
    %v1029 = vpop.f32.mrb[0].mxu0
    %1030 = vmatprep.mubr.f32.mxu0 0.0
    %1031 = vmatmul.mubr.f32.gmra.mrb[0].mxu0 %v864
    %v1032 = vpop.f32.mrb[0].mxu0
    %v1033 = vadd.f32 %v809, %v1032
    %v1034 = vpop.f32.mrb[0].mxu0
    %1035 = vmatprep.mubr.f32.mxu0 0.0
    %1036 = vmatmul.mubr.f32.gmra.mrb[0].mxu0 %v867
    %v1037 = vpop.f32.mrb[0].mxu0
    %v1038 = vadd.f32 %v809, %v1037
    %v1039 = vpop.f32.mrb[0].mxu0
    %1040 = vmatprep.mubr.f32.mxu0 0.0
    %1041 = vmatmul.mubr.f32.gmra.mrb[0].mxu0 %v870
    %v1042 = vpop.f32.mrb[0].mxu0
    %v1043 = vadd.f32 %v809, %v1042
    %v1044 = vpop.f32.mrb[0].mxu0
    %1045 = vmatprep.mubr.f32.mxu0 0.0
    %1046 = vmatmul.mubr.f32.gmra.mrb[0].mxu0 %v873
    %v1047 = vpop.f32.mrb[0].mxu0
    %v1048 = vadd.f32 %v809, %v1047
    %v1049 = vpop.f32.mrb[0].mxu0
    %1050 = vmatprep.mubr.f32.mxu0 0.0
    %1051 = vmatmul.mubr.f32.gmra.mrb[0].mxu0 %v876
    %v1052 = vpop.f32.mrb[0].mxu0
    %v1053 = vadd.f32 %v809, %v1052
    %v1054 = vpop.f32.mrb[0].mxu0
    %1055 = vmatprep.mubr.f32.mxu0 0.0
    %1056 = vmatmul.mubr.f32.gmra.mrb[0].mxu0 %v879
    %v1057 = vpop.f32.mrb[0].mxu0
    %v1058 = vadd.f32 %v809, %v1057
    %v1059 = vpop.f32.mrb[0].mxu0
    %1060 = vdwg.mxu0
    %v1061 = vmax.f32 %v948, 0.0
    %v1062 = vmax.f32 %v953, 0.0
    %v1063 = vmax.f32 %v958, 0.0
    %v1064 = vmax.f32 %v963, 0.0
    %v1065 = vmax.f32 %v968, 0.0
    %v1066 = vmax.f32 %v973, 0.0
    %v1067 = vmax.f32 %v978, 0.0
    %v1068 = vmax.f32 %v983, 0.0
    %v1069 = vmax.f32 %v988, 0.0
    %v1070 = vmax.f32 %v993, 0.0
    %v1071 = vmax.f32 %v998, 0.0
    %v1072 = vmax.f32 %v1003, 0.0
    %v1073 = vmax.f32 %v1008, 0.0
    %v1074 = vmax.f32 %v1013, 0.0
    %v1075 = vmax.f32 %v1018, 0.0
    %v1076 = vmax.f32 %v1023, 0.0
    %v1077 = vmax.f32 %v1028, 0.0
    %v1078 = vmax.f32 %v1033, 0.0
    %v1079 = vmax.f32 %v1038, 0.0
    %v1080 = vmax.f32 %v1043, 0.0
    %v1081 = vmax.f32 %v1048, 0.0
    %v1082 = vmax.f32 %v1053, 0.0
    %v1083 = vmax.f32 %v1058, 0.0
    %vm1084 = vcmask 130048
    %v1086 = vsel %vm1084, %v1061, 0
    %v1089 = vsel %vm1084, %v1062, 0
    %v1092 = vsel %vm1084, %v1063, 0
    %v1095 = vsel %vm1084, %v1064, 0
    %v1098 = vsel %vm1084, %v1065, 0
    %v1101 = vsel %vm1084, %v1066, 0
    %v1104 = vsel %vm1084, %v1067, 0
    %v1107 = vsel %vm1084, %v1068, 0
    %v1110 = vsel %vm1084, %v1069, 0
    %v1113 = vsel %vm1084, %v1070, 0
    %v1116 = vsel %vm1084, %v1071, 0
    %v1119 = vsel %vm1084, %v1072, 0
    %v1122 = vsel %vm1084, %v1073, 0
    %v1125 = vsel %vm1084, %v1074, 0
    %v1128 = vsel %vm1084, %v1075, 0
    %v1131 = vsel %vm1084, %v1076, 0
    %v1134 = vsel %vm1084, %v1077, 0
    %v1137 = vsel %vm1084, %v1078, 0
    %v1140 = vsel %vm1084, %v1079, 0
    %v1143 = vsel %vm1084, %v1080, 0
    %v1146 = vsel %vm1084, %v1081, 0
    %v1149 = vsel %vm1084, %v1082, 0
    %v1152 = vsel %vm1084, %v1083, 0
    %1154 = vmatprep.subr.mxu0 0.0
    %1155 = vmatpush1.xpose.msra.mxu0 %v1113
    %1156 = vmatprep.subr.mxu0 0.0
    %1157 = vmatpush1.xpose.msra.mxu0 %v1116
    %1158 = vmatprep.subr.mxu0 0.0
    %1159 = vmatpush1.xpose.msra.mxu0 %v1119
    %1160 = vmatprep.subr.mxu0 0.0
    %1161 = vmatpush1.xpose.msra.mxu0 %v1122
    %1162 = vmatprep.subr.mxu0 0.0
    %1163 = vmatpush1.xpose.msra.mxu0 %v1125
    %1164 = vmatprep.subr.mxu0 0.0
    %1165 = vmatpush1.xpose.msra.mxu0 %v1128
    %1166 = vmatprep.subr.mxu0 0.0
    %1167 = vmatpush1.xpose.msra.mxu0 %v1131
    %1168 = vmatprep.subr.mxu0 0.0
    %1169 = vmatpush1.xpose.msra.mxu0 %v1134
    %1170 = vmatprep.subr.mxu0 0.0
    %1171 = vmatpush1.xpose.msra.mxu0 %v1137
    %1172 = vmatprep.subr.mxu0 0.0
    %1173 = vmatpush1.xpose.msra.mxu0 %v1140
    %1174 = vmatprep.subr.mxu0 0.0
    %1175 = vmatpush1.xpose.msra.mxu0 %v1143
    %1176 = vmatprep.subr.mxu0 0.0
    %1177 = vmatpush1.xpose.msra.mxu0 %v1146
    %1178 = vmatprep.subr.mxu0 0.0
    %1179 = vmatpush1.xpose.msra.mxu0 %v1149
    %1180 = vmatprep.subr.mxu0 0.0
    %1181 = vmatpush1.xpose.msra.mxu0 %v1152
    %1182 = vmatprep.subr.mxu0 0.0
    %1183 = vmatpush1.xpose.msra.mxu0 0.0
    %1184 = vmatprep.subr.mxu0 0.0
    %1185 = vmatpush1.xpose.msra.mxu0 0.0
    %1186 = vmatprep.subr.mxu0 0.0
    %1187 = vmatpush1.xpose.msra.mxu0 0.0
    %1188 = vmatprep.subr.mxu0 0.0
    %1189 = vmatpush1.xpose.msra.mxu0 0.0
    %1190 = vmatprep.subr.mxu0 0.0
    %1191 = vmatpush1.xpose.msra.mxu0 0.0
    %1192 = vmatprep.subr.mxu0 0.0
    %1193 = vmatpush1.xpose.msra.mxu0 0.0
    %1194 = vmatprep.subr.mxu0 0.0
    %1195 = vmatpush1.xpose.msra.mxu0 0.0
    %1196 = vmatprep.subr.mxu0 0.0
    %1197 = vmatpush1.xpose.msra.mxu0 0.0
    %1198 = vmatprep.subr.mxu0 0.0
    %1199 = vmatpush1.xpose.msra.mxu0 0.0
    %1200 = vmatprep.subr.mxu0 0.0
    %1201 = vmatpush1.xpose.msra.mxu0 0.0
    %1202 = vmatprep.subr.mxu0 0.0
    %1203 = vmatpush1.xpose.msra.mxu0 0.0
    %1204 = vmatprep.subr.mxu0 0.0
    %1205 = vmatpush1.xpose.msra.mxu0 0.0
    %1206 = vmatprep.subr.mxu0 0.0
    %1207 = vmatpush1.xpose.msra.mxu0 0.0
    %1208 = vmatprep.subr.mxu0 0.0
    %1209 = vmatpush1.xpose.msra.mxu0 0.0
    %1210 = vmatprep.subr.mxu0 0.0
    %1211 = vmatpush1.xpose.msra.mxu0 0.0
    %1212 = vmatprep.subr.mxu0 0.0
    %1213 = vmatpush1.xpose.msra.mxu0 0.0
    %1214 = vmatprep.subr.mxu0 0.0
    %1215 = vmatpush1.xpose.msra.mxu0 0.0
    %1216 = vmatprep.subr.mxu0 0.0
    %1217 = vmatpush1.xpose.msra.mxu0 0.0
    %1218 = vmatprep.mubr.f32.mxu0 0.0
    %1219 = vmatmul.mubr.f32.gmra.mrb[0].mxu0 %v1086
    %v1220 = vpop.f32.mrb[0].mxu0
    %v1221 = vadd.f32 0.0, %v1220
    %v1222 = vpop.f32.mrb[0].mxu0
    %1223 = vmatprep.mubr.f32.mxu0 0.0
    %1224 = vmatmul.mubr.f32.gmra.mrb[0].mxu0 %v1089
    %v1225 = vpop.f32.mrb[0].mxu0
    %v1226 = vadd.f32 0.0, %v1225
    %v1227 = vpop.f32.mrb[0].mxu0
    %1228 = vmatprep.mubr.f32.mxu0 0.0
    %1229 = vmatmul.mubr.f32.gmra.mrb[0].mxu0 %v1092
    %v1230 = vpop.f32.mrb[0].mxu0
    %v1231 = vadd.f32 0.0, %v1230
    %v1232 = vpop.f32.mrb[0].mxu0
    %1233 = vmatprep.mubr.f32.mxu0 0.0
    %1234 = vmatmul.mubr.f32.gmra.mrb[0].mxu0 %v1095
    %v1235 = vpop.f32.mrb[0].mxu0
    %v1236 = vadd.f32 0.0, %v1235
    %v1237 = vpop.f32.mrb[0].mxu0
    %1238 = vmatprep.mubr.f32.mxu0 0.0
    %1239 = vmatmul.mubr.f32.gmra.mrb[0].mxu0 %v1098
    %v1240 = vpop.f32.mrb[0].mxu0
    %v1241 = vadd.f32 0.0, %v1240
    %v1242 = vpop.f32.mrb[0].mxu0
    %1243 = vmatprep.mubr.f32.mxu0 0.0
    %1244 = vmatmul.mubr.f32.gmra.mrb[0].mxu0 %v1101
    %v1245 = vpop.f32.mrb[0].mxu0
    %v1246 = vadd.f32 0.0, %v1245
    %v1247 = vpop.f32.mrb[0].mxu0
    %1248 = vmatprep.mubr.f32.mxu0 0.0
    %1249 = vmatmul.mubr.f32.gmra.mrb[0].mxu0 %v1104
    %v1250 = vpop.f32.mrb[0].mxu0
    %v1251 = vadd.f32 0.0, %v1250
    %v1252 = vpop.f32.mrb[0].mxu0
    %1253 = vmatprep.mubr.f32.mxu0 0.0
    %1254 = vmatmul.mubr.f32.gmra.mrb[0].mxu0 %v1107
    %v1255 = vpop.f32.mrb[0].mxu0
    %v1256 = vadd.f32 0.0, %v1255
    %v1257 = vpop.f32.mrb[0].mxu0
    %1258 = vmatprep.mubr.f32.mxu0 0.0
    %1259 = vmatmul.mubr.f32.gmra.mrb[0].mxu0 %v1110
    %v1260 = vpop.f32.mrb[0].mxu0
    %v1261 = vadd.f32 0.0, %v1260
    %v1262 = vpop.f32.mrb[0].mxu0
    %1263 = vdwg.mxu0
    %vm1269 = vcmask 1043456
    %v1270 = vrot.slane %v1221, 4
    %v1271 = vrot.slane %v1226, 4
    %v1272 = vsel %vm1269, %v1270, %v1271
    %v1273 = vrot.slane %v1231, 4
    %v1274 = vsel %vm1269, %v1271, %v1273
    %v1275 = vrot.slane %v1236, 4
    %v1276 = vsel %vm1269, %v1273, %v1275
    %v1277 = vrot.slane %v1241, 4
    %v1278 = vsel %vm1269, %v1275, %v1277
    %1279 = vrot.lane.b32.xlu0 %v1270, 110
    %v1280 = vpop.permute.xlu0 %1279
    %1281 = vrot.lane.b32.xlu0 %v1272, 110
    %v1282 = vpop.permute.xlu0 %1281
    %1283 = vrot.lane.b32.xlu0 %v1274, 110
    %v1284 = vpop.permute.xlu0 %1283
    %1285 = vrot.lane.b32.xlu0 %v1276, 110
    %v1286 = vpop.permute.xlu0 %1285
    %1287 = vrot.lane.b32.xlu0 %v1278, 110
    %v1288 = vpop.permute.xlu0 %1287
    %1290 = vrot.lane.b32.xlu0 %v1221, 92
    %v1291 = vpop.permute.xlu0 %1290
    %1292 = vrot.lane.b32.xlu0 %v1226, 92
    %v1293 = vpop.permute.xlu0 %1292
    %1294 = vrot.lane.b32.xlu0 %v1231, 92
    %v1295 = vpop.permute.xlu0 %1294
    %1296 = vrot.lane.b32.xlu0 %v1236, 92
    %v1297 = vpop.permute.xlu0 %1296
    %1298 = vrot.lane.b32.xlu0 %v1241, 92
    %v1299 = vpop.permute.xlu0 %1298
    %1305 = vrot.lane.b32.xlu0 %v1241, 74
    %v1306 = vpop.permute.xlu0 %1305
    %1307 = vrot.lane.b32.xlu0 %v1246, 74
    %v1308 = vpop.permute.xlu0 %1307
    %1309 = vrot.lane.b32.xlu0 %v1251, 74
    %v1310 = vpop.permute.xlu0 %1309
    %1311 = vrot.lane.b32.xlu0 %v1256, 74
    %v1312 = vpop.permute.xlu0 %1311
    %1313 = vrot.lane.b32.xlu0 %v1261, 74
    %v1314 = vpop.permute.xlu0 %1313
    %v1316 = vrot.slane %v1246, 4
    %v1317 = vsel %vm1269, %v1277, %v1316
    %v1318 = vrot.slane %v1251, 4
    %v1319 = vsel %vm1269, %v1316, %v1318
    %v1320 = vrot.slane %v1256, 4
    %v1321 = vsel %vm1269, %v1318, %v1320
    %v1322 = vrot.slane %v1261, 4
    %v1323 = vsel %vm1269, %v1320, %v1322
    %1324 = vrot.lane.b32.xlu0 %v1317, 56
    %v1325 = vpop.permute.xlu0 %1324
    %1326 = vrot.lane.b32.xlu0 %v1319, 56
    %v1327 = vpop.permute.xlu0 %1326
    %1328 = vrot.lane.b32.xlu0 %v1321, 56
    %v1329 = vpop.permute.xlu0 %1328
    %1330 = vrot.lane.b32.xlu0 %v1323, 56
    %v1331 = vpop.permute.xlu0 %1330
    %1332 = vrot.lane.b32.xlu0 %v1322, 56
    %v1333 = vpop.permute.xlu0 %1332
    %1335 = vrot.lane.b32.xlu0 %v1241, 38
    %v1336 = vpop.permute.xlu0 %1335
    %1337 = vrot.lane.b32.xlu0 %v1246, 38
    %v1338 = vpop.permute.xlu0 %1337
    %1339 = vrot.lane.b32.xlu0 %v1251, 38
    %v1340 = vpop.permute.xlu0 %1339
    %1341 = vrot.lane.b32.xlu0 %v1256, 38
    %v1342 = vpop.permute.xlu0 %1341
    %1343 = vrot.lane.b32.xlu0 %v1261, 38
    %v1344 = vpop.permute.xlu0 %1343
    %v1346 = vsel %vm1269, %v1241, %v1280
    %v1347 = vsel %vm1269, %v1299, %v1306
    %v1348 = vsel %vm1269, %v1333, %v1336
    %vm1349 = vcmp.eq.s32.totalorder %v70, 0
    %vm1350 = vcmp.eq.s32.totalorder %v71, 0
    %vm1351 = vcmp.eq.s32.totalorder %v72, 0
    %vm1352 = vcmp.eq.s32.totalorder %v73, 0
    %v1356 = vrot.slane %v1221, 7
    %v1357 = vrot.slane %v1226, 7
    %v1358 = vsel %vm143, %v1356, %v1357
    %v1359 = vrot.slane %v1231, 7
    %v1360 = vsel %vm143, %v1357, %v1359
    %v1361 = vrot.slane %v1236, 7
    %v1362 = vsel %vm143, %v1359, %v1361
    %v1363 = vrot.slane %v1346, 7
    %v1364 = vsel %vm143, %v1361, %v1363
    %v1365 = vrot.slane %v1282, 7
    %v1366 = vsel %vm143, %v1363, %v1365
    %v1367 = vrot.slane %v1284, 7
    %v1368 = vsel %vm143, %v1365, %v1367
    %v1369 = vrot.slane %v1286, 7
    %v1370 = vsel %vm143, %v1367, %v1369
    %v1371 = vrot.slane %v1288, 7
    %v1372 = vsel %vm143, %v1369, %v1371
    %v1373 = vrot.slane %v1291, 7
    %v1374 = vsel %vm143, %v1371, %v1373
    %v1375 = vrot.slane %v1293, 7
    %v1376 = vsel %vm143, %v1373, %v1375
    %v1377 = vrot.slane %v1295, 7
    %v1378 = vsel %vm143, %v1375, %v1377
    %v1379 = vrot.slane %v1297, 7
    %v1380 = vsel %vm143, %v1377, %v1379
    %v1381 = vrot.slane %v1347, 7
    %v1382 = vsel %vm143, %v1379, %v1381
    %v1383 = vrot.slane %v1308, 7
    %v1384 = vsel %vm143, %v1381, %v1383
    %v1385 = vrot.slane %v1310, 7
    %v1386 = vsel %vm143, %v1383, %v1385
    %v1387 = vrot.slane %v1312, 7
    %v1388 = vsel %vm143, %v1385, %v1387
    %v1389 = vrot.slane %v1314, 7
    %v1390 = vsel %vm143, %v1387, %v1389
    %v1391 = vrot.slane %v1325, 7
    %v1392 = vsel %vm143, %v1389, %v1391
    %v1393 = vrot.slane %v1327, 7
    %v1394 = vsel %vm143, %v1391, %v1393
    %v1395 = vrot.slane %v1329, 7
    %v1396 = vsel %vm143, %v1393, %v1395
    %v1397 = vrot.slane %v1331, 7
    %v1398 = vsel %vm143, %v1395, %v1397
    %v1399 = vrot.slane %v1348, 7
    %v1400 = vsel %vm143, %v1397, %v1399
    %v1401 = vrot.slane %v1338, 7
    %v1402 = vsel %vm143, %v1399, %v1401
    %v1403 = vrot.slane %v1340, 7
    %v1404 = vsel %vm143, %v1401, %v1403
    %v1405 = vrot.slane %v1342, 7
    %v1406 = vsel %vm143, %v1403, %v1405
    %v1407 = vrot.slane %v1344, 7
    %v1408 = vsel %vm143, %v1405, %v1407
    %v1436 = vsel %vm143, 0.0, %v1356
    %v1437 = vsel %vm1349, 1, 0
    %v1438 = vsel %vm1350, 1, 0
    %v1439 = vsel %vm1351, 1, 0
    %v1440 = vsel %vm1352, 1, 0
    %1441 = vset.pattern.permute.xlu0 0
    %1442 = vperm.xlu0 %1441, %v1437
    %v1443 = vpop.permute.xlu0 %1442
    %1444 = vset.pattern.permute.xlu0 0
    %1445 = vperm.xlu0 %1444, %v1438
    %v1446 = vpop.permute.xlu0 %1445
    %1447 = vset.pattern.permute.xlu0 0
    %1448 = vperm.xlu0 %1447, %v1439
    %v1449 = vpop.permute.xlu0 %1448
    %1450 = vset.pattern.permute.xlu0 0
    %1451 = vperm.xlu0 %1450, %v1440
    %v1452 = vpop.permute.xlu0 %1451
    %vm1453 = vcmp.eq.s32.totalorder %v1443, 1
    %vm1454 = vcmp.eq.s32.totalorder %v1446, 1
    %vm1455 = vcmp.eq.s32.totalorder %v1449, 1
    %vm1456 = vcmp.eq.s32.totalorder %v1452, 1
    %v1457 = vsel %vm305, 0.0, %v1436
    %v1458 = vsel %vm306, 0.0, %v1358
    %v1459 = vsel %vm307, 0.0, %v1360
    %v1460 = vsel %vm308, 0.0, %v1362
    %v1461 = vsel %vm309, 0.0, %v1364
    %v1462 = vsel %vm310, 0.0, %v1366
    %v1463 = vsel %vm311, 0.0, %v1368
    %v1464 = vsel %vm312, 0.0, %v1370
    %v1465 = vsel %vm313, 0.0, %v1372
    %v1466 = vsel %vm314, 0.0, %v1374
    %v1467 = vsel %vm315, 0.0, %v1376
    %v1468 = vsel %vm316, 0.0, %v1378
    %v1469 = vsel %vm317, 0.0, %v1380
    %v1470 = vsel %vm318, 0.0, %v1382
    %v1471 = vsel %vm319, 0.0, %v1384
    %v1472 = vsel %vm320, 0.0, %v1386
    %v1473 = vsel %vm321, 0.0, %v1388
    %v1474 = vsel %vm322, 0.0, %v1390
    %v1475 = vsel %vm323, 0.0, %v1392
    %v1476 = vsel %vm324, 0.0, %v1394
    %v1477 = vsel %vm325, 0.0, %v1396
    %v1478 = vsel %vm326, 0.0, %v1398
    %v1479 = vsel %vm327, 0.0, %v1400
    %v1480 = vsel %vm1453, 0.0, %v1402
    %v1481 = vsel %vm1454, 0.0, %v1404
    %v1482 = vsel %vm1455, 0.0, %v1406
    %v1483 = vsel %vm1456, 0.0, %v1408
    %vm1484 = vcmp.eq.s32.totalorder %v70, 17
    %vm1485 = vcmp.eq.s32.totalorder %v71, 17
    %vm1486 = vcmp.eq.s32.totalorder %v72, 17
    %vm1487 = vcmp.eq.s32.totalorder %v73, 17
    %v1488 = vrot.slane %v1221, 1
    %v1489 = vrot.slane %v1226, 1
    %v1490 = vsel %vm374, %v1488, %v1489
    %v1491 = vrot.slane %v1231, 1
    %v1492 = vsel %vm374, %v1489, %v1491
    %v1493 = vrot.slane %v1236, 1
    %v1494 = vsel %vm374, %v1491, %v1493
    %v1495 = vrot.slane %v1346, 1
    %v1496 = vsel %vm374, %v1493, %v1495
    %v1497 = vrot.slane %v1282, 1
    %v1498 = vsel %vm374, %v1495, %v1497
    %v1499 = vrot.slane %v1284, 1
    %v1500 = vsel %vm374, %v1497, %v1499
    %v1501 = vrot.slane %v1286, 1
    %v1502 = vsel %vm374, %v1499, %v1501
    %v1503 = vrot.slane %v1288, 1
    %v1504 = vsel %vm374, %v1501, %v1503
    %v1505 = vrot.slane %v1291, 1
    %v1506 = vsel %vm374, %v1503, %v1505
    %v1507 = vrot.slane %v1293, 1
    %v1508 = vsel %vm374, %v1505, %v1507
    %v1509 = vrot.slane %v1295, 1
    %v1510 = vsel %vm374, %v1507, %v1509
    %v1511 = vrot.slane %v1297, 1
    %v1512 = vsel %vm374, %v1509, %v1511
    %v1513 = vrot.slane %v1347, 1
    %v1514 = vsel %vm374, %v1511, %v1513
    %v1515 = vrot.slane %v1308, 1
    %v1516 = vsel %vm374, %v1513, %v1515
    %v1517 = vrot.slane %v1310, 1
    %v1518 = vsel %vm374, %v1515, %v1517
    %v1519 = vrot.slane %v1312, 1
    %v1520 = vsel %vm374, %v1517, %v1519
    %v1521 = vrot.slane %v1314, 1
    %v1522 = vsel %vm374, %v1519, %v1521
    %v1523 = vrot.slane %v1325, 1
    %v1524 = vsel %vm374, %v1521, %v1523
    %v1525 = vrot.slane %v1327, 1
    %v1526 = vsel %vm374, %v1523, %v1525
    %v1527 = vrot.slane %v1329, 1
    %v1528 = vsel %vm374, %v1525, %v1527
    %v1529 = vrot.slane %v1331, 1
    %v1530 = vsel %vm374, %v1527, %v1529
    %v1531 = vrot.slane %v1348, 1
    %v1532 = vsel %vm374, %v1529, %v1531
    %v1533 = vrot.slane %v1338, 1
    %v1534 = vsel %vm374, %v1531, %v1533
    %v1535 = vrot.slane %v1340, 1
    %v1536 = vsel %vm374, %v1533, %v1535
    %v1537 = vrot.slane %v1342, 1
    %v1538 = vsel %vm374, %v1535, %v1537
    %v1539 = vrot.slane %v1344, 1
    %v1540 = vsel %vm374, %v1537, %v1539
    %v1568 = vsel %vm374, %v1539, 0.0
    %v1569 = vsel %vm1484, 1, 0
    %v1570 = vsel %vm1485, 1, 0
    %v1571 = vsel %vm1486, 1, 0
    %v1572 = vsel %vm1487, 1, 0
    %1573 = vset.pattern.permute.xlu0 0
    %1574 = vperm.xlu0 %1573, %v1569
    %v1575 = vpop.permute.xlu0 %1574
    %1576 = vset.pattern.permute.xlu0 0
    %1577 = vperm.xlu0 %1576, %v1570
    %v1578 = vpop.permute.xlu0 %1577
    %1579 = vset.pattern.permute.xlu0 0
    %1580 = vperm.xlu0 %1579, %v1571
    %v1581 = vpop.permute.xlu0 %1580
    %1582 = vset.pattern.permute.xlu0 0
    %1583 = vperm.xlu0 %1582, %v1572
    %v1584 = vpop.permute.xlu0 %1583
    %vm1585 = vcmp.eq.s32.totalorder %v1575, 1
    %vm1586 = vcmp.eq.s32.totalorder %v1578, 1
    %vm1587 = vcmp.eq.s32.totalorder %v1581, 1
    %vm1588 = vcmp.eq.s32.totalorder %v1584, 1
    %v1589 = vsel %vm537, 0.0, %v1490
    %v1590 = vsel %vm538, 0.0, %v1492
    %v1591 = vsel %vm539, 0.0, %v1494
    %v1592 = vsel %vm540, 0.0, %v1496
    %v1593 = vsel %vm541, 0.0, %v1498
    %v1594 = vsel %vm542, 0.0, %v1500
    %v1595 = vsel %vm543, 0.0, %v1502
    %v1596 = vsel %vm544, 0.0, %v1504
    %v1597 = vsel %vm545, 0.0, %v1506
    %v1598 = vsel %vm546, 0.0, %v1508
    %v1599 = vsel %vm547, 0.0, %v1510
    %v1600 = vsel %vm548, 0.0, %v1512
    %v1601 = vsel %vm549, 0.0, %v1514
    %v1602 = vsel %vm550, 0.0, %v1516
    %v1603 = vsel %vm551, 0.0, %v1518
    %v1604 = vsel %vm552, 0.0, %v1520
    %v1605 = vsel %vm553, 0.0, %v1522
    %v1606 = vsel %vm554, 0.0, %v1524
    %v1607 = vsel %vm555, 0.0, %v1526
    %v1608 = vsel %vm556, 0.0, %v1528
    %v1609 = vsel %vm557, 0.0, %v1530
    %v1610 = vsel %vm558, 0.0, %v1532
    %v1611 = vsel %vm559, 0.0, %v1534
    %v1612 = vsel %vm1585, 0.0, %v1536
    %v1613 = vsel %vm1586, 0.0, %v1538
    %v1614 = vsel %vm1587, 0.0, %v1540
    %v1615 = vsel %vm1588, 0.0, %v1568
    %1616 = vrot.lane.b32.xlu0 %v1221, 18
    %v1617 = vpop.permute.xlu0 %1616
    %1618 = vrot.lane.b32.xlu0 %v1226, 18
    %v1619 = vpop.permute.xlu0 %1618
    %1620 = vrot.lane.b32.xlu0 %v1231, 18
    %v1621 = vpop.permute.xlu0 %1620
    %1622 = vrot.lane.b32.xlu0 %v1236, 18
    %v1623 = vpop.permute.xlu0 %1622
    %1624 = vrot.lane.b32.xlu0 %v1346, 18
    %v1625 = vpop.permute.xlu0 %1624
    %1626 = vrot.lane.b32.xlu0 %v1282, 18
    %v1627 = vpop.permute.xlu0 %1626
    %1628 = vrot.lane.b32.xlu0 %v1284, 18
    %v1629 = vpop.permute.xlu0 %1628
    %1630 = vrot.lane.b32.xlu0 %v1286, 18
    %v1631 = vpop.permute.xlu0 %1630
    %1632 = vrot.lane.b32.xlu0 %v1288, 18
    %v1633 = vpop.permute.xlu0 %1632
    %1634 = vrot.lane.b32.xlu0 %v1291, 18
    %v1635 = vpop.permute.xlu0 %1634
    %1636 = vrot.lane.b32.xlu0 %v1293, 18
    %v1637 = vpop.permute.xlu0 %1636
    %1638 = vrot.lane.b32.xlu0 %v1295, 18
    %v1639 = vpop.permute.xlu0 %1638
    %1640 = vrot.lane.b32.xlu0 %v1297, 18
    %v1641 = vpop.permute.xlu0 %1640
    %1642 = vrot.lane.b32.xlu0 %v1347, 18
    %v1643 = vpop.permute.xlu0 %1642
    %1644 = vrot.lane.b32.xlu0 %v1308, 18
    %v1645 = vpop.permute.xlu0 %1644
    %1646 = vrot.lane.b32.xlu0 %v1310, 18
    %v1647 = vpop.permute.xlu0 %1646
    %1648 = vrot.lane.b32.xlu0 %v1312, 18
    %v1649 = vpop.permute.xlu0 %1648
    %1650 = vrot.lane.b32.xlu0 %v1314, 18
    %v1651 = vpop.permute.xlu0 %1650
    %1652 = vrot.lane.b32.xlu0 %v1325, 18
    %v1653 = vpop.permute.xlu0 %1652
    %1654 = vrot.lane.b32.xlu0 %v1327, 18
    %v1655 = vpop.permute.xlu0 %1654
    %1656 = vrot.lane.b32.xlu0 %v1329, 18
    %v1657 = vpop.permute.xlu0 %1656
    %1658 = vrot.lane.b32.xlu0 %v1331, 18
    %v1659 = vpop.permute.xlu0 %1658
    %1660 = vrot.lane.b32.xlu0 %v1348, 18
    %v1661 = vpop.permute.xlu0 %1660
    %1662 = vrot.lane.b32.xlu0 %v1338, 18
    %v1663 = vpop.permute.xlu0 %1662
    %1664 = vrot.lane.b32.xlu0 %v1340, 18
    %v1665 = vpop.permute.xlu0 %1664
    %1666 = vrot.lane.b32.xlu0 %v1342, 18
    %v1667 = vpop.permute.xlu0 %1666
    %1668 = vrot.lane.b32.xlu0 %v1344, 18
    %v1669 = vpop.permute.xlu0 %1668
    %1724 = vrot.lane.b32.xlu0 %v1589, 36
    %v1725 = vpop.permute.xlu0 %1724
    %1726 = vrot.lane.b32.xlu0 %v1590, 36
    %v1727 = vpop.permute.xlu0 %1726
    %1728 = vrot.lane.b32.xlu0 %v1591, 36
    %v1729 = vpop.permute.xlu0 %1728
    %1730 = vrot.lane.b32.xlu0 %v1592, 36
    %v1731 = vpop.permute.xlu0 %1730
    %1732 = vrot.lane.b32.xlu0 %v1593, 36
    %v1733 = vpop.permute.xlu0 %1732
    %1734 = vrot.lane.b32.xlu0 %v1594, 36
    %v1735 = vpop.permute.xlu0 %1734
    %1736 = vrot.lane.b32.xlu0 %v1595, 36
    %v1737 = vpop.permute.xlu0 %1736
    %1738 = vrot.lane.b32.xlu0 %v1596, 36
    %v1739 = vpop.permute.xlu0 %1738
    %1740 = vrot.lane.b32.xlu0 %v1597, 36
    %v1741 = vpop.permute.xlu0 %1740
    %1742 = vrot.lane.b32.xlu0 %v1598, 36
    %v1743 = vpop.permute.xlu0 %1742
    %1744 = vrot.lane.b32.xlu0 %v1599, 36
    %v1745 = vpop.permute.xlu0 %1744
    %1746 = vrot.lane.b32.xlu0 %v1600, 36
    %v1747 = vpop.permute.xlu0 %1746
    %1748 = vrot.lane.b32.xlu0 %v1601, 36
    %v1749 = vpop.permute.xlu0 %1748
    %1750 = vrot.lane.b32.xlu0 %v1602, 36
    %v1751 = vpop.permute.xlu0 %1750
    %1752 = vrot.lane.b32.xlu0 %v1603, 36
    %v1753 = vpop.permute.xlu0 %1752
    %1754 = vrot.lane.b32.xlu0 %v1604, 36
    %v1755 = vpop.permute.xlu0 %1754
    %1756 = vrot.lane.b32.xlu0 %v1605, 36
    %v1757 = vpop.permute.xlu0 %1756
    %1758 = vrot.lane.b32.xlu0 %v1606, 36
    %v1759 = vpop.permute.xlu0 %1758
    %1760 = vrot.lane.b32.xlu0 %v1607, 36
    %v1761 = vpop.permute.xlu0 %1760
    %1762 = vrot.lane.b32.xlu0 %v1608, 36
    %v1763 = vpop.permute.xlu0 %1762
    %1764 = vrot.lane.b32.xlu0 %v1609, 36
    %v1765 = vpop.permute.xlu0 %1764
    %1766 = vrot.lane.b32.xlu0 %v1610, 36
    %v1767 = vpop.permute.xlu0 %1766
    %1768 = vrot.lane.b32.xlu0 %v1611, 36
    %v1769 = vpop.permute.xlu0 %1768
    %1770 = vrot.lane.b32.xlu0 %v1612, 36
    %v1771 = vpop.permute.xlu0 %1770
    %1772 = vrot.lane.b32.xlu0 %v1613, 36
    %v1773 = vpop.permute.xlu0 %1772
    %1774 = vrot.lane.b32.xlu0 %v1614, 36
    %v1775 = vpop.permute.xlu0 %1774
    %1776 = vrot.lane.b32.xlu0 %v1615, 36
    %v1777 = vpop.permute.xlu0 %1776
    %vm1805 = vcmask 146432
    %v1806 = vsel %vm1805, %v1457, %v1617
    %v1807 = vsel %vm1805, %v1458, %v1619
    %v1808 = vsel %vm1805, %v1459, %v1621
    %v1809 = vsel %vm1805, %v1460, %v1623
    %v1810 = vsel %vm1805, %v1461, %v1625
    %v1811 = vsel %vm1805, %v1462, %v1627
    %v1812 = vsel %vm1805, %v1463, %v1629
    %v1813 = vsel %vm1805, %v1464, %v1631
    %v1814 = vsel %vm1805, %v1465, %v1633
    %v1815 = vsel %vm1805, %v1466, %v1635
    %v1816 = vsel %vm1805, %v1467, %v1637
    %v1817 = vsel %vm1805, %v1468, %v1639
    %v1818 = vsel %vm1805, %v1469, %v1641
    %v1819 = vsel %vm1805, %v1470, %v1643
    %v1820 = vsel %vm1805, %v1471, %v1645
    %v1821 = vsel %vm1805, %v1472, %v1647
    %v1822 = vsel %vm1805, %v1473, %v1649
    %v1823 = vsel %vm1805, %v1474, %v1651
    %v1824 = vsel %vm1805, %v1475, %v1653
    %v1825 = vsel %vm1805, %v1476, %v1655
    %v1826 = vsel %vm1805, %v1477, %v1657
    %v1827 = vsel %vm1805, %v1478, %v1659
    %v1828 = vsel %vm1805, %v1479, %v1661
    %v1829 = vsel %vm1805, %v1480, %v1663
    %v1830 = vsel %vm1805, %v1481, %v1665
    %v1831 = vsel %vm1805, %v1482, %v1667
    %v1832 = vsel %vm1805, %v1483, %v1669
    %vm1833 = vcmask 293888
    %v1834 = vsel %vm1833, %v1806, %v1725
    %v1835 = vsel %vm1833, %v1807, %v1727
    %v1836 = vsel %vm1833, %v1808, %v1729
    %v1837 = vsel %vm1833, %v1809, %v1731
    %v1838 = vsel %vm1833, %v1810, %v1733
    %v1839 = vsel %vm1833, %v1811, %v1735
    %v1840 = vsel %vm1833, %v1812, %v1737
    %v1841 = vsel %vm1833, %v1813, %v1739
    %v1842 = vsel %vm1833, %v1814, %v1741
    %v1843 = vsel %vm1833, %v1815, %v1743
    %v1844 = vsel %vm1833, %v1816, %v1745
    %v1845 = vsel %vm1833, %v1817, %v1747
    %v1846 = vsel %vm1833, %v1818, %v1749
    %v1847 = vsel %vm1833, %v1819, %v1751
    %v1848 = vsel %vm1833, %v1820, %v1753
    %v1849 = vsel %vm1833, %v1821, %v1755
    %v1850 = vsel %vm1833, %v1822, %v1757
    %v1851 = vsel %vm1833, %v1823, %v1759
    %v1852 = vsel %vm1833, %v1824, %v1761
    %v1853 = vsel %vm1833, %v1825, %v1763
    %v1854 = vsel %vm1833, %v1826, %v1765
    %v1855 = vsel %vm1833, %v1827, %v1767
    %v1856 = vsel %vm1833, %v1828, %v1769
    %v1857 = vsel %vm1833, %v1829, %v1771
    %v1858 = vsel %vm1833, %v1830, %v1773
    %v1859 = vsel %vm1833, %v1831, %v1775
    %v1860 = vsel %vm1833, %v1832, %v1777
    %v1861 = vld [vmem:[%s4] sm:$0xff]
    %v1862 = vld [vmem:[%s4 + $0x8] sm:$0xff]
    %v1863 = vld [vmem:[%s4 + $0x10] sm:$0xff]
    %v1864 = vld [vmem:[%s4 + $0x18] sm:$0xff]
    %v1865 = vld [vmem:[%s4 + $0x20] sm:$0xff]
    %v1866 = vld [vmem:[%s4 + $0x28] sm:$0xff]
    %v1867 = vld [vmem:[%s4 + $0x30] sm:$0xff]
    %v1868 = vld [vmem:[%s4 + $0x38] sm:$0xff]
    %v1869 = vld [vmem:[%s4 + $0x40] sm:$0xff]
    %v1870 = vld [vmem:[%s4 + $0x48] sm:$0xff]
    %v1871 = vld [vmem:[%s4 + $0x50] sm:$0xff]
    %v1872 = vld [vmem:[%s4 + $0x58] sm:$0xff]
    %v1873 = vld [vmem:[%s4 + $0x60] sm:$0xff]
    %v1874 = vld [vmem:[%s4 + $0x68] sm:$0xff]
    %v1875 = vld [vmem:[%s4 + $0x70] sm:$0xff]
    %v1876 = vld [vmem:[%s4 + $0x78] sm:$0xff]
    %v1877 = vld [vmem:[%s4 + $0x80] sm:$0xff]
    %v1878 = vld [vmem:[%s4 + $0x88] sm:$0xff]
    %v1879 = vld [vmem:[%s4 + $0x90] sm:$0xff]
    %v1880 = vld [vmem:[%s4 + $0x98] sm:$0xff]
    %v1881 = vld [vmem:[%s4 + $0xa0] sm:$0xff]
    %v1882 = vld [vmem:[%s4 + $0xa8] sm:$0xff]
    %v1883 = vld [vmem:[%s4 + $0xb0] sm:$0xff]
    %v1884 = vld [vmem:[%s4 + $0xb8] sm:$0xff]
    %v1885 = vld [vmem:[%s4 + $0xc0] sm:$0xff]
    %v1886 = vld [vmem:[%s4 + $0xc8] sm:$0xff]
    %v1887 = vld [vmem:[%s4 + $0xd0] sm:$0xff]
    %v1888 = vld [vmem:[%s4 + $0xd8] sm:$0xff]
    %v1889 = vld [vmem:[%s4 + $0xe0] sm:$0xff]
    %v1890 = vld [vmem:[%s4 + $0xe8] sm:$0xff]
    %v1891 = vld [vmem:[%s4 + $0xf0] sm:$0x3f]
    %v1892 = vld [vmem:[%s4 + $0xf8] sm:$0x3f]
    %v1893 = vld [vmem:[%s4 + $0x100] sm:$0x3f]
    %v1894 = vld [vmem:[%s4 + $0x108] sm:$0x3f]
    %v1895 = vld [vmem:[%s4 + $0x110] sm:$0x3f]
    %v1896 = vld [vmem:[%s5] sm:$0x1f]
    %v1898 = vlaneseq
    %v1899 = vshrl.u32 %v1898, 7
    %v1900 = vsub.s32 0, %v1899
    %v1901 = vrot.slane %v1896, %v1900
    %v1902 = vlaneseq
    %v1903 = vshrl.u32 %v1902, 7
    %v1904 = vsub.s32 1, %v1903
    %v1905 = vrot.slane %v1896, %v1904
    %v1906 = vlaneseq
    %v1907 = vshrl.u32 %v1906, 7
    %v1908 = vsub.s32 2, %v1907
    %v1909 = vrot.slane %v1896, %v1908
    %v1910 = vlaneseq
    %v1911 = vshrl.u32 %v1910, 7
    %v1912 = vsub.s32 3, %v1911
    %v1913 = vrot.slane %v1896, %v1912
    %v1914 = vlaneseq
    %v1915 = vshrl.u32 %v1914, 7
    %v1916 = vsub.s32 4, %v1915
    %v1917 = vrot.slane %v1896, %v1916
    %vm1923 = vcmask 441344
    %v1925 = vsel %vm1923, %v1834, 0
    %v1928 = vsel %vm1923, %v1835, 0
    %v1931 = vsel %vm1923, %v1836, 0
    %v1934 = vsel %vm1923, %v1837, 0
    %v1937 = vsel %vm1923, %v1838, 0
    %v1940 = vsel %vm1923, %v1839, 0
    %v1943 = vsel %vm1923, %v1840, 0
    %v1946 = vsel %vm1923, %v1841, 0
    %v1949 = vsel %vm1923, %v1842, 0
    %v1952 = vsel %vm1923, %v1843, 0
    %v1955 = vsel %vm1923, %v1844, 0
    %v1958 = vsel %vm1923, %v1845, 0
    %v1961 = vsel %vm1923, %v1846, 0
    %v1964 = vsel %vm1923, %v1847, 0
    %v1967 = vsel %vm1923, %v1848, 0
    %v1970 = vsel %vm1923, %v1849, 0
    %v1973 = vsel %vm1923, %v1850, 0
    %v1976 = vsel %vm1923, %v1851, 0
    %v1979 = vsel %vm1923, %v1852, 0
    %v1982 = vsel %vm1923, %v1853, 0
    %v1985 = vsel %vm1923, %v1854, 0
    %v1988 = vsel %vm1923, %v1855, 0
    %v1991 = vsel %vm1923, %v1856, 0
    %v1994 = vsel %vm1923, %v1857, 0
    %v1997 = vsel %vm1923, %v1858, 0
    %v2000 = vsel %vm1923, %v1859, 0
    %v2003 = vsel %vm1923, %v1860, 0
    %vm2005 = vcmask 1045504
    %v2007 = vsel %vm2005, %v1891, 0
    %v2010 = vsel %vm2005, %v1892, 0
    %v2013 = vsel %vm2005, %v1893, 0
    %v2016 = vsel %vm2005, %v1894, 0
    %v2019 = vsel %vm2005, %v1895, 0
    %2021 = vmatprep.subr.mxu0 %v1862
    %2022 = vmatpush1.msra.mxu0 %v1861
    %2023 = vmatprep.subr.mxu0 %v1867
    %2024 = vmatpush1.msra.mxu0 %v1866
    %2025 = vmatprep.subr.mxu0 %v1872
    %2026 = vmatpush1.msra.mxu0 %v1871
    %2027 = vmatprep.subr.mxu0 %v1877
    %2028 = vmatpush1.msra.mxu0 %v1876
    %2029 = vmatprep.subr.mxu0 %v1882
    %2030 = vmatpush1.msra.mxu0 %v1881
    %2031 = vmatprep.subr.mxu0 %v1887
    %2032 = vmatpush1.msra.mxu0 %v1886
    %2033 = vmatprep.subr.mxu0 %v2010
    %2034 = vmatpush1.msra.mxu0 %v2007
    %2035 = vmatprep.subr.mxu0 0.0
    %2036 = vmatpush1.msra.mxu0 0.0
    %2037 = vmatprep.subr.mxu0 0.0
    %2038 = vmatpush1.msra.mxu0 0.0
    %2039 = vmatprep.subr.mxu0 0.0
    %2040 = vmatpush1.msra.mxu0 0.0
    %2041 = vmatprep.subr.mxu0 0.0
    %2042 = vmatpush1.msra.mxu0 0.0
    %2043 = vmatprep.subr.mxu0 0.0
    %2044 = vmatpush1.msra.mxu0 0.0
    %2045 = vmatprep.subr.mxu0 0.0
    %2046 = vmatpush1.msra.mxu0 0.0
    %2047 = vmatprep.subr.mxu0 0.0
    %2048 = vmatpush1.msra.mxu0 0.0
    %2049 = vmatprep.subr.mxu0 0.0
    %2050 = vmatpush1.msra.mxu0 0.0
    %2051 = vmatprep.subr.mxu0 0.0
    %2052 = vmatpush1.msra.mxu0 0.0
    %2053 = vmatprep.subr.mxu0 0.0
    %2054 = vmatpush1.msra.mxu0 0.0
    %2055 = vmatprep.subr.mxu0 0.0
    %2056 = vmatpush1.msra.mxu0 0.0
    %2057 = vmatprep.subr.mxu0 0.0
    %2058 = vmatpush1.msra.mxu0 0.0
    %2059 = vmatprep.subr.mxu0 0.0
    %2060 = vmatpush1.msra.mxu0 0.0
    %2061 = vmatprep.subr.mxu0 0.0
    %2062 = vmatpush1.msra.mxu0 0.0
    %2063 = vmatprep.subr.mxu0 0.0
    %2064 = vmatpush1.msra.mxu0 0.0
    %2065 = vmatprep.subr.mxu0 0.0
    %2066 = vmatpush1.msra.mxu0 0.0
    %2067 = vmatprep.subr.mxu0 0.0
    %2068 = vmatpush1.msra.mxu0 0.0
    %2069 = vmatprep.subr.mxu0 0.0
    %2070 = vmatpush1.msra.mxu0 0.0
    %2071 = vmatprep.subr.mxu0 0.0
    %2072 = vmatpush1.msra.mxu0 0.0
    %2073 = vmatprep.subr.mxu0 0.0
    %2074 = vmatpush1.msra.mxu0 0.0
    %2075 = vmatprep.subr.mxu0 0.0
    %2076 = vmatpush1.msra.mxu0 0.0
    %2077 = vmatprep.subr.mxu0 0.0
    %2078 = vmatpush1.msra.mxu0 0.0
    %2079 = vmatprep.subr.mxu0 0.0
    %2080 = vmatpush1.msra.mxu0 0.0
    %2081 = vmatprep.subr.mxu0 0.0
    %2082 = vmatpush1.msra.mxu0 0.0
    %2083 = vmatprep.subr.mxu0 0.0
    %2084 = vmatpush1.msra.mxu0 0.0
    %2085 = vmatprep.mubr.f32.mxu0 0.0
    %2086 = vmatmul.mubr.f32.gmra.mrb[0].mxu0 %v1925
    %v2087 = vpop.f32.mrb[0].mxu0
    %v2088 = vadd.f32 %v1901, %v2087
    %v2089 = vpop.f32.mrb[0].mxu0
    %v2090 = vadd.f32 %v1905, %v2089
    %2091 = vmatprep.mubr.f32.mxu0 0.0
    %2092 = vmatmul.mubr.f32.gmra.mrb[0].mxu0 %v1928
    %v2093 = vpop.f32.mrb[0].mxu0
    %v2094 = vadd.f32 %v1901, %v2093
    %v2095 = vpop.f32.mrb[0].mxu0
    %v2096 = vadd.f32 %v1905, %v2095
    %2097 = vmatprep.mubr.f32.mxu0 0.0
    %2098 = vmatmul.mubr.f32.gmra.mrb[0].mxu0 %v1931
    %v2099 = vpop.f32.mrb[0].mxu0
    %v2100 = vadd.f32 %v1901, %v2099
    %v2101 = vpop.f32.mrb[0].mxu0
    %v2102 = vadd.f32 %v1905, %v2101
    %2103 = vmatprep.mubr.f32.mxu0 0.0
    %2104 = vmatmul.mubr.f32.gmra.mrb[0].mxu0 %v1934
    %v2105 = vpop.f32.mrb[0].mxu0
    %v2106 = vadd.f32 %v1901, %v2105
    %v2107 = vpop.f32.mrb[0].mxu0
    %v2108 = vadd.f32 %v1905, %v2107
    %2109 = vmatprep.mubr.f32.mxu0 0.0
    %2110 = vmatmul.mubr.f32.gmra.mrb[0].mxu0 %v1937
    %v2111 = vpop.f32.mrb[0].mxu0
    %v2112 = vadd.f32 %v1901, %v2111
    %v2113 = vpop.f32.mrb[0].mxu0
    %v2114 = vadd.f32 %v1905, %v2113
    %2115 = vmatprep.mubr.f32.mxu0 0.0
    %2116 = vmatmul.mubr.f32.gmra.mrb[0].mxu0 %v1940
    %v2117 = vpop.f32.mrb[0].mxu0
    %v2118 = vadd.f32 %v1901, %v2117
    %v2119 = vpop.f32.mrb[0].mxu0
    %v2120 = vadd.f32 %v1905, %v2119
    %2121 = vmatprep.mubr.f32.mxu0 0.0
    %2122 = vmatmul.mubr.f32.gmra.mrb[0].mxu0 %v1943
    %v2123 = vpop.f32.mrb[0].mxu0
    %v2124 = vadd.f32 %v1901, %v2123
    %v2125 = vpop.f32.mrb[0].mxu0
    %v2126 = vadd.f32 %v1905, %v2125
    %2127 = vmatprep.mubr.f32.mxu0 0.0
    %2128 = vmatmul.mubr.f32.gmra.mrb[0].mxu0 %v1946
    %v2129 = vpop.f32.mrb[0].mxu0
    %v2130 = vadd.f32 %v1901, %v2129
    %v2131 = vpop.f32.mrb[0].mxu0
    %v2132 = vadd.f32 %v1905, %v2131
    %2133 = vmatprep.mubr.f32.mxu0 0.0
    %2134 = vmatmul.mubr.f32.gmra.mrb[0].mxu0 %v1949
    %v2135 = vpop.f32.mrb[0].mxu0
    %v2136 = vadd.f32 %v1901, %v2135
    %v2137 = vpop.f32.mrb[0].mxu0
    %v2138 = vadd.f32 %v1905, %v2137
    %2139 = vmatprep.mubr.f32.mxu0 0.0
    %2140 = vmatmul.mubr.f32.gmra.mrb[0].mxu0 %v1952
    %v2141 = vpop.f32.mrb[0].mxu0
    %v2142 = vadd.f32 %v1901, %v2141
    %v2143 = vpop.f32.mrb[0].mxu0
    %v2144 = vadd.f32 %v1905, %v2143
    %2145 = vmatprep.mubr.f32.mxu0 0.0
    %2146 = vmatmul.mubr.f32.gmra.mrb[0].mxu0 %v1955
    %v2147 = vpop.f32.mrb[0].mxu0
    %v2148 = vadd.f32 %v1901, %v2147
    %v2149 = vpop.f32.mrb[0].mxu0
    %v2150 = vadd.f32 %v1905, %v2149
    %2151 = vmatprep.mubr.f32.mxu0 0.0
    %2152 = vmatmul.mubr.f32.gmra.mrb[0].mxu0 %v1958
    %v2153 = vpop.f32.mrb[0].mxu0
    %v2154 = vadd.f32 %v1901, %v2153
    %v2155 = vpop.f32.mrb[0].mxu0
    %v2156 = vadd.f32 %v1905, %v2155
    %2157 = vmatprep.mubr.f32.mxu0 0.0
    %2158 = vmatmul.mubr.f32.gmra.mrb[0].mxu0 %v1961
    %v2159 = vpop.f32.mrb[0].mxu0
    %v2160 = vadd.f32 %v1901, %v2159
    %v2161 = vpop.f32.mrb[0].mxu0
    %v2162 = vadd.f32 %v1905, %v2161
    %2163 = vmatprep.mubr.f32.mxu0 0.0
    %2164 = vmatmul.mubr.f32.gmra.mrb[0].mxu0 %v1964
    %v2165 = vpop.f32.mrb[0].mxu0
    %v2166 = vadd.f32 %v1901, %v2165
    %v2167 = vpop.f32.mrb[0].mxu0
    %v2168 = vadd.f32 %v1905, %v2167
    %2169 = vmatprep.mubr.f32.mxu0 0.0
    %2170 = vmatmul.mubr.f32.gmra.mrb[0].mxu0 %v1967
    %v2171 = vpop.f32.mrb[0].mxu0
    %v2172 = vadd.f32 %v1901, %v2171
    %v2173 = vpop.f32.mrb[0].mxu0
    %v2174 = vadd.f32 %v1905, %v2173
    %2175 = vmatprep.mubr.f32.mxu0 0.0
    %2176 = vmatmul.mubr.f32.gmra.mrb[0].mxu0 %v1970
    %v2177 = vpop.f32.mrb[0].mxu0
    %v2178 = vadd.f32 %v1901, %v2177
    %v2179 = vpop.f32.mrb[0].mxu0
    %v2180 = vadd.f32 %v1905, %v2179
    %2181 = vmatprep.mubr.f32.mxu0 0.0
    %2182 = vmatmul.mubr.f32.gmra.mrb[0].mxu0 %v1973
    %v2183 = vpop.f32.mrb[0].mxu0
    %v2184 = vadd.f32 %v1901, %v2183
    %v2185 = vpop.f32.mrb[0].mxu0
    %v2186 = vadd.f32 %v1905, %v2185
    %2187 = vmatprep.mubr.f32.mxu0 0.0
    %2188 = vmatmul.mubr.f32.gmra.mrb[0].mxu0 %v1976
    %v2189 = vpop.f32.mrb[0].mxu0
    %v2190 = vadd.f32 %v1901, %v2189
    %v2191 = vpop.f32.mrb[0].mxu0
    %v2192 = vadd.f32 %v1905, %v2191
    %2193 = vmatprep.mubr.f32.mxu0 0.0
    %2194 = vmatmul.mubr.f32.gmra.mrb[0].mxu0 %v1979
    %v2195 = vpop.f32.mrb[0].mxu0
    %v2196 = vadd.f32 %v1901, %v2195
    %v2197 = vpop.f32.mrb[0].mxu0
    %v2198 = vadd.f32 %v1905, %v2197
    %2199 = vmatprep.mubr.f32.mxu0 0.0
    %2200 = vmatmul.mubr.f32.gmra.mrb[0].mxu0 %v1982
    %v2201 = vpop.f32.mrb[0].mxu0
    %v2202 = vadd.f32 %v1901, %v2201
    %v2203 = vpop.f32.mrb[0].mxu0
    %v2204 = vadd.f32 %v1905, %v2203
    %2205 = vmatprep.mubr.f32.mxu0 0.0
    %2206 = vmatmul.mubr.f32.gmra.mrb[0].mxu0 %v1985
    %v2207 = vpop.f32.mrb[0].mxu0
    %v2208 = vadd.f32 %v1901, %v2207
    %v2209 = vpop.f32.mrb[0].mxu0
    %v2210 = vadd.f32 %v1905, %v2209
    %2211 = vmatprep.mubr.f32.mxu0 0.0
    %2212 = vmatmul.mubr.f32.gmra.mrb[0].mxu0 %v1988
    %v2213 = vpop.f32.mrb[0].mxu0
    %v2214 = vadd.f32 %v1901, %v2213
    %v2215 = vpop.f32.mrb[0].mxu0
    %v2216 = vadd.f32 %v1905, %v2215
    %2217 = vmatprep.mubr.f32.mxu0 0.0
    %2218 = vmatmul.mubr.f32.gmra.mrb[0].mxu0 %v1991
    %v2219 = vpop.f32.mrb[0].mxu0
    %v2220 = vadd.f32 %v1901, %v2219
    %v2221 = vpop.f32.mrb[0].mxu0
    %v2222 = vadd.f32 %v1905, %v2221
    %2223 = vmatprep.mubr.f32.mxu0 0.0
    %2224 = vmatmul.mubr.f32.gmra.mrb[0].mxu0 %v1994
    %v2225 = vpop.f32.mrb[0].mxu0
    %v2226 = vadd.f32 %v1901, %v2225
    %v2227 = vpop.f32.mrb[0].mxu0
    %v2228 = vadd.f32 %v1905, %v2227
    %2229 = vmatprep.mubr.f32.mxu0 0.0
    %2230 = vmatmul.mubr.f32.gmra.mrb[0].mxu0 %v1997
    %v2231 = vpop.f32.mrb[0].mxu0
    %v2232 = vadd.f32 %v1901, %v2231
    %v2233 = vpop.f32.mrb[0].mxu0
    %v2234 = vadd.f32 %v1905, %v2233
    %2235 = vmatprep.mubr.f32.mxu0 0.0
    %2236 = vmatmul.mubr.f32.gmra.mrb[0].mxu0 %v2000
    %v2237 = vpop.f32.mrb[0].mxu0
    %v2238 = vadd.f32 %v1901, %v2237
    %v2239 = vpop.f32.mrb[0].mxu0
    %v2240 = vadd.f32 %v1905, %v2239
    %2241 = vmatprep.mubr.f32.mxu0 0.0
    %2242 = vmatmul.mubr.f32.gmra.mrb[0].mxu0 %v2003
    %v2243 = vpop.f32.mrb[0].mxu0
    %v2244 = vadd.f32 %v1901, %v2243
    %v2245 = vpop.f32.mrb[0].mxu0
    %v2246 = vadd.f32 %v1905, %v2245
    %2247 = vdwg.mxu0
    %2248 = vmatprep.subr.mxu0 %v1864
    %2249 = vmatpush1.msra.mxu0 %v1863
    %2250 = vmatprep.subr.mxu0 %v1869
    %2251 = vmatpush1.msra.mxu0 %v1868
    %2252 = vmatprep.subr.mxu0 %v1874
    %2253 = vmatpush1.msra.mxu0 %v1873
    %2254 = vmatprep.subr.mxu0 %v1879
    %2255 = vmatpush1.msra.mxu0 %v1878
    %2256 = vmatprep.subr.mxu0 %v1884
    %2257 = vmatpush1.msra.mxu0 %v1883
    %2258 = vmatprep.subr.mxu0 %v1889
    %2259 = vmatpush1.msra.mxu0 %v1888
    %2260 = vmatprep.subr.mxu0 %v2016
    %2261 = vmatpush1.msra.mxu0 %v2013
    %2262 = vmatprep.subr.mxu0 0.0
    %2263 = vmatpush1.msra.mxu0 0.0
    %2264 = vmatprep.subr.mxu0 0.0
    %2265 = vmatpush1.msra.mxu0 0.0
    %2266 = vmatprep.subr.mxu0 0.0
    %2267 = vmatpush1.msra.mxu0 0.0
    %2268 = vmatprep.subr.mxu0 0.0
    %2269 = vmatpush1.msra.mxu0 0.0
    %2270 = vmatprep.subr.mxu0 0.0
    %2271 = vmatpush1.msra.mxu0 0.0
    %2272 = vmatprep.subr.mxu0 0.0
    %2273 = vmatpush1.msra.mxu0 0.0
    %2274 = vmatprep.subr.mxu0 0.0
    %2275 = vmatpush1.msra.mxu0 0.0
    %2276 = vmatprep.subr.mxu0 0.0
    %2277 = vmatpush1.msra.mxu0 0.0
    %2278 = vmatprep.subr.mxu0 0.0
    %2279 = vmatpush1.msra.mxu0 0.0
    %2280 = vmatprep.subr.mxu0 0.0
    %2281 = vmatpush1.msra.mxu0 0.0
    %2282 = vmatprep.subr.mxu0 0.0
    %2283 = vmatpush1.msra.mxu0 0.0
    %2284 = vmatprep.subr.mxu0 0.0
    %2285 = vmatpush1.msra.mxu0 0.0
    %2286 = vmatprep.subr.mxu0 0.0
    %2287 = vmatpush1.msra.mxu0 0.0
    %2288 = vmatprep.subr.mxu0 0.0
    %2289 = vmatpush1.msra.mxu0 0.0
    %2290 = vmatprep.subr.mxu0 0.0
    %2291 = vmatpush1.msra.mxu0 0.0
    %2292 = vmatprep.subr.mxu0 0.0
    %2293 = vmatpush1.msra.mxu0 0.0
    %2294 = vmatprep.subr.mxu0 0.0
    %2295 = vmatpush1.msra.mxu0 0.0
    %2296 = vmatprep.subr.mxu0 0.0
    %2297 = vmatpush1.msra.mxu0 0.0
    %2298 = vmatprep.subr.mxu0 0.0
    %2299 = vmatpush1.msra.mxu0 0.0
    %2300 = vmatprep.subr.mxu0 0.0
    %2301 = vmatpush1.msra.mxu0 0.0
    %2302 = vmatprep.subr.mxu0 0.0
    %2303 = vmatpush1.msra.mxu0 0.0
    %2304 = vmatprep.subr.mxu0 0.0
    %2305 = vmatpush1.msra.mxu0 0.0
    %2306 = vmatprep.subr.mxu0 0.0
    %2307 = vmatpush1.msra.mxu0 0.0
    %2308 = vmatprep.subr.mxu0 0.0
    %2309 = vmatpush1.msra.mxu0 0.0
    %2310 = vmatprep.subr.mxu0 0.0
    %2311 = vmatpush1.msra.mxu0 0.0
    %2312 = vmatprep.mubr.f32.mxu0 0.0
    %2313 = vmatmul.mubr.f32.gmra.mrb[0].mxu0 %v1925
    %v2314 = vpop.f32.mrb[0].mxu0
    %v2315 = vadd.f32 %v1909, %v2314
    %v2316 = vpop.f32.mrb[0].mxu0
    %v2317 = vadd.f32 %v1913, %v2316
    %2318 = vmatprep.mubr.f32.mxu0 0.0
    %2319 = vmatmul.mubr.f32.gmra.mrb[0].mxu0 %v1928
    %v2320 = vpop.f32.mrb[0].mxu0
    %v2321 = vadd.f32 %v1909, %v2320
    %v2322 = vpop.f32.mrb[0].mxu0
    %v2323 = vadd.f32 %v1913, %v2322
    %2324 = vmatprep.mubr.f32.mxu0 0.0
    %2325 = vmatmul.mubr.f32.gmra.mrb[0].mxu0 %v1931
    %v2326 = vpop.f32.mrb[0].mxu0
    %v2327 = vadd.f32 %v1909, %v2326
    %v2328 = vpop.f32.mrb[0].mxu0
    %v2329 = vadd.f32 %v1913, %v2328
    %2330 = vmatprep.mubr.f32.mxu0 0.0
    %2331 = vmatmul.mubr.f32.gmra.mrb[0].mxu0 %v1934
    %v2332 = vpop.f32.mrb[0].mxu0
    %v2333 = vadd.f32 %v1909, %v2332
    %v2334 = vpop.f32.mrb[0].mxu0
    %v2335 = vadd.f32 %v1913, %v2334
    %2336 = vmatprep.mubr.f32.mxu0 0.0
    %2337 = vmatmul.mubr.f32.gmra.mrb[0].mxu0 %v1937
    %v2338 = vpop.f32.mrb[0].mxu0
    %v2339 = vadd.f32 %v1909, %v2338
    %v2340 = vpop.f32.mrb[0].mxu0
    %v2341 = vadd.f32 %v1913, %v2340
    %2342 = vmatprep.mubr.f32.mxu0 0.0
    %2343 = vmatmul.mubr.f32.gmra.mrb[0].mxu0 %v1940
    %v2344 = vpop.f32.mrb[0].mxu0
    %v2345 = vadd.f32 %v1909, %v2344
    %v2346 = vpop.f32.mrb[0].mxu0
    %v2347 = vadd.f32 %v1913, %v2346
    %2348 = vmatprep.mubr.f32.mxu0 0.0
    %2349 = vmatmul.mubr.f32.gmra.mrb[0].mxu0 %v1943
    %v2350 = vpop.f32.mrb[0].mxu0
    %v2351 = vadd.f32 %v1909, %v2350
    %v2352 = vpop.f32.mrb[0].mxu0
    %v2353 = vadd.f32 %v1913, %v2352
    %2354 = vmatprep.mubr.f32.mxu0 0.0
    %2355 = vmatmul.mubr.f32.gmra.mrb[0].mxu0 %v1946
    %v2356 = vpop.f32.mrb[0].mxu0
    %v2357 = vadd.f32 %v1909, %v2356
    %v2358 = vpop.f32.mrb[0].mxu0
    %v2359 = vadd.f32 %v1913, %v2358
    %2360 = vmatprep.mubr.f32.mxu0 0.0
    %2361 = vmatmul.mubr.f32.gmra.mrb[0].mxu0 %v1949
    %v2362 = vpop.f32.mrb[0].mxu0
    %v2363 = vadd.f32 %v1909, %v2362
    %v2364 = vpop.f32.mrb[0].mxu0
    %v2365 = vadd.f32 %v1913, %v2364
    %2366 = vmatprep.mubr.f32.mxu0 0.0
    %2367 = vmatmul.mubr.f32.gmra.mrb[0].mxu0 %v1952
    %v2368 = vpop.f32.mrb[0].mxu0
    %v2369 = vadd.f32 %v1909, %v2368
    %v2370 = vpop.f32.mrb[0].mxu0
    %v2371 = vadd.f32 %v1913, %v2370
    %2372 = vmatprep.mubr.f32.mxu0 0.0
    %2373 = vmatmul.mubr.f32.gmra.mrb[0].mxu0 %v1955
    %v2374 = vpop.f32.mrb[0].mxu0
    %v2375 = vadd.f32 %v1909, %v2374
    %v2376 = vpop.f32.mrb[0].mxu0
    %v2377 = vadd.f32 %v1913, %v2376
    %2378 = vmatprep.mubr.f32.mxu0 0.0
    %2379 = vmatmul.mubr.f32.gmra.mrb[0].mxu0 %v1958
    %v2380 = vpop.f32.mrb[0].mxu0
    %v2381 = vadd.f32 %v1909, %v2380
    %v2382 = vpop.f32.mrb[0].mxu0
    %v2383 = vadd.f32 %v1913, %v2382
    %2384 = vmatprep.mubr.f32.mxu0 0.0
    %2385 = vmatmul.mubr.f32.gmra.mrb[0].mxu0 %v1961
    %v2386 = vpop.f32.mrb[0].mxu0
    %v2387 = vadd.f32 %v1909, %v2386
    %v2388 = vpop.f32.mrb[0].mxu0
    %v2389 = vadd.f32 %v1913, %v2388
    %2390 = vmatprep.mubr.f32.mxu0 0.0
    %2391 = vmatmul.mubr.f32.gmra.mrb[0].mxu0 %v1964
    %v2392 = vpop.f32.mrb[0].mxu0
    %v2393 = vadd.f32 %v1909, %v2392
    %v2394 = vpop.f32.mrb[0].mxu0
    %v2395 = vadd.f32 %v1913, %v2394
    %2396 = vmatprep.mubr.f32.mxu0 0.0
    %2397 = vmatmul.mubr.f32.gmra.mrb[0].mxu0 %v1967
    %v2398 = vpop.f32.mrb[0].mxu0
    %v2399 = vadd.f32 %v1909, %v2398
    %v2400 = vpop.f32.mrb[0].mxu0
    %v2401 = vadd.f32 %v1913, %v2400
    %2402 = vmatprep.mubr.f32.mxu0 0.0
    %2403 = vmatmul.mubr.f32.gmra.mrb[0].mxu0 %v1970
    %v2404 = vpop.f32.mrb[0].mxu0
    %v2405 = vadd.f32 %v1909, %v2404
    %v2406 = vpop.f32.mrb[0].mxu0
    %v2407 = vadd.f32 %v1913, %v2406
    %2408 = vmatprep.mubr.f32.mxu0 0.0
    %2409 = vmatmul.mubr.f32.gmra.mrb[0].mxu0 %v1973
    %v2410 = vpop.f32.mrb[0].mxu0
    %v2411 = vadd.f32 %v1909, %v2410
    %v2412 = vpop.f32.mrb[0].mxu0
    %v2413 = vadd.f32 %v1913, %v2412
    %2414 = vmatprep.mubr.f32.mxu0 0.0
    %2415 = vmatmul.mubr.f32.gmra.mrb[0].mxu0 %v1976
    %v2416 = vpop.f32.mrb[0].mxu0
    %v2417 = vadd.f32 %v1909, %v2416
    %v2418 = vpop.f32.mrb[0].mxu0
    %v2419 = vadd.f32 %v1913, %v2418
    %2420 = vmatprep.mubr.f32.mxu0 0.0
    %2421 = vmatmul.mubr.f32.gmra.mrb[0].mxu0 %v1979
    %v2422 = vpop.f32.mrb[0].mxu0
    %v2423 = vadd.f32 %v1909, %v2422
    %v2424 = vpop.f32.mrb[0].mxu0
    %v2425 = vadd.f32 %v1913, %v2424
    %2426 = vmatprep.mubr.f32.mxu0 0.0
    %2427 = vmatmul.mubr.f32.gmra.mrb[0].mxu0 %v1982
    %v2428 = vpop.f32.mrb[0].mxu0
    %v2429 = vadd.f32 %v1909, %v2428
    %v2430 = vpop.f32.mrb[0].mxu0
    %v2431 = vadd.f32 %v1913, %v2430
    %2432 = vmatprep.mubr.f32.mxu0 0.0
    %2433 = vmatmul.mubr.f32.gmra.mrb[0].mxu0 %v1985
    %v2434 = vpop.f32.mrb[0].mxu0
    %v2435 = vadd.f32 %v1909, %v2434
    %v2436 = vpop.f32.mrb[0].mxu0
    %v2437 = vadd.f32 %v1913, %v2436
    %2438 = vmatprep.mubr.f32.mxu0 0.0
    %2439 = vmatmul.mubr.f32.gmra.mrb[0].mxu0 %v1988
    %v2440 = vpop.f32.mrb[0].mxu0
    %v2441 = vadd.f32 %v1909, %v2440
    %v2442 = vpop.f32.mrb[0].mxu0
    %v2443 = vadd.f32 %v1913, %v2442
    %2444 = vmatprep.mubr.f32.mxu0 0.0
    %2445 = vmatmul.mubr.f32.gmra.mrb[0].mxu0 %v1991
    %v2446 = vpop.f32.mrb[0].mxu0
    %v2447 = vadd.f32 %v1909, %v2446
    %v2448 = vpop.f32.mrb[0].mxu0
    %v2449 = vadd.f32 %v1913, %v2448
    %2450 = vmatprep.mubr.f32.mxu0 0.0
    %2451 = vmatmul.mubr.f32.gmra.mrb[0].mxu0 %v1994
    %v2452 = vpop.f32.mrb[0].mxu0
    %v2453 = vadd.f32 %v1909, %v2452
    %v2454 = vpop.f32.mrb[0].mxu0
    %v2455 = vadd.f32 %v1913, %v2454
    %2456 = vmatprep.mubr.f32.mxu0 0.0
    %2457 = vmatmul.mubr.f32.gmra.mrb[0].mxu0 %v1997
    %v2458 = vpop.f32.mrb[0].mxu0
    %v2459 = vadd.f32 %v1909, %v2458
    %v2460 = vpop.f32.mrb[0].mxu0
    %v2461 = vadd.f32 %v1913, %v2460
    %2462 = vmatprep.mubr.f32.mxu0 0.0
    %2463 = vmatmul.mubr.f32.gmra.mrb[0].mxu0 %v2000
    %v2464 = vpop.f32.mrb[0].mxu0
    %v2465 = vadd.f32 %v1909, %v2464
    %v2466 = vpop.f32.mrb[0].mxu0
    %v2467 = vadd.f32 %v1913, %v2466
    %2468 = vmatprep.mubr.f32.mxu0 0.0
    %2469 = vmatmul.mubr.f32.gmra.mrb[0].mxu0 %v2003
    %v2470 = vpop.f32.mrb[0].mxu0
    %v2471 = vadd.f32 %v1909, %v2470
    %v2472 = vpop.f32.mrb[0].mxu0
    %v2473 = vadd.f32 %v1913, %v2472
    %2474 = vdwg.mxu0
    %2475 = vmatprep.subr.mxu0 0.0
    %2476 = vmatpush1.msra.mxu0 %v1865
    %2477 = vmatprep.subr.mxu0 0.0
    %2478 = vmatpush1.msra.mxu0 %v1870
    %2479 = vmatprep.subr.mxu0 0.0
    %2480 = vmatpush1.msra.mxu0 %v1875
    %2481 = vmatprep.subr.mxu0 0.0
    %2482 = vmatpush1.msra.mxu0 %v1880
    %2483 = vmatprep.subr.mxu0 0.0
    %2484 = vmatpush1.msra.mxu0 %v1885
    %2485 = vmatprep.subr.mxu0 0.0
    %2486 = vmatpush1.msra.mxu0 %v1890
    %2487 = vmatprep.subr.mxu0 0.0
    %2488 = vmatpush1.msra.mxu0 %v2019
    %2489 = vmatprep.subr.mxu0 0.0
    %2490 = vmatpush1.msra.mxu0 0.0
    %2491 = vmatprep.subr.mxu0 0.0
    %2492 = vmatpush1.msra.mxu0 0.0
    %2493 = vmatprep.subr.mxu0 0.0
    %2494 = vmatpush1.msra.mxu0 0.0
    %2495 = vmatprep.subr.mxu0 0.0
    %2496 = vmatpush1.msra.mxu0 0.0
    %2497 = vmatprep.subr.mxu0 0.0
    %2498 = vmatpush1.msra.mxu0 0.0
    %2499 = vmatprep.subr.mxu0 0.0
    %2500 = vmatpush1.msra.mxu0 0.0
    %2501 = vmatprep.subr.mxu0 0.0
    %2502 = vmatpush1.msra.mxu0 0.0
    %2503 = vmatprep.subr.mxu0 0.0
    %2504 = vmatpush1.msra.mxu0 0.0
    %2505 = vmatprep.subr.mxu0 0.0
    %2506 = vmatpush1.msra.mxu0 0.0
    %2507 = vmatprep.subr.mxu0 0.0
    %2508 = vmatpush1.msra.mxu0 0.0
    %2509 = vmatprep.subr.mxu0 0.0
    %2510 = vmatpush1.msra.mxu0 0.0
    %2511 = vmatprep.subr.mxu0 0.0
    %2512 = vmatpush1.msra.mxu0 0.0
    %2513 = vmatprep.subr.mxu0 0.0
    %2514 = vmatpush1.msra.mxu0 0.0
    %2515 = vmatprep.subr.mxu0 0.0
    %2516 = vmatpush1.msra.mxu0 0.0
    %2517 = vmatprep.subr.mxu0 0.0
    %2518 = vmatpush1.msra.mxu0 0.0
    %2519 = vmatprep.subr.mxu0 0.0
    %2520 = vmatpush1.msra.mxu0 0.0
    %2521 = vmatprep.subr.mxu0 0.0
    %2522 = vmatpush1.msra.mxu0 0.0
    %2523 = vmatprep.subr.mxu0 0.0
    %2524 = vmatpush1.msra.mxu0 0.0
    %2525 = vmatprep.subr.mxu0 0.0
    %2526 = vmatpush1.msra.mxu0 0.0
    %2527 = vmatprep.subr.mxu0 0.0
    %2528 = vmatpush1.msra.mxu0 0.0
    %2529 = vmatprep.subr.mxu0 0.0
    %2530 = vmatpush1.msra.mxu0 0.0
    %2531 = vmatprep.subr.mxu0 0.0
    %2532 = vmatpush1.msra.mxu0 0.0
    %2533 = vmatprep.subr.mxu0 0.0
    %2534 = vmatpush1.msra.mxu0 0.0
    %2535 = vmatprep.subr.mxu0 0.0
    %2536 = vmatpush1.msra.mxu0 0.0
    %2537 = vmatprep.subr.mxu0 0.0
    %2538 = vmatpush1.msra.mxu0 0.0
    %2539 = vmatprep.mubr.f32.mxu0 0.0
    %2540 = vmatmul.mubr.f32.gmra.mrb[0].mxu0 %v1925
    %v2541 = vpop.f32.mrb[0].mxu0
    %v2542 = vadd.f32 %v1917, %v2541
    %v2543 = vpop.f32.mrb[0].mxu0
    %2544 = vmatprep.mubr.f32.mxu0 0.0
    %2545 = vmatmul.mubr.f32.gmra.mrb[0].mxu0 %v1928
    %v2546 = vpop.f32.mrb[0].mxu0
    %v2547 = vadd.f32 %v1917, %v2546
    %v2548 = vpop.f32.mrb[0].mxu0
    %2549 = vmatprep.mubr.f32.mxu0 0.0
    %2550 = vmatmul.mubr.f32.gmra.mrb[0].mxu0 %v1931
    %v2551 = vpop.f32.mrb[0].mxu0
    %v2552 = vadd.f32 %v1917, %v2551
    %v2553 = vpop.f32.mrb[0].mxu0
    %2554 = vmatprep.mubr.f32.mxu0 0.0
    %2555 = vmatmul.mubr.f32.gmra.mrb[0].mxu0 %v1934
    %v2556 = vpop.f32.mrb[0].mxu0
    %v2557 = vadd.f32 %v1917, %v2556
    %v2558 = vpop.f32.mrb[0].mxu0
    %2559 = vmatprep.mubr.f32.mxu0 0.0
    %2560 = vmatmul.mubr.f32.gmra.mrb[0].mxu0 %v1937
    %v2561 = vpop.f32.mrb[0].mxu0
    %v2562 = vadd.f32 %v1917, %v2561
    %v2563 = vpop.f32.mrb[0].mxu0
    %2564 = vmatprep.mubr.f32.mxu0 0.0
    %2565 = vmatmul.mubr.f32.gmra.mrb[0].mxu0 %v1940
    %v2566 = vpop.f32.mrb[0].mxu0
    %v2567 = vadd.f32 %v1917, %v2566
    %v2568 = vpop.f32.mrb[0].mxu0
    %2569 = vmatprep.mubr.f32.mxu0 0.0
    %2570 = vmatmul.mubr.f32.gmra.mrb[0].mxu0 %v1943
    %v2571 = vpop.f32.mrb[0].mxu0
    %v2572 = vadd.f32 %v1917, %v2571
    %v2573 = vpop.f32.mrb[0].mxu0
    %2574 = vmatprep.mubr.f32.mxu0 0.0
    %2575 = vmatmul.mubr.f32.gmra.mrb[0].mxu0 %v1946
    %v2576 = vpop.f32.mrb[0].mxu0
    %v2577 = vadd.f32 %v1917, %v2576
    %v2578 = vpop.f32.mrb[0].mxu0
    %2579 = vmatprep.mubr.f32.mxu0 0.0
    %2580 = vmatmul.mubr.f32.gmra.mrb[0].mxu0 %v1949
    %v2581 = vpop.f32.mrb[0].mxu0
    %v2582 = vadd.f32 %v1917, %v2581
    %v2583 = vpop.f32.mrb[0].mxu0
    %2584 = vmatprep.mubr.f32.mxu0 0.0
    %2585 = vmatmul.mubr.f32.gmra.mrb[0].mxu0 %v1952
    %v2586 = vpop.f32.mrb[0].mxu0
    %v2587 = vadd.f32 %v1917, %v2586
    %v2588 = vpop.f32.mrb[0].mxu0
    %2589 = vmatprep.mubr.f32.mxu0 0.0
    %2590 = vmatmul.mubr.f32.gmra.mrb[0].mxu0 %v1955
    %v2591 = vpop.f32.mrb[0].mxu0
    %v2592 = vadd.f32 %v1917, %v2591
    %v2593 = vpop.f32.mrb[0].mxu0
    %2594 = vmatprep.mubr.f32.mxu0 0.0
    %2595 = vmatmul.mubr.f32.gmra.mrb[0].mxu0 %v1958
    %v2596 = vpop.f32.mrb[0].mxu0
    %v2597 = vadd.f32 %v1917, %v2596
    %v2598 = vpop.f32.mrb[0].mxu0
    %2599 = vmatprep.mubr.f32.mxu0 0.0
    %2600 = vmatmul.mubr.f32.gmra.mrb[0].mxu0 %v1961
    %v2601 = vpop.f32.mrb[0].mxu0
    %v2602 = vadd.f32 %v1917, %v2601
    %v2603 = vpop.f32.mrb[0].mxu0
    %2604 = vmatprep.mubr.f32.mxu0 0.0
    %2605 = vmatmul.mubr.f32.gmra.mrb[0].mxu0 %v1964
    %v2606 = vpop.f32.mrb[0].mxu0
    %v2607 = vadd.f32 %v1917, %v2606
    %v2608 = vpop.f32.mrb[0].mxu0
    %2609 = vmatprep.mubr.f32.mxu0 0.0
    %2610 = vmatmul.mubr.f32.gmra.mrb[0].mxu0 %v1967
    %v2611 = vpop.f32.mrb[0].mxu0
    %v2612 = vadd.f32 %v1917, %v2611
    %v2613 = vpop.f32.mrb[0].mxu0
    %2614 = vmatprep.mubr.f32.mxu0 0.0
    %2615 = vmatmul.mubr.f32.gmra.mrb[0].mxu0 %v1970
    %v2616 = vpop.f32.mrb[0].mxu0
    %v2617 = vadd.f32 %v1917, %v2616
    %v2618 = vpop.f32.mrb[0].mxu0
    %2619 = vmatprep.mubr.f32.mxu0 0.0
    %2620 = vmatmul.mubr.f32.gmra.mrb[0].mxu0 %v1973
    %v2621 = vpop.f32.mrb[0].mxu0
    %v2622 = vadd.f32 %v1917, %v2621
    %v2623 = vpop.f32.mrb[0].mxu0
    %2624 = vmatprep.mubr.f32.mxu0 0.0
    %2625 = vmatmul.mubr.f32.gmra.mrb[0].mxu0 %v1976
    %v2626 = vpop.f32.mrb[0].mxu0
    %v2627 = vadd.f32 %v1917, %v2626
    %v2628 = vpop.f32.mrb[0].mxu0
    %2629 = vmatprep.mubr.f32.mxu0 0.0
    %2630 = vmatmul.mubr.f32.gmra.mrb[0].mxu0 %v1979
    %v2631 = vpop.f32.mrb[0].mxu0
    %v2632 = vadd.f32 %v1917, %v2631
    %v2633 = vpop.f32.mrb[0].mxu0
    %2634 = vmatprep.mubr.f32.mxu0 0.0
    %2635 = vmatmul.mubr.f32.gmra.mrb[0].mxu0 %v1982
    %v2636 = vpop.f32.mrb[0].mxu0
    %v2637 = vadd.f32 %v1917, %v2636
    %v2638 = vpop.f32.mrb[0].mxu0
    %2639 = vmatprep.mubr.f32.mxu0 0.0
    %2640 = vmatmul.mubr.f32.gmra.mrb[0].mxu0 %v1985
    %v2641 = vpop.f32.mrb[0].mxu0
    %v2642 = vadd.f32 %v1917, %v2641
    %v2643 = vpop.f32.mrb[0].mxu0
    %2644 = vmatprep.mubr.f32.mxu0 0.0
    %2645 = vmatmul.mubr.f32.gmra.mrb[0].mxu0 %v1988
    %v2646 = vpop.f32.mrb[0].mxu0
    %v2647 = vadd.f32 %v1917, %v2646
    %v2648 = vpop.f32.mrb[0].mxu0
    %2649 = vmatprep.mubr.f32.mxu0 0.0
    %2650 = vmatmul.mubr.f32.gmra.mrb[0].mxu0 %v1991
    %v2651 = vpop.f32.mrb[0].mxu0
    %v2652 = vadd.f32 %v1917, %v2651
    %v2653 = vpop.f32.mrb[0].mxu0
    %2654 = vmatprep.mubr.f32.mxu0 0.0
    %2655 = vmatmul.mubr.f32.gmra.mrb[0].mxu0 %v1994
    %v2656 = vpop.f32.mrb[0].mxu0
    %v2657 = vadd.f32 %v1917, %v2656
    %v2658 = vpop.f32.mrb[0].mxu0
    %2659 = vmatprep.mubr.f32.mxu0 0.0
    %2660 = vmatmul.mubr.f32.gmra.mrb[0].mxu0 %v1997
    %v2661 = vpop.f32.mrb[0].mxu0
    %v2662 = vadd.f32 %v1917, %v2661
    %v2663 = vpop.f32.mrb[0].mxu0
    %2664 = vmatprep.mubr.f32.mxu0 0.0
    %2665 = vmatmul.mubr.f32.gmra.mrb[0].mxu0 %v2000
    %v2666 = vpop.f32.mrb[0].mxu0
    %v2667 = vadd.f32 %v1917, %v2666
    %v2668 = vpop.f32.mrb[0].mxu0
    %2669 = vmatprep.mubr.f32.mxu0 0.0
    %2670 = vmatmul.mubr.f32.gmra.mrb[0].mxu0 %v2003
    %v2671 = vpop.f32.mrb[0].mxu0
    %v2672 = vadd.f32 %v1917, %v2671
    %v2673 = vpop.f32.mrb[0].mxu0
    %2674 = vdwg.mxu0
    %v2675 = vmax.f32 %v2088, 0.0
    %v2676 = vmax.f32 %v2090, 0.0
    %v2677 = vmax.f32 %v2315, 0.0
    %v2678 = vmax.f32 %v2317, 0.0
    %v2679 = vmax.f32 %v2542, 0.0
    %v2680 = vmax.f32 %v2094, 0.0
    %v2681 = vmax.f32 %v2096, 0.0
    %v2682 = vmax.f32 %v2321, 0.0
    %v2683 = vmax.f32 %v2323, 0.0
    %v2684 = vmax.f32 %v2547, 0.0
    %v2685 = vmax.f32 %v2100, 0.0
    %v2686 = vmax.f32 %v2102, 0.0
    %v2687 = vmax.f32 %v2327, 0.0
    %v2688 = vmax.f32 %v2329, 0.0
    %v2689 = vmax.f32 %v2552, 0.0
    %v2690 = vmax.f32 %v2106, 0.0
    %v2691 = vmax.f32 %v2108, 0.0
    %v2692 = vmax.f32 %v2333, 0.0
    %v2693 = vmax.f32 %v2335, 0.0
    %v2694 = vmax.f32 %v2557, 0.0
    %v2695 = vmax.f32 %v2112, 0.0
    %v2696 = vmax.f32 %v2114, 0.0
    %v2697 = vmax.f32 %v2339, 0.0
    %v2698 = vmax.f32 %v2341, 0.0
    %v2699 = vmax.f32 %v2562, 0.0
    %v2700 = vmax.f32 %v2118, 0.0
    %v2701 = vmax.f32 %v2120, 0.0
    %v2702 = vmax.f32 %v2345, 0.0
    %v2703 = vmax.f32 %v2347, 0.0
    %v2704 = vmax.f32 %v2567, 0.0
    %v2705 = vmax.f32 %v2124, 0.0
    %v2706 = vmax.f32 %v2126, 0.0
    %v2707 = vmax.f32 %v2351, 0.0
    %v2708 = vmax.f32 %v2353, 0.0
    %v2709 = vmax.f32 %v2572, 0.0
    %v2710 = vmax.f32 %v2130, 0.0
    %v2711 = vmax.f32 %v2132, 0.0
    %v2712 = vmax.f32 %v2357, 0.0
    %v2713 = vmax.f32 %v2359, 0.0
    %v2714 = vmax.f32 %v2577, 0.0
    %v2715 = vmax.f32 %v2136, 0.0
    %v2716 = vmax.f32 %v2138, 0.0
    %v2717 = vmax.f32 %v2363, 0.0
    %v2718 = vmax.f32 %v2365, 0.0
    %v2719 = vmax.f32 %v2582, 0.0
    %v2720 = vmax.f32 %v2142, 0.0
    %v2721 = vmax.f32 %v2144, 0.0
    %v2722 = vmax.f32 %v2369, 0.0
    %v2723 = vmax.f32 %v2371, 0.0
    %v2724 = vmax.f32 %v2587, 0.0
    %v2725 = vmax.f32 %v2148, 0.0
    %v2726 = vmax.f32 %v2150, 0.0
    %v2727 = vmax.f32 %v2375, 0.0
    %v2728 = vmax.f32 %v2377, 0.0
    %v2729 = vmax.f32 %v2592, 0.0
    %v2730 = vmax.f32 %v2154, 0.0
    %v2731 = vmax.f32 %v2156, 0.0
    %v2732 = vmax.f32 %v2381, 0.0
    %v2733 = vmax.f32 %v2383, 0.0
    %v2734 = vmax.f32 %v2597, 0.0
    %v2735 = vmax.f32 %v2160, 0.0
    %v2736 = vmax.f32 %v2162, 0.0
    %v2737 = vmax.f32 %v2387, 0.0
    %v2738 = vmax.f32 %v2389, 0.0
    %v2739 = vmax.f32 %v2602, 0.0
    %v2740 = vmax.f32 %v2166, 0.0
    %v2741 = vmax.f32 %v2168, 0.0
    %v2742 = vmax.f32 %v2393, 0.0
    %v2743 = vmax.f32 %v2395, 0.0
    %v2744 = vmax.f32 %v2607, 0.0
    %v2745 = vmax.f32 %v2172, 0.0
    %v2746 = vmax.f32 %v2174, 0.0
    %v2747 = vmax.f32 %v2399, 0.0
    %v2748 = vmax.f32 %v2401, 0.0
    %v2749 = vmax.f32 %v2612, 0.0
    %v2750 = vmax.f32 %v2178, 0.0
    %v2751 = vmax.f32 %v2180, 0.0
    %v2752 = vmax.f32 %v2405, 0.0
    %v2753 = vmax.f32 %v2407, 0.0
    %v2754 = vmax.f32 %v2617, 0.0
    %v2755 = vmax.f32 %v2184, 0.0
    %v2756 = vmax.f32 %v2186, 0.0
    %v2757 = vmax.f32 %v2411, 0.0
    %v2758 = vmax.f32 %v2413, 0.0
    %v2759 = vmax.f32 %v2622, 0.0
    %v2760 = vmax.f32 %v2190, 0.0
    %v2761 = vmax.f32 %v2192, 0.0
    %v2762 = vmax.f32 %v2417, 0.0
    %v2763 = vmax.f32 %v2419, 0.0
    %v2764 = vmax.f32 %v2627, 0.0
    %v2765 = vmax.f32 %v2196, 0.0
    %v2766 = vmax.f32 %v2198, 0.0
    %v2767 = vmax.f32 %v2423, 0.0
    %v2768 = vmax.f32 %v2425, 0.0
    %v2769 = vmax.f32 %v2632, 0.0
    %v2770 = vmax.f32 %v2202, 0.0
    %v2771 = vmax.f32 %v2204, 0.0
    %v2772 = vmax.f32 %v2429, 0.0
    %v2773 = vmax.f32 %v2431, 0.0
    %v2774 = vmax.f32 %v2637, 0.0
    %v2775 = vmax.f32 %v2208, 0.0
    %v2776 = vmax.f32 %v2210, 0.0
    %v2777 = vmax.f32 %v2435, 0.0
    %v2778 = vmax.f32 %v2437, 0.0
    %v2779 = vmax.f32 %v2642, 0.0
    %v2780 = vmax.f32 %v2214, 0.0
    %v2781 = vmax.f32 %v2216, 0.0
    %v2782 = vmax.f32 %v2441, 0.0
    %v2783 = vmax.f32 %v2443, 0.0
    %v2784 = vmax.f32 %v2647, 0.0
    %v2785 = vmax.f32 %v2220, 0.0
    %v2786 = vmax.f32 %v2222, 0.0
    %v2787 = vmax.f32 %v2447, 0.0
    %v2788 = vmax.f32 %v2449, 0.0
    %v2789 = vmax.f32 %v2652, 0.0
    %v2790 = vmax.f32 %v2226, 0.0
    %v2791 = vmax.f32 %v2228, 0.0
    %v2792 = vmax.f32 %v2453, 0.0
    %v2793 = vmax.f32 %v2455, 0.0
    %v2794 = vmax.f32 %v2657, 0.0
    %v2795 = vmax.f32 %v2232, 0.0
    %v2796 = vmax.f32 %v2234, 0.0
    %v2797 = vmax.f32 %v2459, 0.0
    %v2798 = vmax.f32 %v2461, 0.0
    %v2799 = vmax.f32 %v2662, 0.0
    %v2800 = vmax.f32 %v2238, 0.0
    %v2801 = vmax.f32 %v2240, 0.0
    %v2802 = vmax.f32 %v2465, 0.0
    %v2803 = vmax.f32 %v2467, 0.0
    %v2804 = vmax.f32 %v2667, 0.0
    %v2805 = vmax.f32 %v2244, 0.0
    %v2806 = vmax.f32 %v2246, 0.0
    %v2807 = vmax.f32 %v2471, 0.0
    %v2808 = vmax.f32 %v2473, 0.0
    %v2809 = vmax.f32 %v2672, 0.0
    %2864 = vrot.lane.b32.xlu0 %v2676, 64
    %v2865 = vpop.permute.xlu0 %2864
    %2866 = vrot.lane.b32.xlu0 %v2677, 64
    %v2867 = vpop.permute.xlu0 %2866
    %2868 = vrot.lane.b32.xlu0 %v2681, 64
    %v2869 = vpop.permute.xlu0 %2868
    %2870 = vrot.lane.b32.xlu0 %v2682, 64
    %v2871 = vpop.permute.xlu0 %2870
    %2872 = vrot.lane.b32.xlu0 %v2686, 64
    %v2873 = vpop.permute.xlu0 %2872
    %2874 = vrot.lane.b32.xlu0 %v2687, 64
    %v2875 = vpop.permute.xlu0 %2874
    %2876 = vrot.lane.b32.xlu0 %v2691, 64
    %v2877 = vpop.permute.xlu0 %2876
    %2878 = vrot.lane.b32.xlu0 %v2692, 64
    %v2879 = vpop.permute.xlu0 %2878
    %2880 = vrot.lane.b32.xlu0 %v2696, 64
    %v2881 = vpop.permute.xlu0 %2880
    %2882 = vrot.lane.b32.xlu0 %v2697, 64
    %v2883 = vpop.permute.xlu0 %2882
    %2884 = vrot.lane.b32.xlu0 %v2701, 64
    %v2885 = vpop.permute.xlu0 %2884
    %2886 = vrot.lane.b32.xlu0 %v2702, 64
    %v2887 = vpop.permute.xlu0 %2886
    %2888 = vrot.lane.b32.xlu0 %v2706, 64
    %v2889 = vpop.permute.xlu0 %2888
    %2890 = vrot.lane.b32.xlu0 %v2707, 64
    %v2891 = vpop.permute.xlu0 %2890
    %2892 = vrot.lane.b32.xlu0 %v2711, 64
    %v2893 = vpop.permute.xlu0 %2892
    %2894 = vrot.lane.b32.xlu0 %v2712, 64
    %v2895 = vpop.permute.xlu0 %2894
    %2896 = vrot.lane.b32.xlu0 %v2716, 64
    %v2897 = vpop.permute.xlu0 %2896
    %2898 = vrot.lane.b32.xlu0 %v2717, 64
    %v2899 = vpop.permute.xlu0 %2898
    %2900 = vrot.lane.b32.xlu0 %v2721, 64
    %v2901 = vpop.permute.xlu0 %2900
    %2902 = vrot.lane.b32.xlu0 %v2722, 64
    %v2903 = vpop.permute.xlu0 %2902
    %2904 = vrot.lane.b32.xlu0 %v2726, 64
    %v2905 = vpop.permute.xlu0 %2904
    %2906 = vrot.lane.b32.xlu0 %v2727, 64
    %v2907 = vpop.permute.xlu0 %2906
    %2908 = vrot.lane.b32.xlu0 %v2731, 64
    %v2909 = vpop.permute.xlu0 %2908
    %2910 = vrot.lane.b32.xlu0 %v2732, 64
    %v2911 = vpop.permute.xlu0 %2910
    %2912 = vrot.lane.b32.xlu0 %v2736, 64
    %v2913 = vpop.permute.xlu0 %2912
    %2914 = vrot.lane.b32.xlu0 %v2737, 64
    %v2915 = vpop.permute.xlu0 %2914
    %2916 = vrot.lane.b32.xlu0 %v2741, 64
    %v2917 = vpop.permute.xlu0 %2916
    %2918 = vrot.lane.b32.xlu0 %v2742, 64
    %v2919 = vpop.permute.xlu0 %2918
    %2920 = vrot.lane.b32.xlu0 %v2746, 64
    %v2921 = vpop.permute.xlu0 %2920
    %2922 = vrot.lane.b32.xlu0 %v2747, 64
    %v2923 = vpop.permute.xlu0 %2922
    %2924 = vrot.lane.b32.xlu0 %v2751, 64
    %v2925 = vpop.permute.xlu0 %2924
    %2926 = vrot.lane.b32.xlu0 %v2752, 64
    %v2927 = vpop.permute.xlu0 %2926
    %2928 = vrot.lane.b32.xlu0 %v2756, 64
    %v2929 = vpop.permute.xlu0 %2928
    %2930 = vrot.lane.b32.xlu0 %v2757, 64
    %v2931 = vpop.permute.xlu0 %2930
    %2932 = vrot.lane.b32.xlu0 %v2761, 64
    %v2933 = vpop.permute.xlu0 %2932
    %2934 = vrot.lane.b32.xlu0 %v2762, 64
    %v2935 = vpop.permute.xlu0 %2934
    %2936 = vrot.lane.b32.xlu0 %v2766, 64
    %v2937 = vpop.permute.xlu0 %2936
    %2938 = vrot.lane.b32.xlu0 %v2767, 64
    %v2939 = vpop.permute.xlu0 %2938
    %2940 = vrot.lane.b32.xlu0 %v2771, 64
    %v2941 = vpop.permute.xlu0 %2940
    %2942 = vrot.lane.b32.xlu0 %v2772, 64
    %v2943 = vpop.permute.xlu0 %2942
    %2944 = vrot.lane.b32.xlu0 %v2776, 64
    %v2945 = vpop.permute.xlu0 %2944
    %2946 = vrot.lane.b32.xlu0 %v2777, 64
    %v2947 = vpop.permute.xlu0 %2946
    %2948 = vrot.lane.b32.xlu0 %v2781, 64
    %v2949 = vpop.permute.xlu0 %2948
    %2950 = vrot.lane.b32.xlu0 %v2782, 64
    %v2951 = vpop.permute.xlu0 %2950
    %2952 = vrot.lane.b32.xlu0 %v2786, 64
    %v2953 = vpop.permute.xlu0 %2952
    %2954 = vrot.lane.b32.xlu0 %v2787, 64
    %v2955 = vpop.permute.xlu0 %2954
    %2956 = vrot.lane.b32.xlu0 %v2791, 64
    %v2957 = vpop.permute.xlu0 %2956
    %2958 = vrot.lane.b32.xlu0 %v2792, 64
    %v2959 = vpop.permute.xlu0 %2958
    %2960 = vrot.lane.b32.xlu0 %v2796, 64
    %v2961 = vpop.permute.xlu0 %2960
    %2962 = vrot.lane.b32.xlu0 %v2797, 64
    %v2963 = vpop.permute.xlu0 %2962
    %2964 = vrot.lane.b32.xlu0 %v2801, 64
    %v2965 = vpop.permute.xlu0 %2964
    %2966 = vrot.lane.b32.xlu0 %v2802, 64
    %v2967 = vpop.permute.xlu0 %2966
    %2968 = vrot.lane.b32.xlu0 %v2806, 64
    %v2969 = vpop.permute.xlu0 %2968
    %2970 = vrot.lane.b32.xlu0 %v2807, 64
    %v2971 = vpop.permute.xlu0 %2970
    %v2972 = vsel %vm768, %v2865, %v2867
    %v2973 = vsel %vm768, %v2869, %v2871
    %v2974 = vsel %vm768, %v2873, %v2875
    %v2975 = vsel %vm768, %v2877, %v2879
    %v2976 = vsel %vm768, %v2881, %v2883
    %v2977 = vsel %vm768, %v2885, %v2887
    %v2978 = vsel %vm768, %v2889, %v2891
    %v2979 = vsel %vm768, %v2893, %v2895
    %v2980 = vsel %vm768, %v2897, %v2899
    %v2981 = vsel %vm768, %v2901, %v2903
    %v2982 = vsel %vm768, %v2905, %v2907
    %v2983 = vsel %vm768, %v2909, %v2911
    %v2984 = vsel %vm768, %v2913, %v2915
    %v2985 = vsel %vm768, %v2917, %v2919
    %v2986 = vsel %vm768, %v2921, %v2923
    %v2987 = vsel %vm768, %v2925, %v2927
    %v2988 = vsel %vm768, %v2929, %v2931
    %v2989 = vsel %vm768, %v2933, %v2935
    %v2990 = vsel %vm768, %v2937, %v2939
    %v2991 = vsel %vm768, %v2941, %v2943
    %v2992 = vsel %vm768, %v2945, %v2947
    %v2993 = vsel %vm768, %v2949, %v2951
    %v2994 = vsel %vm768, %v2953, %v2955
    %v2995 = vsel %vm768, %v2957, %v2959
    %v2996 = vsel %vm768, %v2961, %v2963
    %v2997 = vsel %vm768, %v2965, %v2967
    %v2998 = vsel %vm768, %v2969, %v2971
    %v3053 = vmax.f32 %v2675, %v2972
    %v3054 = vmax.f32 %v2676, %v2867
    %v3055 = vmax.f32 %v2680, %v2973
    %v3056 = vmax.f32 %v2681, %v2871
    %v3057 = vmax.f32 %v2685, %v2974
    %v3058 = vmax.f32 %v2686, %v2875
    %v3059 = vmax.f32 %v2690, %v2975
    %v3060 = vmax.f32 %v2691, %v2879
    %v3061 = vmax.f32 %v2695, %v2976
    %v3062 = vmax.f32 %v2696, %v2883
    %v3063 = vmax.f32 %v2700, %v2977
    %v3064 = vmax.f32 %v2701, %v2887
    %v3065 = vmax.f32 %v2705, %v2978
    %v3066 = vmax.f32 %v2706, %v2891
    %v3067 = vmax.f32 %v2710, %v2979
    %v3068 = vmax.f32 %v2711, %v2895
    %v3069 = vmax.f32 %v2715, %v2980
    %v3070 = vmax.f32 %v2716, %v2899
    %v3071 = vmax.f32 %v2720, %v2981
    %v3072 = vmax.f32 %v2721, %v2903
    %v3073 = vmax.f32 %v2725, %v2982
    %v3074 = vmax.f32 %v2726, %v2907
    %v3075 = vmax.f32 %v2730, %v2983
    %v3076 = vmax.f32 %v2731, %v2911
    %v3077 = vmax.f32 %v2735, %v2984
    %v3078 = vmax.f32 %v2736, %v2915
    %v3079 = vmax.f32 %v2740, %v2985
    %v3080 = vmax.f32 %v2741, %v2919
    %v3081 = vmax.f32 %v2745, %v2986
    %v3082 = vmax.f32 %v2746, %v2923
    %v3083 = vmax.f32 %v2750, %v2987
    %v3084 = vmax.f32 %v2751, %v2927
    %v3085 = vmax.f32 %v2755, %v2988
    %v3086 = vmax.f32 %v2756, %v2931
    %v3087 = vmax.f32 %v2760, %v2989
    %v3088 = vmax.f32 %v2761, %v2935
    %v3089 = vmax.f32 %v2765, %v2990
    %v3090 = vmax.f32 %v2766, %v2939
    %v3091 = vmax.f32 %v2770, %v2991
    %v3092 = vmax.f32 %v2771, %v2943
    %v3093 = vmax.f32 %v2775, %v2992
    %v3094 = vmax.f32 %v2776, %v2947
    %v3095 = vmax.f32 %v2780, %v2993
    %v3096 = vmax.f32 %v2781, %v2951
    %v3097 = vmax.f32 %v2785, %v2994
    %v3098 = vmax.f32 %v2786, %v2955
    %v3099 = vmax.f32 %v2790, %v2995
    %v3100 = vmax.f32 %v2791, %v2959
    %v3101 = vmax.f32 %v2795, %v2996
    %v3102 = vmax.f32 %v2796, %v2963
    %v3103 = vmax.f32 %v2800, %v2997
    %v3104 = vmax.f32 %v2801, %v2967
    %v3105 = vmax.f32 %v2805, %v2998
    %v3106 = vmax.f32 %v2806, %v2971
    %v3107 = vmax.f32 %v3053, %v2678
    %v3108 = vmax.f32 %v3054, %v2679
    %v3109 = vmax.f32 %v3055, %v2683
    %v3110 = vmax.f32 %v3056, %v2684
    %v3111 = vmax.f32 %v3057, %v2688
    %v3112 = vmax.f32 %v3058, %v2689
    %v3113 = vmax.f32 %v3059, %v2693
    %v3114 = vmax.f32 %v3060, %v2694
    %v3115 = vmax.f32 %v3061, %v2698
    %v3116 = vmax.f32 %v3062, %v2699
    %v3117 = vmax.f32 %v3063, %v2703
    %v3118 = vmax.f32 %v3064, %v2704
    %v3119 = vmax.f32 %v3065, %v2708
    %v3120 = vmax.f32 %v3066, %v2709
    %v3121 = vmax.f32 %v3067, %v2713
    %v3122 = vmax.f32 %v3068, %v2714
    %v3123 = vmax.f32 %v3069, %v2718
    %v3124 = vmax.f32 %v3070, %v2719
    %v3125 = vmax.f32 %v3071, %v2723
    %v3126 = vmax.f32 %v3072, %v2724
    %v3127 = vmax.f32 %v3073, %v2728
    %v3128 = vmax.f32 %v3074, %v2729
    %v3129 = vmax.f32 %v3075, %v2733
    %v3130 = vmax.f32 %v3076, %v2734
    %v3131 = vmax.f32 %v3077, %v2738
    %v3132 = vmax.f32 %v3078, %v2739
    %v3133 = vmax.f32 %v3079, %v2743
    %v3134 = vmax.f32 %v3080, %v2744
    %v3135 = vmax.f32 %v3081, %v2748
    %v3136 = vmax.f32 %v3082, %v2749
    %v3137 = vmax.f32 %v3083, %v2753
    %v3138 = vmax.f32 %v3084, %v2754
    %v3139 = vmax.f32 %v3085, %v2758
    %v3140 = vmax.f32 %v3086, %v2759
    %v3141 = vmax.f32 %v3087, %v2763
    %v3142 = vmax.f32 %v3088, %v2764
    %v3143 = vmax.f32 %v3089, %v2768
    %v3144 = vmax.f32 %v3090, %v2769
    %v3145 = vmax.f32 %v3091, %v2773
    %v3146 = vmax.f32 %v3092, %v2774
    %v3147 = vmax.f32 %v3093, %v2778
    %v3148 = vmax.f32 %v3094, %v2779
    %v3149 = vmax.f32 %v3095, %v2783
    %v3150 = vmax.f32 %v3096, %v2784
    %v3151 = vmax.f32 %v3097, %v2788
    %v3152 = vmax.f32 %v3098, %v2789
    %v3153 = vmax.f32 %v3099, %v2793
    %v3154 = vmax.f32 %v3100, %v2794
    %v3155 = vmax.f32 %v3101, %v2798
    %v3156 = vmax.f32 %v3102, %v2799
    %v3157 = vmax.f32 %v3103, %v2803
    %v3158 = vmax.f32 %v3104, %v2804
    %v3159 = vmax.f32 %v3105, %v2808
    %v3160 = vmax.f32 %v3106, %v2809
    %v3215 = vrot.slane %v3107, 1
    %v3216 = vrot.slane %v3109, 1
    %v3217 = vsel %vm374, %v3215, %v3216
    %v3218 = vrot.slane %v3108, 1
    %v3219 = vrot.slane %v3110, 1
    %v3220 = vsel %vm374, %v3218, %v3219
    %v3221 = vrot.slane %v3111, 1
    %v3222 = vsel %vm374, %v3216, %v3221
    %v3223 = vrot.slane %v3112, 1
    %v3224 = vsel %vm374, %v3219, %v3223
    %v3225 = vrot.slane %v3113, 1
    %v3226 = vsel %vm374, %v3221, %v3225
    %v3227 = vrot.slane %v3114, 1
    %v3228 = vsel %vm374, %v3223, %v3227
    %v3229 = vrot.slane %v3115, 1
    %v3230 = vsel %vm374, %v3225, %v3229
    %v3231 = vrot.slane %v3116, 1
    %v3232 = vsel %vm374, %v3227, %v3231
    %v3233 = vrot.slane %v3117, 1
    %v3234 = vsel %vm374, %v3229, %v3233
    %v3235 = vrot.slane %v3118, 1
    %v3236 = vsel %vm374, %v3231, %v3235
    %v3237 = vrot.slane %v3119, 1
    %v3238 = vsel %vm374, %v3233, %v3237
    %v3239 = vrot.slane %v3120, 1
    %v3240 = vsel %vm374, %v3235, %v3239
    %v3241 = vrot.slane %v3121, 1
    %v3242 = vsel %vm374, %v3237, %v3241
    %v3243 = vrot.slane %v3122, 1
    %v3244 = vsel %vm374, %v3239, %v3243
    %v3245 = vrot.slane %v3123, 1
    %v3246 = vsel %vm374, %v3241, %v3245
    %v3247 = vrot.slane %v3124, 1
    %v3248 = vsel %vm374, %v3243, %v3247
    %v3249 = vrot.slane %v3125, 1
    %v3250 = vsel %vm374, %v3245, %v3249
    %v3251 = vrot.slane %v3126, 1
    %v3252 = vsel %vm374, %v3247, %v3251
    %v3253 = vrot.slane %v3127, 1
    %v3254 = vsel %vm374, %v3249, %v3253
    %v3255 = vrot.slane %v3128, 1
    %v3256 = vsel %vm374, %v3251, %v3255
    %v3257 = vrot.slane %v3129, 1
    %v3258 = vsel %vm374, %v3253, %v3257
    %v3259 = vrot.slane %v3130, 1
    %v3260 = vsel %vm374, %v3255, %v3259
    %v3261 = vrot.slane %v3131, 1
    %v3262 = vsel %vm374, %v3257, %v3261
    %v3263 = vrot.slane %v3132, 1
    %v3264 = vsel %vm374, %v3259, %v3263
    %v3265 = vrot.slane %v3133, 1
    %v3266 = vsel %vm374, %v3261, %v3265
    %v3267 = vrot.slane %v3134, 1
    %v3268 = vsel %vm374, %v3263, %v3267
    %v3269 = vrot.slane %v3135, 1
    %v3270 = vsel %vm374, %v3265, %v3269
    %v3271 = vrot.slane %v3136, 1
    %v3272 = vsel %vm374, %v3267, %v3271
    %v3273 = vrot.slane %v3137, 1
    %v3274 = vsel %vm374, %v3269, %v3273
    %v3275 = vrot.slane %v3138, 1
    %v3276 = vsel %vm374, %v3271, %v3275
    %v3277 = vrot.slane %v3139, 1
    %v3278 = vsel %vm374, %v3273, %v3277
    %v3279 = vrot.slane %v3140, 1
    %v3280 = vsel %vm374, %v3275, %v3279
    %v3281 = vrot.slane %v3141, 1
    %v3282 = vsel %vm374, %v3277, %v3281
    %v3283 = vrot.slane %v3142, 1
    %v3284 = vsel %vm374, %v3279, %v3283
    %v3285 = vrot.slane %v3143, 1
    %v3286 = vsel %vm374, %v3281, %v3285
    %v3287 = vrot.slane %v3144, 1
    %v3288 = vsel %vm374, %v3283, %v3287
    %v3289 = vrot.slane %v3145, 1
    %v3290 = vsel %vm374, %v3285, %v3289
    %v3291 = vrot.slane %v3146, 1
    %v3292 = vsel %vm374, %v3287, %v3291
    %v3293 = vrot.slane %v3147, 1
    %v3294 = vsel %vm374, %v3289, %v3293
    %v3295 = vrot.slane %v3148, 1
    %v3296 = vsel %vm374, %v3291, %v3295
    %v3297 = vrot.slane %v3149, 1
    %v3298 = vsel %vm374, %v3293, %v3297
    %v3299 = vrot.slane %v3150, 1
    %v3300 = vsel %vm374, %v3295, %v3299
    %v3301 = vrot.slane %v3151, 1
    %v3302 = vsel %vm374, %v3297, %v3301
    %v3303 = vrot.slane %v3152, 1
    %v3304 = vsel %vm374, %v3299, %v3303
    %v3305 = vrot.slane %v3153, 1
    %v3306 = vsel %vm374, %v3301, %v3305
    %v3307 = vrot.slane %v3154, 1
    %v3308 = vsel %vm374, %v3303, %v3307
    %v3309 = vrot.slane %v3155, 1
    %v3310 = vsel %vm374, %v3305, %v3309
    %v3311 = vrot.slane %v3156, 1
    %v3312 = vsel %vm374, %v3307, %v3311
    %v3313 = vrot.slane %v3157, 1
    %v3314 = vsel %vm374, %v3309, %v3313
    %v3315 = vrot.slane %v3158, 1
    %v3316 = vsel %vm374, %v3311, %v3315
    %v3317 = vrot.slane %v3159, 1
    %v3318 = vsel %vm374, %v3313, %v3317
    %v3319 = vrot.slane %v3160, 1
    %v3320 = vsel %vm374, %v3315, %v3319
    %v3375 = vsel %vm374, %v3317, 0.0
    %v3376 = vsel %vm374, %v3319, 0.0
    %v3377 = vmax.f32 %v3107, %v3217
    %v3378 = vmax.f32 %v3108, %v3220
    %v3379 = vmax.f32 %v3109, %v3222
    %v3380 = vmax.f32 %v3110, %v3224
    %v3381 = vmax.f32 %v3111, %v3226
    %v3382 = vmax.f32 %v3112, %v3228
    %v3383 = vmax.f32 %v3113, %v3230
    %v3384 = vmax.f32 %v3114, %v3232
    %v3385 = vmax.f32 %v3115, %v3234
    %v3386 = vmax.f32 %v3116, %v3236
    %v3387 = vmax.f32 %v3117, %v3238
    %v3388 = vmax.f32 %v3118, %v3240
    %v3389 = vmax.f32 %v3119, %v3242
    %v3390 = vmax.f32 %v3120, %v3244
    %v3391 = vmax.f32 %v3121, %v3246
    %v3392 = vmax.f32 %v3122, %v3248
    %v3393 = vmax.f32 %v3123, %v3250
    %v3394 = vmax.f32 %v3124, %v3252
    %v3395 = vmax.f32 %v3125, %v3254
    %v3396 = vmax.f32 %v3126, %v3256
    %v3397 = vmax.f32 %v3127, %v3258
    %v3398 = vmax.f32 %v3128, %v3260
    %v3399 = vmax.f32 %v3129, %v3262
    %v3400 = vmax.f32 %v3130, %v3264
    %v3401 = vmax.f32 %v3131, %v3266
    %v3402 = vmax.f32 %v3132, %v3268
    %v3403 = vmax.f32 %v3133, %v3270
    %v3404 = vmax.f32 %v3134, %v3272
    %v3405 = vmax.f32 %v3135, %v3274
    %v3406 = vmax.f32 %v3136, %v3276
    %v3407 = vmax.f32 %v3137, %v3278
    %v3408 = vmax.f32 %v3138, %v3280
    %v3409 = vmax.f32 %v3139, %v3282
    %v3410 = vmax.f32 %v3140, %v3284
    %v3411 = vmax.f32 %v3141, %v3286
    %v3412 = vmax.f32 %v3142, %v3288
    %v3413 = vmax.f32 %v3143, %v3290
    %v3414 = vmax.f32 %v3144, %v3292
    %v3415 = vmax.f32 %v3145, %v3294
    %v3416 = vmax.f32 %v3146, %v3296
    %v3417 = vmax.f32 %v3147, %v3298
    %v3418 = vmax.f32 %v3148, %v3300
    %v3419 = vmax.f32 %v3149, %v3302
    %v3420 = vmax.f32 %v3150, %v3304
    %v3421 = vmax.f32 %v3151, %v3306
    %v3422 = vmax.f32 %v3152, %v3308
    %v3423 = vmax.f32 %v3153, %v3310
    %v3424 = vmax.f32 %v3154, %v3312
    %v3425 = vmax.f32 %v3155, %v3314
    %v3426 = vmax.f32 %v3156, %v3316
    %v3427 = vmax.f32 %v3157, %v3318
    %v3428 = vmax.f32 %v3158, %v3320
    %v3429 = vmax.f32 %v3159, %v3375
    %v3430 = vmax.f32 %v3160, %v3376
    %v3431 = vrot.slane %v3107, 2
    %v3432 = vrot.slane %v3109, 2
    %v3433 = vsel %vm2005, %v3431, %v3432
    %v3434 = vrot.slane %v3108, 2
    %v3435 = vrot.slane %v3110, 2
    %v3436 = vsel %vm2005, %v3434, %v3435
    %v3437 = vrot.slane %v3111, 2
    %v3438 = vsel %vm2005, %v3432, %v3437
    %v3439 = vrot.slane %v3112, 2
    %v3440 = vsel %vm2005, %v3435, %v3439
    %v3441 = vrot.slane %v3113, 2
    %v3442 = vsel %vm2005, %v3437, %v3441
    %v3443 = vrot.slane %v3114, 2
    %v3444 = vsel %vm2005, %v3439, %v3443
    %v3445 = vrot.slane %v3115, 2
    %v3446 = vsel %vm2005, %v3441, %v3445
    %v3447 = vrot.slane %v3116, 2
    %v3448 = vsel %vm2005, %v3443, %v3447
    %v3449 = vrot.slane %v3117, 2
    %v3450 = vsel %vm2005, %v3445, %v3449
    %v3451 = vrot.slane %v3118, 2
    %v3452 = vsel %vm2005, %v3447, %v3451
    %v3453 = vrot.slane %v3119, 2
    %v3454 = vsel %vm2005, %v3449, %v3453
    %v3455 = vrot.slane %v3120, 2
    %v3456 = vsel %vm2005, %v3451, %v3455
    %v3457 = vrot.slane %v3121, 2
    %v3458 = vsel %vm2005, %v3453, %v3457
    %v3459 = vrot.slane %v3122, 2
    %v3460 = vsel %vm2005, %v3455, %v3459
    %v3461 = vrot.slane %v3123, 2
    %v3462 = vsel %vm2005, %v3457, %v3461
    %v3463 = vrot.slane %v3124, 2
    %v3464 = vsel %vm2005, %v3459, %v3463
    %v3465 = vrot.slane %v3125, 2
    %v3466 = vsel %vm2005, %v3461, %v3465
    %v3467 = vrot.slane %v3126, 2
    %v3468 = vsel %vm2005, %v3463, %v3467
    %v3469 = vrot.slane %v3127, 2
    %v3470 = vsel %vm2005, %v3465, %v3469
    %v3471 = vrot.slane %v3128, 2
    %v3472 = vsel %vm2005, %v3467, %v3471
    %v3473 = vrot.slane %v3129, 2
    %v3474 = vsel %vm2005, %v3469, %v3473
    %v3475 = vrot.slane %v3130, 2
    %v3476 = vsel %vm2005, %v3471, %v3475
    %v3477 = vrot.slane %v3131, 2
    %v3478 = vsel %vm2005, %v3473, %v3477
    %v3479 = vrot.slane %v3132, 2
    %v3480 = vsel %vm2005, %v3475, %v3479
    %v3481 = vrot.slane %v3133, 2
    %v3482 = vsel %vm2005, %v3477, %v3481
    %v3483 = vrot.slane %v3134, 2
    %v3484 = vsel %vm2005, %v3479, %v3483
    %v3485 = vrot.slane %v3135, 2
    %v3486 = vsel %vm2005, %v3481, %v3485
    %v3487 = vrot.slane %v3136, 2
    %v3488 = vsel %vm2005, %v3483, %v3487
    %v3489 = vrot.slane %v3137, 2
    %v3490 = vsel %vm2005, %v3485, %v3489
    %v3491 = vrot.slane %v3138, 2
    %v3492 = vsel %vm2005, %v3487, %v3491
    %v3493 = vrot.slane %v3139, 2
    %v3494 = vsel %vm2005, %v3489, %v3493
    %v3495 = vrot.slane %v3140, 2
    %v3496 = vsel %vm2005, %v3491, %v3495
    %v3497 = vrot.slane %v3141, 2
    %v3498 = vsel %vm2005, %v3493, %v3497
    %v3499 = vrot.slane %v3142, 2
    %v3500 = vsel %vm2005, %v3495, %v3499
    %v3501 = vrot.slane %v3143, 2
    %v3502 = vsel %vm2005, %v3497, %v3501
    %v3503 = vrot.slane %v3144, 2
    %v3504 = vsel %vm2005, %v3499, %v3503
    %v3505 = vrot.slane %v3145, 2
    %v3506 = vsel %vm2005, %v3501, %v3505
    %v3507 = vrot.slane %v3146, 2
    %v3508 = vsel %vm2005, %v3503, %v3507
    %v3509 = vrot.slane %v3147, 2
    %v3510 = vsel %vm2005, %v3505, %v3509
    %v3511 = vrot.slane %v3148, 2
    %v3512 = vsel %vm2005, %v3507, %v3511
    %v3513 = vrot.slane %v3149, 2
    %v3514 = vsel %vm2005, %v3509, %v3513
    %v3515 = vrot.slane %v3150, 2
    %v3516 = vsel %vm2005, %v3511, %v3515
    %v3517 = vrot.slane %v3151, 2
    %v3518 = vsel %vm2005, %v3513, %v3517
    %v3519 = vrot.slane %v3152, 2
    %v3520 = vsel %vm2005, %v3515, %v3519
    %v3521 = vrot.slane %v3153, 2
    %v3522 = vsel %vm2005, %v3517, %v3521
    %v3523 = vrot.slane %v3154, 2
    %v3524 = vsel %vm2005, %v3519, %v3523
    %v3525 = vrot.slane %v3155, 2
    %v3526 = vsel %vm2005, %v3521, %v3525
    %v3527 = vrot.slane %v3156, 2
    %v3528 = vsel %vm2005, %v3523, %v3527
    %v3529 = vrot.slane %v3157, 2
    %v3530 = vsel %vm2005, %v3525, %v3529
    %v3531 = vrot.slane %v3158, 2
    %v3532 = vsel %vm2005, %v3527, %v3531
    %v3533 = vrot.slane %v3159, 2
    %v3534 = vsel %vm2005, %v3529, %v3533
    %v3535 = vrot.slane %v3160, 2
    %v3536 = vsel %vm2005, %v3531, %v3535
    %v3591 = vsel %vm2005, %v3533, 0.0
    %v3592 = vsel %vm2005, %v3535, 0.0
    %v3593 = vmax.f32 %v3377, %v3433
    %v3594 = vmax.f32 %v3378, %v3436
    %v3595 = vmax.f32 %v3379, %v3438
    %v3596 = vmax.f32 %v3380, %v3440
    %v3597 = vmax.f32 %v3381, %v3442
    %v3598 = vmax.f32 %v3382, %v3444
    %v3599 = vmax.f32 %v3383, %v3446
    %v3600 = vmax.f32 %v3384, %v3448
    %v3601 = vmax.f32 %v3385, %v3450
    %v3602 = vmax.f32 %v3386, %v3452
    %v3603 = vmax.f32 %v3387, %v3454
    %v3604 = vmax.f32 %v3388, %v3456
    %v3605 = vmax.f32 %v3389, %v3458
    %v3606 = vmax.f32 %v3390, %v3460
    %v3607 = vmax.f32 %v3391, %v3462
    %v3608 = vmax.f32 %v3392, %v3464
    %v3609 = vmax.f32 %v3393, %v3466
    %v3610 = vmax.f32 %v3394, %v3468
    %v3611 = vmax.f32 %v3395, %v3470
    %v3612 = vmax.f32 %v3396, %v3472
    %v3613 = vmax.f32 %v3397, %v3474
    %v3614 = vmax.f32 %v3398, %v3476
    %v3615 = vmax.f32 %v3399, %v3478
    %v3616 = vmax.f32 %v3400, %v3480
    %v3617 = vmax.f32 %v3401, %v3482
    %v3618 = vmax.f32 %v3402, %v3484
    %v3619 = vmax.f32 %v3403, %v3486
    %v3620 = vmax.f32 %v3404, %v3488
    %v3621 = vmax.f32 %v3405, %v3490
    %v3622 = vmax.f32 %v3406, %v3492
    %v3623 = vmax.f32 %v3407, %v3494
    %v3624 = vmax.f32 %v3408, %v3496
    %v3625 = vmax.f32 %v3409, %v3498
    %v3626 = vmax.f32 %v3410, %v3500
    %v3627 = vmax.f32 %v3411, %v3502
    %v3628 = vmax.f32 %v3412, %v3504
    %v3629 = vmax.f32 %v3413, %v3506
    %v3630 = vmax.f32 %v3414, %v3508
    %v3631 = vmax.f32 %v3415, %v3510
    %v3632 = vmax.f32 %v3416, %v3512
    %v3633 = vmax.f32 %v3417, %v3514
    %v3634 = vmax.f32 %v3418, %v3516
    %v3635 = vmax.f32 %v3419, %v3518
    %v3636 = vmax.f32 %v3420, %v3520
    %v3637 = vmax.f32 %v3421, %v3522
    %v3638 = vmax.f32 %v3422, %v3524
    %v3639 = vmax.f32 %v3423, %v3526
    %v3640 = vmax.f32 %v3424, %v3528
    %v3641 = vmax.f32 %v3425, %v3530
    %v3642 = vmax.f32 %v3426, %v3532
    %v3643 = vmax.f32 %v3427, %v3534
    %v3644 = vmax.f32 %v3428, %v3536
    %v3645 = vmax.f32 %v3429, %v3591
    %v3646 = vmax.f32 %v3430, %v3592
    %v3701 = vrot.slane %v3593, 5
    %v3702 = vrot.slane %v3594, 5
    %v3703 = vrot.slane %v3595, 5
    %v3704 = vsel %vm443, %v3701, %v3703
    %v3705 = vrot.slane %v3596, 5
    %v3706 = vsel %vm443, %v3702, %v3705
    %v3707 = vrot.slane %v3597, 5
    %v3708 = vsel %vm443, %v3703, %v3707
    %v3709 = vrot.slane %v3598, 5
    %v3710 = vsel %vm443, %v3705, %v3709
    %v3711 = vrot.slane %v3599, 5
    %v3712 = vsel %vm443, %v3707, %v3711
    %v3713 = vrot.slane %v3600, 5
    %v3714 = vsel %vm443, %v3709, %v3713
    %v3715 = vrot.slane %v3601, 5
    %v3716 = vsel %vm443, %v3711, %v3715
    %v3717 = vrot.slane %v3602, 5
    %v3718 = vsel %vm443, %v3713, %v3717
    %v3719 = vrot.slane %v3603, 5
    %v3720 = vsel %vm443, %v3715, %v3719
    %v3721 = vrot.slane %v3604, 5
    %v3722 = vsel %vm443, %v3717, %v3721
    %v3723 = vrot.slane %v3605, 5
    %v3724 = vsel %vm443, %v3719, %v3723
    %v3725 = vrot.slane %v3606, 5
    %v3726 = vsel %vm443, %v3721, %v3725
    %v3727 = vrot.slane %v3607, 5
    %v3728 = vsel %vm443, %v3723, %v3727
    %v3729 = vrot.slane %v3608, 5
    %v3730 = vsel %vm443, %v3725, %v3729
    %v3731 = vrot.slane %v3609, 5
    %v3732 = vsel %vm443, %v3727, %v3731
    %v3733 = vrot.slane %v3610, 5
    %v3734 = vsel %vm443, %v3729, %v3733
    %v3735 = vrot.slane %v3611, 5
    %v3736 = vsel %vm443, %v3731, %v3735
    %v3737 = vrot.slane %v3612, 5
    %v3738 = vsel %vm443, %v3733, %v3737
    %v3739 = vrot.slane %v3613, 5
    %v3740 = vsel %vm443, %v3735, %v3739
    %v3741 = vrot.slane %v3614, 5
    %v3742 = vsel %vm443, %v3737, %v3741
    %v3743 = vrot.slane %v3615, 5
    %v3744 = vsel %vm443, %v3739, %v3743
    %v3745 = vrot.slane %v3616, 5
    %v3746 = vsel %vm443, %v3741, %v3745
    %v3747 = vrot.slane %v3617, 5
    %v3748 = vsel %vm443, %v3743, %v3747
    %v3749 = vrot.slane %v3618, 5
    %v3750 = vsel %vm443, %v3745, %v3749
    %v3751 = vrot.slane %v3619, 5
    %v3752 = vsel %vm443, %v3747, %v3751
    %v3753 = vrot.slane %v3620, 5
    %v3754 = vsel %vm443, %v3749, %v3753
    %v3755 = vrot.slane %v3621, 5
    %v3756 = vsel %vm443, %v3751, %v3755
    %v3757 = vrot.slane %v3622, 5
    %v3758 = vsel %vm443, %v3753, %v3757
    %v3759 = vrot.slane %v3623, 5
    %v3760 = vsel %vm443, %v3755, %v3759
    %v3761 = vrot.slane %v3624, 5
    %v3762 = vsel %vm443, %v3757, %v3761
    %v3763 = vrot.slane %v3625, 5
    %v3764 = vsel %vm443, %v3759, %v3763
    %v3765 = vrot.slane %v3626, 5
    %v3766 = vsel %vm443, %v3761, %v3765
    %v3767 = vrot.slane %v3627, 5
    %v3768 = vsel %vm443, %v3763, %v3767
    %v3769 = vrot.slane %v3628, 5
    %v3770 = vsel %vm443, %v3765, %v3769
    %v3771 = vrot.slane %v3629, 5
    %v3772 = vsel %vm443, %v3767, %v3771
    %v3773 = vrot.slane %v3630, 5
    %v3774 = vsel %vm443, %v3769, %v3773
    %v3775 = vrot.slane %v3631, 5
    %v3776 = vsel %vm443, %v3771, %v3775
    %v3777 = vrot.slane %v3632, 5
    %v3778 = vsel %vm443, %v3773, %v3777
    %v3779 = vrot.slane %v3633, 5
    %v3780 = vsel %vm443, %v3775, %v3779
    %v3781 = vrot.slane %v3634, 5
    %v3782 = vsel %vm443, %v3777, %v3781
    %v3783 = vrot.slane %v3635, 5
    %v3784 = vsel %vm443, %v3779, %v3783
    %v3785 = vrot.slane %v3636, 5
    %v3786 = vsel %vm443, %v3781, %v3785
    %v3787 = vrot.slane %v3637, 5
    %v3788 = vsel %vm443, %v3783, %v3787
    %v3789 = vrot.slane %v3638, 5
    %v3790 = vsel %vm443, %v3785, %v3789
    %v3791 = vrot.slane %v3639, 5
    %v3792 = vsel %vm443, %v3787, %v3791
    %v3793 = vrot.slane %v3640, 5
    %v3794 = vsel %vm443, %v3789, %v3793
    %v3795 = vrot.slane %v3641, 5
    %v3796 = vsel %vm443, %v3791, %v3795
    %v3797 = vrot.slane %v3642, 5
    %v3798 = vsel %vm443, %v3793, %v3797
    %v3799 = vrot.slane %v3643, 5
    %v3800 = vsel %vm443, %v3795, %v3799
    %v3801 = vrot.slane %v3644, 5
    %v3802 = vsel %vm443, %v3797, %v3801
    %v3803 = vrot.slane %v3645, 5
    %v3804 = vsel %vm443, %v3799, %v3803
    %v3805 = vrot.slane %v3646, 5
    %v3806 = vsel %vm443, %v3801, %v3805
    %v3861 = vsel %vm443, 0.0, %v3701
    %v3862 = vsel %vm443, 0.0, %v3702
    %v3863 = vsel %vm305, 0.0, %v3861
    %v3864 = vsel %vm305, 0.0, %v3862
    %v3865 = vsel %vm306, 0.0, %v3704
    %v3866 = vsel %vm306, 0.0, %v3706
    %v3867 = vsel %vm307, 0.0, %v3708
    %v3868 = vsel %vm307, 0.0, %v3710
    %v3869 = vsel %vm308, 0.0, %v3712
    %v3870 = vsel %vm308, 0.0, %v3714
    %v3871 = vsel %vm309, 0.0, %v3716
    %v3872 = vsel %vm309, 0.0, %v3718
    %v3873 = vsel %vm310, 0.0, %v3720
    %v3874 = vsel %vm310, 0.0, %v3722
    %v3875 = vsel %vm311, 0.0, %v3724
    %v3876 = vsel %vm311, 0.0, %v3726
    %v3877 = vsel %vm312, 0.0, %v3728
    %v3878 = vsel %vm312, 0.0, %v3730
    %v3879 = vsel %vm313, 0.0, %v3732
    %v3880 = vsel %vm313, 0.0, %v3734
    %v3881 = vsel %vm314, 0.0, %v3736
    %v3882 = vsel %vm314, 0.0, %v3738
    %v3883 = vsel %vm315, 0.0, %v3740
    %v3884 = vsel %vm315, 0.0, %v3742
    %v3885 = vsel %vm316, 0.0, %v3744
    %v3886 = vsel %vm316, 0.0, %v3746
    %v3887 = vsel %vm317, 0.0, %v3748
    %v3888 = vsel %vm317, 0.0, %v3750
    %v3889 = vsel %vm318, 0.0, %v3752
    %v3890 = vsel %vm318, 0.0, %v3754
    %v3891 = vsel %vm319, 0.0, %v3756
    %v3892 = vsel %vm319, 0.0, %v3758
    %v3893 = vsel %vm320, 0.0, %v3760
    %v3894 = vsel %vm320, 0.0, %v3762
    %v3895 = vsel %vm321, 0.0, %v3764
    %v3896 = vsel %vm321, 0.0, %v3766
    %v3897 = vsel %vm322, 0.0, %v3768
    %v3898 = vsel %vm322, 0.0, %v3770
    %v3899 = vsel %vm323, 0.0, %v3772
    %v3900 = vsel %vm323, 0.0, %v3774
    %v3901 = vsel %vm324, 0.0, %v3776
    %v3902 = vsel %vm324, 0.0, %v3778
    %v3903 = vsel %vm325, 0.0, %v3780
    %v3904 = vsel %vm325, 0.0, %v3782
    %v3905 = vsel %vm326, 0.0, %v3784
    %v3906 = vsel %vm326, 0.0, %v3786
    %v3907 = vsel %vm327, 0.0, %v3788
    %v3908 = vsel %vm327, 0.0, %v3790
    %v3909 = vsel %vm1453, 0.0, %v3792
    %v3910 = vsel %vm1453, 0.0, %v3794
    %v3911 = vsel %vm1454, 0.0, %v3796
    %v3912 = vsel %vm1454, 0.0, %v3798
    %v3913 = vsel %vm1455, 0.0, %v3800
    %v3914 = vsel %vm1455, 0.0, %v3802
    %v3915 = vsel %vm1456, 0.0, %v3804
    %v3916 = vsel %vm1456, 0.0, %v3806
    %vm3917 = vcmp.eq.s32.totalorder %v47, 15
    %vm3918 = vcmp.eq.s32.totalorder %v48, 15
    %vm3919 = vcmp.eq.s32.totalorder %v49, 15
    %vm3920 = vcmp.eq.s32.totalorder %v50, 15
    %vm3921 = vcmp.eq.s32.totalorder %v51, 15
    %vm3922 = vcmp.eq.s32.totalorder %v52, 15
    %vm3923 = vcmp.eq.s32.totalorder %v53, 15
    %vm3924 = vcmp.eq.s32.totalorder %v54, 15
    %vm3925 = vcmp.eq.s32.totalorder %v55, 15
    %vm3926 = vcmp.eq.s32.totalorder %v56, 15
    %vm3927 = vcmp.eq.s32.totalorder %v57, 15
    %vm3928 = vcmp.eq.s32.totalorder %v58, 15
    %vm3929 = vcmp.eq.s32.totalorder %v59, 15
    %vm3930 = vcmp.eq.s32.totalorder %v60, 15
    %vm3931 = vcmp.eq.s32.totalorder %v61, 15
    %vm3932 = vcmp.eq.s32.totalorder %v62, 15
    %vm3933 = vcmp.eq.s32.totalorder %v63, 15
    %vm3934 = vcmp.eq.s32.totalorder %v64, 15
    %vm3935 = vcmp.eq.s32.totalorder %v65, 15
    %vm3936 = vcmp.eq.s32.totalorder %v66, 15
    %vm3937 = vcmp.eq.s32.totalorder %v67, 15
    %vm3938 = vcmp.eq.s32.totalorder %v68, 15
    %vm3939 = vcmp.eq.s32.totalorder %v69, 15
    %vm3940 = vcmp.eq.s32.totalorder %v70, 15
    %vm3941 = vcmp.eq.s32.totalorder %v71, 15
    %vm3942 = vcmp.eq.s32.totalorder %v72, 15
    %vm3943 = vcmp.eq.s32.totalorder %v73, 15
    %vm3944 = vcmask 1044480
    %v3945 = vrot.slane %v3593, 3
    %v3946 = vrot.slane %v3595, 3
    %v3947 = vsel %vm3944, %v3945, %v3946
    %v3948 = vrot.slane %v3594, 3
    %v3949 = vrot.slane %v3596, 3
    %v3950 = vsel %vm3944, %v3948, %v3949
    %v3951 = vrot.slane %v3597, 3
    %v3952 = vsel %vm3944, %v3946, %v3951
    %v3953 = vrot.slane %v3598, 3
    %v3954 = vsel %vm3944, %v3949, %v3953
    %v3955 = vrot.slane %v3599, 3
    %v3956 = vsel %vm3944, %v3951, %v3955
    %v3957 = vrot.slane %v3600, 3
    %v3958 = vsel %vm3944, %v3953, %v3957
    %v3959 = vrot.slane %v3601, 3
    %v3960 = vsel %vm3944, %v3955, %v3959
    %v3961 = vrot.slane %v3602, 3
    %v3962 = vsel %vm3944, %v3957, %v3961
    %v3963 = vrot.slane %v3603, 3
    %v3964 = vsel %vm3944, %v3959, %v3963
    %v3965 = vrot.slane %v3604, 3
    %v3966 = vsel %vm3944, %v3961, %v3965
    %v3967 = vrot.slane %v3605, 3
    %v3968 = vsel %vm3944, %v3963, %v3967
    %v3969 = vrot.slane %v3606, 3
    %v3970 = vsel %vm3944, %v3965, %v3969
    %v3971 = vrot.slane %v3607, 3
    %v3972 = vsel %vm3944, %v3967, %v3971
    %v3973 = vrot.slane %v3608, 3
    %v3974 = vsel %vm3944, %v3969, %v3973
    %v3975 = vrot.slane %v3609, 3
    %v3976 = vsel %vm3944, %v3971, %v3975
    %v3977 = vrot.slane %v3610, 3
    %v3978 = vsel %vm3944, %v3973, %v3977
    %v3979 = vrot.slane %v3611, 3
    %v3980 = vsel %vm3944, %v3975, %v3979
    %v3981 = vrot.slane %v3612, 3
    %v3982 = vsel %vm3944, %v3977, %v3981
    %v3983 = vrot.slane %v3613, 3
    %v3984 = vsel %vm3944, %v3979, %v3983
    %v3985 = vrot.slane %v3614, 3
    %v3986 = vsel %vm3944, %v3981, %v3985
    %v3987 = vrot.slane %v3615, 3
    %v3988 = vsel %vm3944, %v3983, %v3987
    %v3989 = vrot.slane %v3616, 3
    %v3990 = vsel %vm3944, %v3985, %v3989
    %v3991 = vrot.slane %v3617, 3
    %v3992 = vsel %vm3944, %v3987, %v3991
    %v3993 = vrot.slane %v3618, 3
    %v3994 = vsel %vm3944, %v3989, %v3993
    %v3995 = vrot.slane %v3619, 3
    %v3996 = vsel %vm3944, %v3991, %v3995
    %v3997 = vrot.slane %v3620, 3
    %v3998 = vsel %vm3944, %v3993, %v3997
    %v3999 = vrot.slane %v3621, 3
    %v4000 = vsel %vm3944, %v3995, %v3999
    %v4001 = vrot.slane %v3622, 3
    %v4002 = vsel %vm3944, %v3997, %v4001
    %v4003 = vrot.slane %v3623, 3
    %v4004 = vsel %vm3944, %v3999, %v4003
    %v4005 = vrot.slane %v3624, 3
    %v4006 = vsel %vm3944, %v4001, %v4005
    %v4007 = vrot.slane %v3625, 3
    %v4008 = vsel %vm3944, %v4003, %v4007
    %v4009 = vrot.slane %v3626, 3
    %v4010 = vsel %vm3944, %v4005, %v4009
    %v4011 = vrot.slane %v3627, 3
    %v4012 = vsel %vm3944, %v4007, %v4011
    %v4013 = vrot.slane %v3628, 3
    %v4014 = vsel %vm3944, %v4009, %v4013
    %v4015 = vrot.slane %v3629, 3
    %v4016 = vsel %vm3944, %v4011, %v4015
    %v4017 = vrot.slane %v3630, 3
    %v4018 = vsel %vm3944, %v4013, %v4017
    %v4019 = vrot.slane %v3631, 3
    %v4020 = vsel %vm3944, %v4015, %v4019
    %v4021 = vrot.slane %v3632, 3
    %v4022 = vsel %vm3944, %v4017, %v4021
    %v4023 = vrot.slane %v3633, 3
    %v4024 = vsel %vm3944, %v4019, %v4023
    %v4025 = vrot.slane %v3634, 3
    %v4026 = vsel %vm3944, %v4021, %v4025
    %v4027 = vrot.slane %v3635, 3
    %v4028 = vsel %vm3944, %v4023, %v4027
    %v4029 = vrot.slane %v3636, 3
    %v4030 = vsel %vm3944, %v4025, %v4029
    %v4031 = vrot.slane %v3637, 3
    %v4032 = vsel %vm3944, %v4027, %v4031
    %v4033 = vrot.slane %v3638, 3
    %v4034 = vsel %vm3944, %v4029, %v4033
    %v4035 = vrot.slane %v3639, 3
    %v4036 = vsel %vm3944, %v4031, %v4035
    %v4037 = vrot.slane %v3640, 3
    %v4038 = vsel %vm3944, %v4033, %v4037
    %v4039 = vrot.slane %v3641, 3
    %v4040 = vsel %vm3944, %v4035, %v4039
    %v4041 = vrot.slane %v3642, 3
    %v4042 = vsel %vm3944, %v4037, %v4041
    %v4043 = vrot.slane %v3643, 3
    %v4044 = vsel %vm3944, %v4039, %v4043
    %v4045 = vrot.slane %v3644, 3
    %v4046 = vsel %vm3944, %v4041, %v4045
    %v4047 = vrot.slane %v3645, 3
    %v4048 = vsel %vm3944, %v4043, %v4047
    %v4049 = vrot.slane %v3646, 3
    %v4050 = vsel %vm3944, %v4045, %v4049
    %v4105 = vsel %vm3944, %v4047, 0.0
    %v4106 = vsel %vm3944, %v4049, 0.0
    %v4107 = vsel %vm3917, 1, 0
    %v4108 = vsel %vm3918, 1, 0
    %v4109 = vsel %vm3919, 1, 0
    %v4110 = vsel %vm3920, 1, 0
    %v4111 = vsel %vm3921, 1, 0
    %v4112 = vsel %vm3922, 1, 0
    %v4113 = vsel %vm3923, 1, 0
    %v4114 = vsel %vm3924, 1, 0
    %v4115 = vsel %vm3925, 1, 0
    %v4116 = vsel %vm3926, 1, 0
    %v4117 = vsel %vm3927, 1, 0
    %v4118 = vsel %vm3928, 1, 0
    %v4119 = vsel %vm3929, 1, 0
    %v4120 = vsel %vm3930, 1, 0
    %v4121 = vsel %vm3931, 1, 0
    %v4122 = vsel %vm3932, 1, 0
    %v4123 = vsel %vm3933, 1, 0
    %v4124 = vsel %vm3934, 1, 0
    %v4125 = vsel %vm3935, 1, 0
    %v4126 = vsel %vm3936, 1, 0
    %v4127 = vsel %vm3937, 1, 0
    %v4128 = vsel %vm3938, 1, 0
    %v4129 = vsel %vm3939, 1, 0
    %v4130 = vsel %vm3940, 1, 0
    %v4131 = vsel %vm3941, 1, 0
    %v4132 = vsel %vm3942, 1, 0
    %v4133 = vsel %vm3943, 1, 0
    %4134 = vset.pattern.permute.xlu0 0
    %4135 = vperm.xlu0 %4134, %v4107
    %v4136 = vpop.permute.xlu0 %4135
    %4137 = vset.pattern.permute.xlu0 0
    %4138 = vperm.xlu0 %4137, %v4108
    %v4139 = vpop.permute.xlu0 %4138
    %4140 = vset.pattern.permute.xlu0 0
    %4141 = vperm.xlu0 %4140, %v4109
    %v4142 = vpop.permute.xlu0 %4141
    %4143 = vset.pattern.permute.xlu0 0
    %4144 = vperm.xlu0 %4143, %v4110
    %v4145 = vpop.permute.xlu0 %4144
    %4146 = vset.pattern.permute.xlu0 0
    %4147 = vperm.xlu0 %4146, %v4111
    %v4148 = vpop.permute.xlu0 %4147
    %4149 = vset.pattern.permute.xlu0 0
    %4150 = vperm.xlu0 %4149, %v4112
    %v4151 = vpop.permute.xlu0 %4150
    %4152 = vset.pattern.permute.xlu0 0
    %4153 = vperm.xlu0 %4152, %v4113
    %v4154 = vpop.permute.xlu0 %4153
    %4155 = vset.pattern.permute.xlu0 0
    %4156 = vperm.xlu0 %4155, %v4114
    %v4157 = vpop.permute.xlu0 %4156
    %4158 = vset.pattern.permute.xlu0 0
    %4159 = vperm.xlu0 %4158, %v4115
    %v4160 = vpop.permute.xlu0 %4159
    %4161 = vset.pattern.permute.xlu0 0
    %4162 = vperm.xlu0 %4161, %v4116
    %v4163 = vpop.permute.xlu0 %4162
    %4164 = vset.pattern.permute.xlu0 0
    %4165 = vperm.xlu0 %4164, %v4117
    %v4166 = vpop.permute.xlu0 %4165
    %4167 = vset.pattern.permute.xlu0 0
    %4168 = vperm.xlu0 %4167, %v4118
    %v4169 = vpop.permute.xlu0 %4168
    %4170 = vset.pattern.permute.xlu0 0
    %4171 = vperm.xlu0 %4170, %v4119
    %v4172 = vpop.permute.xlu0 %4171
    %4173 = vset.pattern.permute.xlu0 0
    %4174 = vperm.xlu0 %4173, %v4120
    %v4175 = vpop.permute.xlu0 %4174
    %4176 = vset.pattern.permute.xlu0 0
    %4177 = vperm.xlu0 %4176, %v4121
    %v4178 = vpop.permute.xlu0 %4177
    %4179 = vset.pattern.permute.xlu0 0
    %4180 = vperm.xlu0 %4179, %v4122
    %v4181 = vpop.permute.xlu0 %4180
    %4182 = vset.pattern.permute.xlu0 0
    %4183 = vperm.xlu0 %4182, %v4123
    %v4184 = vpop.permute.xlu0 %4183
    %4185 = vset.pattern.permute.xlu0 0
    %4186 = vperm.xlu0 %4185, %v4124
    %v4187 = vpop.permute.xlu0 %4186
    %4188 = vset.pattern.permute.xlu0 0
    %4189 = vperm.xlu0 %4188, %v4125
    %v4190 = vpop.permute.xlu0 %4189
    %4191 = vset.pattern.permute.xlu0 0
    %4192 = vperm.xlu0 %4191, %v4126
    %v4193 = vpop.permute.xlu0 %4192
    %4194 = vset.pattern.permute.xlu0 0
    %4195 = vperm.xlu0 %4194, %v4127
    %v4196 = vpop.permute.xlu0 %4195
    %4197 = vset.pattern.permute.xlu0 0
    %4198 = vperm.xlu0 %4197, %v4128
    %v4199 = vpop.permute.xlu0 %4198
    %4200 = vset.pattern.permute.xlu0 0
    %4201 = vperm.xlu0 %4200, %v4129
    %v4202 = vpop.permute.xlu0 %4201
    %4203 = vset.pattern.permute.xlu0 0
    %4204 = vperm.xlu0 %4203, %v4130
    %v4205 = vpop.permute.xlu0 %4204
    %4206 = vset.pattern.permute.xlu0 0
    %4207 = vperm.xlu0 %4206, %v4131
    %v4208 = vpop.permute.xlu0 %4207
    %4209 = vset.pattern.permute.xlu0 0
    %4210 = vperm.xlu0 %4209, %v4132
    %v4211 = vpop.permute.xlu0 %4210
    %4212 = vset.pattern.permute.xlu0 0
    %4213 = vperm.xlu0 %4212, %v4133
    %v4214 = vpop.permute.xlu0 %4213
    %vm4215 = vcmp.eq.s32.totalorder %v4136, 1
    %vm4216 = vcmp.eq.s32.totalorder %v4139, 1
    %vm4217 = vcmp.eq.s32.totalorder %v4142, 1
    %vm4218 = vcmp.eq.s32.totalorder %v4145, 1
    %vm4219 = vcmp.eq.s32.totalorder %v4148, 1
    %vm4220 = vcmp.eq.s32.totalorder %v4151, 1
    %vm4221 = vcmp.eq.s32.totalorder %v4154, 1
    %vm4222 = vcmp.eq.s32.totalorder %v4157, 1
    %vm4223 = vcmp.eq.s32.totalorder %v4160, 1
    %vm4224 = vcmp.eq.s32.totalorder %v4163, 1
    %vm4225 = vcmp.eq.s32.totalorder %v4166, 1
    %vm4226 = vcmp.eq.s32.totalorder %v4169, 1
    %vm4227 = vcmp.eq.s32.totalorder %v4172, 1
    %vm4228 = vcmp.eq.s32.totalorder %v4175, 1
    %vm4229 = vcmp.eq.s32.totalorder %v4178, 1
    %vm4230 = vcmp.eq.s32.totalorder %v4181, 1
    %vm4231 = vcmp.eq.s32.totalorder %v4184, 1
    %vm4232 = vcmp.eq.s32.totalorder %v4187, 1
    %vm4233 = vcmp.eq.s32.totalorder %v4190, 1
    %vm4234 = vcmp.eq.s32.totalorder %v4193, 1
    %vm4235 = vcmp.eq.s32.totalorder %v4196, 1
    %vm4236 = vcmp.eq.s32.totalorder %v4199, 1
    %vm4237 = vcmp.eq.s32.totalorder %v4202, 1
    %vm4238 = vcmp.eq.s32.totalorder %v4205, 1
    %vm4239 = vcmp.eq.s32.totalorder %v4208, 1
    %vm4240 = vcmp.eq.s32.totalorder %v4211, 1
    %vm4241 = vcmp.eq.s32.totalorder %v4214, 1
    %v4242 = vsel %vm4215, 0.0, %v3947
    %v4243 = vsel %vm4215, 0.0, %v3950
    %v4244 = vsel %vm4216, 0.0, %v3952
    %v4245 = vsel %vm4216, 0.0, %v3954
    %v4246 = vsel %vm4217, 0.0, %v3956
    %v4247 = vsel %vm4217, 0.0, %v3958
    %v4248 = vsel %vm4218, 0.0, %v3960
    %v4249 = vsel %vm4218, 0.0, %v3962
    %v4250 = vsel %vm4219, 0.0, %v3964
    %v4251 = vsel %vm4219, 0.0, %v3966
    %v4252 = vsel %vm4220, 0.0, %v3968
    %v4253 = vsel %vm4220, 0.0, %v3970
    %v4254 = vsel %vm4221, 0.0, %v3972
    %v4255 = vsel %vm4221, 0.0, %v3974
    %v4256 = vsel %vm4222, 0.0, %v3976
    %v4257 = vsel %vm4222, 0.0, %v3978
    %v4258 = vsel %vm4223, 0.0, %v3980
    %v4259 = vsel %vm4223, 0.0, %v3982
    %v4260 = vsel %vm4224, 0.0, %v3984
    %v4261 = vsel %vm4224, 0.0, %v3986
    %v4262 = vsel %vm4225, 0.0, %v3988
    %v4263 = vsel %vm4225, 0.0, %v3990
    %v4264 = vsel %vm4226, 0.0, %v3992
    %v4265 = vsel %vm4226, 0.0, %v3994
    %v4266 = vsel %vm4227, 0.0, %v3996
    %v4267 = vsel %vm4227, 0.0, %v3998
    %v4268 = vsel %vm4228, 0.0, %v4000
    %v4269 = vsel %vm4228, 0.0, %v4002
    %v4270 = vsel %vm4229, 0.0, %v4004
    %v4271 = vsel %vm4229, 0.0, %v4006
    %v4272 = vsel %vm4230, 0.0, %v4008
    %v4273 = vsel %vm4230, 0.0, %v4010
    %v4274 = vsel %vm4231, 0.0, %v4012
    %v4275 = vsel %vm4231, 0.0, %v4014
    %v4276 = vsel %vm4232, 0.0, %v4016
    %v4277 = vsel %vm4232, 0.0, %v4018
    %v4278 = vsel %vm4233, 0.0, %v4020
    %v4279 = vsel %vm4233, 0.0, %v4022
    %v4280 = vsel %vm4234, 0.0, %v4024
    %v4281 = vsel %vm4234, 0.0, %v4026
    %v4282 = vsel %vm4235, 0.0, %v4028
    %v4283 = vsel %vm4235, 0.0, %v4030
    %v4284 = vsel %vm4236, 0.0, %v4032
    %v4285 = vsel %vm4236, 0.0, %v4034
    %v4286 = vsel %vm4237, 0.0, %v4036
    %v4287 = vsel %vm4237, 0.0, %v4038
    %v4288 = vsel %vm4238, 0.0, %v4040
    %v4289 = vsel %vm4238, 0.0, %v4042
    %v4290 = vsel %vm4239, 0.0, %v4044
    %v4291 = vsel %vm4239, 0.0, %v4046
    %v4292 = vsel %vm4240, 0.0, %v4048
    %v4293 = vsel %vm4240, 0.0, %v4050
    %v4294 = vsel %vm4241, 0.0, %v4105
    %v4295 = vsel %vm4241, 0.0, %v4106
    %4296 = vrot.lane.b32.xlu0 %v3593, 64
    %v4297 = vpop.permute.xlu0 %4296
    %4298 = vrot.lane.b32.xlu0 %v3594, 64
    %v4299 = vpop.permute.xlu0 %4298
    %4300 = vrot.lane.b32.xlu0 %v3595, 64
    %v4301 = vpop.permute.xlu0 %4300
    %4302 = vrot.lane.b32.xlu0 %v3596, 64
    %v4303 = vpop.permute.xlu0 %4302
    %4304 = vrot.lane.b32.xlu0 %v3597, 64
    %v4305 = vpop.permute.xlu0 %4304
    %4306 = vrot.lane.b32.xlu0 %v3598, 64
    %v4307 = vpop.permute.xlu0 %4306
    %4308 = vrot.lane.b32.xlu0 %v3599, 64
    %v4309 = vpop.permute.xlu0 %4308
    %4310 = vrot.lane.b32.xlu0 %v3600, 64
    %v4311 = vpop.permute.xlu0 %4310
    %4312 = vrot.lane.b32.xlu0 %v3601, 64
    %v4313 = vpop.permute.xlu0 %4312
    %4314 = vrot.lane.b32.xlu0 %v3602, 64
    %v4315 = vpop.permute.xlu0 %4314
    %4316 = vrot.lane.b32.xlu0 %v3603, 64
    %v4317 = vpop.permute.xlu0 %4316
    %4318 = vrot.lane.b32.xlu0 %v3604, 64
    %v4319 = vpop.permute.xlu0 %4318
    %4320 = vrot.lane.b32.xlu0 %v3605, 64
    %v4321 = vpop.permute.xlu0 %4320
    %4322 = vrot.lane.b32.xlu0 %v3606, 64
    %v4323 = vpop.permute.xlu0 %4322
    %4324 = vrot.lane.b32.xlu0 %v3607, 64
    %v4325 = vpop.permute.xlu0 %4324
    %4326 = vrot.lane.b32.xlu0 %v3608, 64
    %v4327 = vpop.permute.xlu0 %4326
    %4328 = vrot.lane.b32.xlu0 %v3609, 64
    %v4329 = vpop.permute.xlu0 %4328
    %4330 = vrot.lane.b32.xlu0 %v3610, 64
    %v4331 = vpop.permute.xlu0 %4330
    %4332 = vrot.lane.b32.xlu0 %v3611, 64
    %v4333 = vpop.permute.xlu0 %4332
    %4334 = vrot.lane.b32.xlu0 %v3612, 64
    %v4335 = vpop.permute.xlu0 %4334
    %4336 = vrot.lane.b32.xlu0 %v3613, 64
    %v4337 = vpop.permute.xlu0 %4336
    %4338 = vrot.lane.b32.xlu0 %v3614, 64
    %v4339 = vpop.permute.xlu0 %4338
    %4340 = vrot.lane.b32.xlu0 %v3615, 64
    %v4341 = vpop.permute.xlu0 %4340
    %4342 = vrot.lane.b32.xlu0 %v3616, 64
    %v4343 = vpop.permute.xlu0 %4342
    %4344 = vrot.lane.b32.xlu0 %v3617, 64
    %v4345 = vpop.permute.xlu0 %4344
    %4346 = vrot.lane.b32.xlu0 %v3618, 64
    %v4347 = vpop.permute.xlu0 %4346
    %4348 = vrot.lane.b32.xlu0 %v3619, 64
    %v4349 = vpop.permute.xlu0 %4348
    %4350 = vrot.lane.b32.xlu0 %v3620, 64
    %v4351 = vpop.permute.xlu0 %4350
    %4352 = vrot.lane.b32.xlu0 %v3621, 64
    %v4353 = vpop.permute.xlu0 %4352
    %4354 = vrot.lane.b32.xlu0 %v3622, 64
    %v4355 = vpop.permute.xlu0 %4354
    %4356 = vrot.lane.b32.xlu0 %v3623, 64
    %v4357 = vpop.permute.xlu0 %4356
    %4358 = vrot.lane.b32.xlu0 %v3624, 64
    %v4359 = vpop.permute.xlu0 %4358
    %4360 = vrot.lane.b32.xlu0 %v3625, 64
    %v4361 = vpop.permute.xlu0 %4360
    %4362 = vrot.lane.b32.xlu0 %v3626, 64
    %v4363 = vpop.permute.xlu0 %4362
    %4364 = vrot.lane.b32.xlu0 %v3627, 64
    %v4365 = vpop.permute.xlu0 %4364
    %4366 = vrot.lane.b32.xlu0 %v3628, 64
    %v4367 = vpop.permute.xlu0 %4366
    %4368 = vrot.lane.b32.xlu0 %v3629, 64
    %v4369 = vpop.permute.xlu0 %4368
    %4370 = vrot.lane.b32.xlu0 %v3630, 64
    %v4371 = vpop.permute.xlu0 %4370
    %4372 = vrot.lane.b32.xlu0 %v3631, 64
    %v4373 = vpop.permute.xlu0 %4372
    %4374 = vrot.lane.b32.xlu0 %v3632, 64
    %v4375 = vpop.permute.xlu0 %4374
    %4376 = vrot.lane.b32.xlu0 %v3633, 64
    %v4377 = vpop.permute.xlu0 %4376
    %4378 = vrot.lane.b32.xlu0 %v3634, 64
    %v4379 = vpop.permute.xlu0 %4378
    %4380 = vrot.lane.b32.xlu0 %v3635, 64
    %v4381 = vpop.permute.xlu0 %4380
    %4382 = vrot.lane.b32.xlu0 %v3636, 64
    %v4383 = vpop.permute.xlu0 %4382
    %4384 = vrot.lane.b32.xlu0 %v3637, 64
    %v4385 = vpop.permute.xlu0 %4384
    %4386 = vrot.lane.b32.xlu0 %v3638, 64
    %v4387 = vpop.permute.xlu0 %4386
    %4388 = vrot.lane.b32.xlu0 %v3639, 64
    %v4389 = vpop.permute.xlu0 %4388
    %4390 = vrot.lane.b32.xlu0 %v3640, 64
    %v4391 = vpop.permute.xlu0 %4390
    %4392 = vrot.lane.b32.xlu0 %v3641, 64
    %v4393 = vpop.permute.xlu0 %4392
    %4394 = vrot.lane.b32.xlu0 %v3642, 64
    %v4395 = vpop.permute.xlu0 %4394
    %4396 = vrot.lane.b32.xlu0 %v3643, 64
    %v4397 = vpop.permute.xlu0 %4396
    %4398 = vrot.lane.b32.xlu0 %v3644, 64
    %v4399 = vpop.permute.xlu0 %4398
    %4400 = vrot.lane.b32.xlu0 %v3645, 64
    %v4401 = vpop.permute.xlu0 %4400
    %4402 = vrot.lane.b32.xlu0 %v3646, 64
    %v4403 = vpop.permute.xlu0 %4402
    %v4404 = vsel %vm768, %v4297, %v4299
    %v4405 = vsel %vm768, %v4301, %v4303
    %v4406 = vsel %vm768, %v4305, %v4307
    %v4407 = vsel %vm768, %v4309, %v4311
    %v4408 = vsel %vm768, %v4313, %v4315
    %v4409 = vsel %vm768, %v4317, %v4319
    %v4410 = vsel %vm768, %v4321, %v4323
    %v4411 = vsel %vm768, %v4325, %v4327
    %v4412 = vsel %vm768, %v4329, %v4331
    %v4413 = vsel %vm768, %v4333, %v4335
    %v4414 = vsel %vm768, %v4337, %v4339
    %v4415 = vsel %vm768, %v4341, %v4343
    %v4416 = vsel %vm768, %v4345, %v4347
    %v4417 = vsel %vm768, %v4349, %v4351
    %v4418 = vsel %vm768, %v4353, %v4355
    %v4419 = vsel %vm768, %v4357, %v4359
    %v4420 = vsel %vm768, %v4361, %v4363
    %v4421 = vsel %vm768, %v4365, %v4367
    %v4422 = vsel %vm768, %v4369, %v4371
    %v4423 = vsel %vm768, %v4373, %v4375
    %v4424 = vsel %vm768, %v4377, %v4379
    %v4425 = vsel %vm768, %v4381, %v4383
    %v4426 = vsel %vm768, %v4385, %v4387
    %v4427 = vsel %vm768, %v4389, %v4391
    %v4428 = vsel %vm768, %v4393, %v4395
    %v4429 = vsel %vm768, %v4397, %v4399
    %v4430 = vsel %vm768, %v4401, %v4403
    %v4485 = vsel %vm768, %v3864, %v4297
    %v4486 = vsel %vm768, %v3866, %v4301
    %v4487 = vsel %vm768, %v3868, %v4305
    %v4488 = vsel %vm768, %v3870, %v4309
    %v4489 = vsel %vm768, %v3872, %v4313
    %v4490 = vsel %vm768, %v3874, %v4317
    %v4491 = vsel %vm768, %v3876, %v4321
    %v4492 = vsel %vm768, %v3878, %v4325
    %v4493 = vsel %vm768, %v3880, %v4329
    %v4494 = vsel %vm768, %v3882, %v4333
    %v4495 = vsel %vm768, %v3884, %v4337
    %v4496 = vsel %vm768, %v3886, %v4341
    %v4497 = vsel %vm768, %v3888, %v4345
    %v4498 = vsel %vm768, %v3890, %v4349
    %v4499 = vsel %vm768, %v3892, %v4353
    %v4500 = vsel %vm768, %v3894, %v4357
    %v4501 = vsel %vm768, %v3896, %v4361
    %v4502 = vsel %vm768, %v3898, %v4365
    %v4503 = vsel %vm768, %v3900, %v4369
    %v4504 = vsel %vm768, %v3902, %v4373
    %v4505 = vsel %vm768, %v3904, %v4377
    %v4506 = vsel %vm768, %v3906, %v4381
    %v4507 = vsel %vm768, %v3908, %v4385
    %v4508 = vsel %vm768, %v3910, %v4389
    %v4509 = vsel %vm768, %v3912, %v4393
    %v4510 = vsel %vm768, %v3914, %v4397
    %v4511 = vsel %vm768, %v3916, %v4401
    %v4512 = vld [vmem:[%s6] sm:$0xff]
    %v4513 = vld [vmem:[%s6 + $0x8] sm:$0xff]
    %v4514 = vld [vmem:[%s6 + $0x10] sm:$0xff]
    %v4515 = vld [vmem:[%s6 + $0x18] sm:$0xff]
    %v4516 = vld [vmem:[%s6 + $0x20] sm:$0xff]
    %v4517 = vld [vmem:[%s6 + $0x28] sm:$0xff]
    %v4518 = vld [vmem:[%s6 + $0x30] sm:$0xff]
    %v4519 = vld [vmem:[%s6 + $0x38] sm:$0xff]
    %v4520 = vld [vmem:[%s6 + $0x40] sm:$0xff]
    %v4521 = vld [vmem:[%s6 + $0x48] sm:$0xff]
    %v4522 = vld [vmem:[%s6 + $0x50] sm:$0xff]
    %v4523 = vld [vmem:[%s6 + $0x58] sm:$0xff]
    %v4524 = vld [vmem:[%s6 + $0x60] sm:$0xff]
    %v4525 = vld [vmem:[%s6 + $0x68] sm:$0xff]
    %v4526 = vld [vmem:[%s6 + $0x70] sm:$0xff]
    %v4527 = vld [vmem:[%s6 + $0x78] sm:$0xff]
    %v4528 = vld [vmem:[%s6 + $0x80] sm:$0xff]
    %v4529 = vld [vmem:[%s6 + $0x88] sm:$0xff]
    %v4530 = vld [vmem:[%s6 + $0x90] sm:$0xff]
    %v4531 = vld [vmem:[%s6 + $0x98] sm:$0xff]
    %v4532 = vld [vmem:[%s6 + $0xa0] sm:$0xff]
    %v4533 = vld [vmem:[%s6 + $0xa8] sm:$0xff]
    %v4534 = vld [vmem:[%s6 + $0xb0] sm:$0xff]
    %v4535 = vld [vmem:[%s6 + $0xb8] sm:$0xff]
    %v4536 = vld [vmem:[%s6 + $0xc0] sm:$0xff]
    %v4537 = vld [vmem:[%s6 + $0xc8] sm:$0xff]
    %v4538 = vld [vmem:[%s6 + $0xd0] sm:$0xff]
    %v4539 = vld [vmem:[%s6 + $0xd8] sm:$0xff]
    %v4540 = vld [vmem:[%s6 + $0xe0] sm:$0xff]
    %v4541 = vld [vmem:[%s6 + $0xe8] sm:$0xff]
    %v4542 = vld [vmem:[%s6 + $0xf0] sm:$0xff]
    %v4543 = vld [vmem:[%s6 + $0xf8] sm:$0xff]
    %v4544 = vld [vmem:[%s6 + $0x100] sm:$0xff]
    %v4545 = vld [vmem:[%s6 + $0x108] sm:$0xff]
    %v4546 = vld [vmem:[%s6 + $0x110] sm:$0xff]
    %v4547 = vld [vmem:[%s6 + $0x118] sm:$0xff]
    %v4548 = vld [vmem:[%s6 + $0x120] sm:$0xff]
    %v4549 = vld [vmem:[%s6 + $0x128] sm:$0xff]
    %v4550 = vld [vmem:[%s6 + $0x130] sm:$0xff]
    %v4551 = vld [vmem:[%s6 + $0x138] sm:$0xff]
    %v4552 = vld [vmem:[%s6 + $0x140] sm:$0xff]
    %v4553 = vld [vmem:[%s6 + $0x148] sm:$0xff]
    %v4554 = vld [vmem:[%s6 + $0x150] sm:$0xff]
    %v4555 = vld [vmem:[%s6 + $0x158] sm:$0xff]
    %v4556 = vld [vmem:[%s6 + $0x160] sm:$0xff]
    %v4557 = vld [vmem:[%s6 + $0x168] sm:$0xff]
    %v4558 = vld [vmem:[%s6 + $0x170] sm:$0xff]
    %v4559 = vld [vmem:[%s6 + $0x178] sm:$0xff]
    %v4560 = vld [vmem:[%s6 + $0x180] sm:$0xff]
    %v4561 = vld [vmem:[%s6 + $0x188] sm:$0xff]
    %v4562 = vld [vmem:[%s6 + $0x190] sm:$0xff]
    %v4563 = vld [vmem:[%s6 + $0x198] sm:$0xff]
    %v4564 = vld [vmem:[%s6 + $0x1a0] sm:$0xff]
    %v4565 = vld [vmem:[%s6 + $0x1a8] sm:$0xff]
    %v4566 = vld [vmem:[%s6 + $0x1b0] sm:$0xff]
    %v4567 = vld [vmem:[%s6 + $0x1b8] sm:$0xff]
    %v4568 = vld [vmem:[%s6 + $0x1c0] sm:$0xff]
    %v4569 = vld [vmem:[%s6 + $0x1c8] sm:$0xff]
    %v4570 = vld [vmem:[%s6 + $0x1d0] sm:$0xff]
    %v4571 = vld [vmem:[%s6 + $0x1d8] sm:$0xff]
    %v4572 = vld [vmem:[%s6 + $0x1e0] sm:$0xff]
    %v4573 = vld [vmem:[%s6 + $0x1e8] sm:$0xff]
    %v4574 = vld [vmem:[%s6 + $0x1f0] sm:$0xff]
    %v4575 = vld [vmem:[%s6 + $0x1f8] sm:$0xff]
    %v4576 = vld [vmem:[%s6 + $0x200] sm:$0xff]
    %v4577 = vld [vmem:[%s6 + $0x208] sm:$0xff]
    %v4578 = vld [vmem:[%s6 + $0x210] sm:$0xff]
    %v4579 = vld [vmem:[%s6 + $0x218] sm:$0xff]
    %v4580 = vld [vmem:[%s6 + $0x220] sm:$0xff]
    %v4581 = vld [vmem:[%s6 + $0x228] sm:$0xff]
    %v4582 = vld [vmem:[%s6 + $0x230] sm:$0xff]
    %v4583 = vld [vmem:[%s6 + $0x238] sm:$0xff]
    %v4584 = vld [vmem:[%s7] sm:$0x1]
    %v4586 = vlaneseq
    %v4587 = vshrl.u32 %v4586, 7
    %v4588 = vsub.s32 0, %v4587
    %v4589 = vrot.slane %v4584, %v4588
    %v4592 = vsel %vm768, %v4243, 0
    %v4595 = vsel %vm768, %v4245, 0
    %v4598 = vsel %vm768, %v4247, 0
    %v4601 = vsel %vm768, %v4249, 0
    %v4604 = vsel %vm768, %v4251, 0
    %v4607 = vsel %vm768, %v4253, 0
    %v4610 = vsel %vm768, %v4255, 0
    %v4613 = vsel %vm768, %v4257, 0
    %v4616 = vsel %vm768, %v4259, 0
    %v4619 = vsel %vm768, %v4261, 0
    %v4622 = vsel %vm768, %v4263, 0
    %v4625 = vsel %vm768, %v4265, 0
    %v4628 = vsel %vm768, %v4267, 0
    %v4631 = vsel %vm768, %v4269, 0
    %v4634 = vsel %vm768, %v4271, 0
    %v4637 = vsel %vm768, %v4273, 0
    %v4640 = vsel %vm768, %v4275, 0
    %v4643 = vsel %vm768, %v4277, 0
    %v4646 = vsel %vm768, %v4279, 0
    %v4649 = vsel %vm768, %v4281, 0
    %v4652 = vsel %vm768, %v4283, 0
    %v4655 = vsel %vm768, %v4285, 0
    %v4658 = vsel %vm768, %v4287, 0
    %v4661 = vsel %vm768, %v4289, 0
    %v4664 = vsel %vm768, %v4291, 0
    %v4667 = vsel %vm768, %v4293, 0
    %v4670 = vsel %vm768, %v4295, 0
    %4672 = vmatprep.subr.mxu0 0.0
    %4673 = vmatpush1.msra.mxu0 %v4512
    %4674 = vmatprep.subr.mxu0 0.0
    %4675 = vmatpush1.msra.mxu0 %v4513
    %4676 = vmatprep.subr.mxu0 0.0
    %4677 = vmatpush1.msra.mxu0 %v4514
    %4678 = vmatprep.subr.mxu0 0.0
    %4679 = vmatpush1.msra.mxu0 %v4515
    %4680 = vmatprep.subr.mxu0 0.0
    %4681 = vmatpush1.msra.mxu0 %v4516
    %4682 = vmatprep.subr.mxu0 0.0
    %4683 = vmatpush1.msra.mxu0 %v4517
    %4684 = vmatprep.subr.mxu0 0.0
    %4685 = vmatpush1.msra.mxu0 %v4518
    %4686 = vmatprep.subr.mxu0 0.0
    %4687 = vmatpush1.msra.mxu0 %v4519
    %4688 = vmatprep.subr.mxu0 0.0
    %4689 = vmatpush1.msra.mxu0 %v4520
    %4690 = vmatprep.subr.mxu0 0.0
    %4691 = vmatpush1.msra.mxu0 %v4521
    %4692 = vmatprep.subr.mxu0 0.0
    %4693 = vmatpush1.msra.mxu0 %v4522
    %4694 = vmatprep.subr.mxu0 0.0
    %4695 = vmatpush1.msra.mxu0 %v4523
    %4696 = vmatprep.subr.mxu0 0.0
    %4697 = vmatpush1.msra.mxu0 %v4524
    %4698 = vmatprep.subr.mxu0 0.0
    %4699 = vmatpush1.msra.mxu0 %v4525
    %4700 = vmatprep.subr.mxu0 0.0
    %4701 = vmatpush1.msra.mxu0 %v4526
    %4702 = vmatprep.subr.mxu0 0.0
    %4703 = vmatpush1.msra.mxu0 %v4527
    %4704 = vmatprep.subr.mxu0 0.0
    %4705 = vmatpush1.msra.mxu0 %v4528
    %4706 = vmatprep.subr.mxu0 0.0
    %4707 = vmatpush1.msra.mxu0 %v4529
    %4708 = vmatprep.subr.mxu0 0.0
    %4709 = vmatpush1.msra.mxu0 %v4530
    %4710 = vmatprep.subr.mxu0 0.0
    %4711 = vmatpush1.msra.mxu0 %v4531
    %4712 = vmatprep.subr.mxu0 0.0
    %4713 = vmatpush1.msra.mxu0 %v4532
    %4714 = vmatprep.subr.mxu0 0.0
    %4715 = vmatpush1.msra.mxu0 %v4533
    %4716 = vmatprep.subr.mxu0 0.0
    %4717 = vmatpush1.msra.mxu0 %v4534
    %4718 = vmatprep.subr.mxu0 0.0
    %4719 = vmatpush1.msra.mxu0 %v4535
    %4720 = vmatprep.subr.mxu0 0.0
    %4721 = vmatpush1.msra.mxu0 %v4536
    %4722 = vmatprep.subr.mxu0 0.0
    %4723 = vmatpush1.msra.mxu0 %v4537
    %4724 = vmatprep.subr.mxu0 0.0
    %4725 = vmatpush1.msra.mxu0 %v4538
    %4726 = vmatprep.subr.mxu0 0.0
    %4727 = vmatpush1.msra.mxu0 %v4539
    %4728 = vmatprep.subr.mxu0 0.0
    %4729 = vmatpush1.msra.mxu0 %v4540
    %4730 = vmatprep.subr.mxu0 0.0
    %4731 = vmatpush1.msra.mxu0 %v4541
    %4732 = vmatprep.subr.mxu0 0.0
    %4733 = vmatpush1.msra.mxu0 %v4542
    %4734 = vmatprep.subr.mxu0 0.0
    %4735 = vmatpush1.msra.mxu0 %v4543
    %4736 = vmatprep.mubr.f32.mxu0 %v4485
    %4737 = vmatmul.mubr.f32.gmra.mrb[0].mxu0 %v3863
    %v4738 = vpop.f32.mrb[0].mxu0
    %v4739 = vadd.f32 %v4589, %v4738
    %v4740 = vpop.f32.mrb[0].mxu0
    %4741 = vmatprep.mubr.f32.mxu0 %v4486
    %4742 = vmatmul.mubr.f32.gmra.mrb[0].mxu0 %v3865
    %v4743 = vpop.f32.mrb[0].mxu0
    %v4744 = vadd.f32 %v4589, %v4743
    %v4745 = vpop.f32.mrb[0].mxu0
    %4746 = vmatprep.mubr.f32.mxu0 %v4487
    %4747 = vmatmul.mubr.f32.gmra.mrb[0].mxu0 %v3867
    %v4748 = vpop.f32.mrb[0].mxu0
    %v4749 = vadd.f32 %v4589, %v4748
    %v4750 = vpop.f32.mrb[0].mxu0
    %4751 = vmatprep.mubr.f32.mxu0 %v4488
    %4752 = vmatmul.mubr.f32.gmra.mrb[0].mxu0 %v3869
    %v4753 = vpop.f32.mrb[0].mxu0
    %v4754 = vadd.f32 %v4589, %v4753
    %v4755 = vpop.f32.mrb[0].mxu0
    %4756 = vmatprep.mubr.f32.mxu0 %v4489
    %4757 = vmatmul.mubr.f32.gmra.mrb[0].mxu0 %v3871
    %v4758 = vpop.f32.mrb[0].mxu0
    %v4759 = vadd.f32 %v4589, %v4758
    %v4760 = vpop.f32.mrb[0].mxu0
    %4761 = vmatprep.mubr.f32.mxu0 %v4490
    %4762 = vmatmul.mubr.f32.gmra.mrb[0].mxu0 %v3873
    %v4763 = vpop.f32.mrb[0].mxu0
    %v4764 = vadd.f32 %v4589, %v4763
    %v4765 = vpop.f32.mrb[0].mxu0
    %4766 = vmatprep.mubr.f32.mxu0 %v4491
    %4767 = vmatmul.mubr.f32.gmra.mrb[0].mxu0 %v3875
    %v4768 = vpop.f32.mrb[0].mxu0
    %v4769 = vadd.f32 %v4589, %v4768
    %v4770 = vpop.f32.mrb[0].mxu0
    %4771 = vmatprep.mubr.f32.mxu0 %v4492
    %4772 = vmatmul.mubr.f32.gmra.mrb[0].mxu0 %v3877
    %v4773 = vpop.f32.mrb[0].mxu0
    %v4774 = vadd.f32 %v4589, %v4773
    %v4775 = vpop.f32.mrb[0].mxu0
    %4776 = vmatprep.mubr.f32.mxu0 %v4493
    %4777 = vmatmul.mubr.f32.gmra.mrb[0].mxu0 %v3879
    %v4778 = vpop.f32.mrb[0].mxu0
    %v4779 = vadd.f32 %v4589, %v4778
    %v4780 = vpop.f32.mrb[0].mxu0
    %4781 = vmatprep.mubr.f32.mxu0 %v4494
    %4782 = vmatmul.mubr.f32.gmra.mrb[0].mxu0 %v3881
    %v4783 = vpop.f32.mrb[0].mxu0
    %v4784 = vadd.f32 %v4589, %v4783
    %v4785 = vpop.f32.mrb[0].mxu0
    %4786 = vmatprep.mubr.f32.mxu0 %v4495
    %4787 = vmatmul.mubr.f32.gmra.mrb[0].mxu0 %v3883
    %v4788 = vpop.f32.mrb[0].mxu0
    %v4789 = vadd.f32 %v4589, %v4788
    %v4790 = vpop.f32.mrb[0].mxu0
    %4791 = vmatprep.mubr.f32.mxu0 %v4496
    %4792 = vmatmul.mubr.f32.gmra.mrb[0].mxu0 %v3885
    %v4793 = vpop.f32.mrb[0].mxu0
    %v4794 = vadd.f32 %v4589, %v4793
    %v4795 = vpop.f32.mrb[0].mxu0
    %4796 = vmatprep.mubr.f32.mxu0 %v4497
    %4797 = vmatmul.mubr.f32.gmra.mrb[0].mxu0 %v3887
    %v4798 = vpop.f32.mrb[0].mxu0
    %v4799 = vadd.f32 %v4589, %v4798
    %v4800 = vpop.f32.mrb[0].mxu0
    %4801 = vmatprep.mubr.f32.mxu0 %v4498
    %4802 = vmatmul.mubr.f32.gmra.mrb[0].mxu0 %v3889
    %v4803 = vpop.f32.mrb[0].mxu0
    %v4804 = vadd.f32 %v4589, %v4803
    %v4805 = vpop.f32.mrb[0].mxu0
    %4806 = vmatprep.mubr.f32.mxu0 %v4499
    %4807 = vmatmul.mubr.f32.gmra.mrb[0].mxu0 %v3891
    %v4808 = vpop.f32.mrb[0].mxu0
    %v4809 = vadd.f32 %v4589, %v4808
    %v4810 = vpop.f32.mrb[0].mxu0
    %4811 = vmatprep.mubr.f32.mxu0 %v4500
    %4812 = vmatmul.mubr.f32.gmra.mrb[0].mxu0 %v3893
    %v4813 = vpop.f32.mrb[0].mxu0
    %v4814 = vadd.f32 %v4589, %v4813
    %v4815 = vpop.f32.mrb[0].mxu0
    %4816 = vmatprep.mubr.f32.mxu0 %v4501
    %4817 = vmatmul.mubr.f32.gmra.mrb[0].mxu0 %v3895
    %v4818 = vpop.f32.mrb[0].mxu0
    %v4819 = vadd.f32 %v4589, %v4818
    %v4820 = vpop.f32.mrb[0].mxu0
    %4821 = vmatprep.mubr.f32.mxu0 %v4502
    %4822 = vmatmul.mubr.f32.gmra.mrb[0].mxu0 %v3897
    %v4823 = vpop.f32.mrb[0].mxu0
    %v4824 = vadd.f32 %v4589, %v4823
    %v4825 = vpop.f32.mrb[0].mxu0
    %4826 = vmatprep.mubr.f32.mxu0 %v4503
    %4827 = vmatmul.mubr.f32.gmra.mrb[0].mxu0 %v3899
    %v4828 = vpop.f32.mrb[0].mxu0
    %v4829 = vadd.f32 %v4589, %v4828
    %v4830 = vpop.f32.mrb[0].mxu0
    %4831 = vmatprep.mubr.f32.mxu0 %v4504
    %4832 = vmatmul.mubr.f32.gmra.mrb[0].mxu0 %v3901
    %v4833 = vpop.f32.mrb[0].mxu0
    %v4834 = vadd.f32 %v4589, %v4833
    %v4835 = vpop.f32.mrb[0].mxu0
    %4836 = vmatprep.mubr.f32.mxu0 %v4505
    %4837 = vmatmul.mubr.f32.gmra.mrb[0].mxu0 %v3903
    %v4838 = vpop.f32.mrb[0].mxu0
    %v4839 = vadd.f32 %v4589, %v4838
    %v4840 = vpop.f32.mrb[0].mxu0
    %4841 = vmatprep.mubr.f32.mxu0 %v4506
    %4842 = vmatmul.mubr.f32.gmra.mrb[0].mxu0 %v3905
    %v4843 = vpop.f32.mrb[0].mxu0
    %v4844 = vadd.f32 %v4589, %v4843
    %v4845 = vpop.f32.mrb[0].mxu0
    %4846 = vmatprep.mubr.f32.mxu0 %v4507
    %4847 = vmatmul.mubr.f32.gmra.mrb[0].mxu0 %v3907
    %v4848 = vpop.f32.mrb[0].mxu0
    %v4849 = vadd.f32 %v4589, %v4848
    %v4850 = vpop.f32.mrb[0].mxu0
    %4851 = vmatprep.mubr.f32.mxu0 %v4508
    %4852 = vmatmul.mubr.f32.gmra.mrb[0].mxu0 %v3909
    %v4853 = vpop.f32.mrb[0].mxu0
    %v4854 = vadd.f32 %v4589, %v4853
    %v4855 = vpop.f32.mrb[0].mxu0
    %4856 = vmatprep.mubr.f32.mxu0 %v4509
    %4857 = vmatmul.mubr.f32.gmra.mrb[0].mxu0 %v3911
    %v4858 = vpop.f32.mrb[0].mxu0
    %v4859 = vadd.f32 %v4589, %v4858
    %v4860 = vpop.f32.mrb[0].mxu0
    %4861 = vmatprep.mubr.f32.mxu0 %v4510
    %4862 = vmatmul.mubr.f32.gmra.mrb[0].mxu0 %v3913
    %v4863 = vpop.f32.mrb[0].mxu0
    %v4864 = vadd.f32 %v4589, %v4863
    %v4865 = vpop.f32.mrb[0].mxu0
    %4866 = vmatprep.mubr.f32.mxu0 %v4511
    %4867 = vmatmul.mubr.f32.gmra.mrb[0].mxu0 %v3915
    %v4868 = vpop.f32.mrb[0].mxu0
    %v4869 = vadd.f32 %v4589, %v4868
    %v4870 = vpop.f32.mrb[0].mxu0
    %4871 = vdwg.mxu0
    %4872 = vmatprep.subr.mxu0 0.0
    %4873 = vmatpush1.msra.mxu0 %v4544
    %4874 = vmatprep.subr.mxu0 0.0
    %4875 = vmatpush1.msra.mxu0 %v4545
    %4876 = vmatprep.subr.mxu0 0.0
    %4877 = vmatpush1.msra.mxu0 %v4546
    %4878 = vmatprep.subr.mxu0 0.0
    %4879 = vmatpush1.msra.mxu0 %v4547
    %4880 = vmatprep.subr.mxu0 0.0
    %4881 = vmatpush1.msra.mxu0 %v4548
    %4882 = vmatprep.subr.mxu0 0.0
    %4883 = vmatpush1.msra.mxu0 %v4549
    %4884 = vmatprep.subr.mxu0 0.0
    %4885 = vmatpush1.msra.mxu0 %v4550
    %4886 = vmatprep.subr.mxu0 0.0
    %4887 = vmatpush1.msra.mxu0 %v4551
    %4888 = vmatprep.subr.mxu0 0.0
    %4889 = vmatpush1.msra.mxu0 %v4552
    %4890 = vmatprep.subr.mxu0 0.0
    %4891 = vmatpush1.msra.mxu0 %v4553
    %4892 = vmatprep.subr.mxu0 0.0
    %4893 = vmatpush1.msra.mxu0 %v4554
    %4894 = vmatprep.subr.mxu0 0.0
    %4895 = vmatpush1.msra.mxu0 %v4555
    %4896 = vmatprep.subr.mxu0 0.0
    %4897 = vmatpush1.msra.mxu0 %v4556
    %4898 = vmatprep.subr.mxu0 0.0
    %4899 = vmatpush1.msra.mxu0 %v4557
    %4900 = vmatprep.subr.mxu0 0.0
    %4901 = vmatpush1.msra.mxu0 %v4558
    %4902 = vmatprep.subr.mxu0 0.0
    %4903 = vmatpush1.msra.mxu0 %v4559
    %4904 = vmatprep.subr.mxu0 0.0
    %4905 = vmatpush1.msra.mxu0 %v4560
    %4906 = vmatprep.subr.mxu0 0.0
    %4907 = vmatpush1.msra.mxu0 %v4561
    %4908 = vmatprep.subr.mxu0 0.0
    %4909 = vmatpush1.msra.mxu0 %v4562
    %4910 = vmatprep.subr.mxu0 0.0
    %4911 = vmatpush1.msra.mxu0 %v4563
    %4912 = vmatprep.subr.mxu0 0.0
    %4913 = vmatpush1.msra.mxu0 %v4564
    %4914 = vmatprep.subr.mxu0 0.0
    %4915 = vmatpush1.msra.mxu0 %v4565
    %4916 = vmatprep.subr.mxu0 0.0
    %4917 = vmatpush1.msra.mxu0 %v4566
    %4918 = vmatprep.subr.mxu0 0.0
    %4919 = vmatpush1.msra.mxu0 %v4567
    %4920 = vmatprep.subr.mxu0 0.0
    %4921 = vmatpush1.msra.mxu0 %v4568
    %4922 = vmatprep.subr.mxu0 0.0
    %4923 = vmatpush1.msra.mxu0 %v4569
    %4924 = vmatprep.subr.mxu0 0.0
    %4925 = vmatpush1.msra.mxu0 %v4570
    %4926 = vmatprep.subr.mxu0 0.0
    %4927 = vmatpush1.msra.mxu0 %v4571
    %4928 = vmatprep.subr.mxu0 0.0
    %4929 = vmatpush1.msra.mxu0 %v4572
    %4930 = vmatprep.subr.mxu0 0.0
    %4931 = vmatpush1.msra.mxu0 %v4573
    %4932 = vmatprep.subr.mxu0 0.0
    %4933 = vmatpush1.msra.mxu0 %v4574
    %4934 = vmatprep.subr.mxu0 0.0
    %4935 = vmatpush1.msra.mxu0 %v4575
    %4936 = vmatprep.mubr.f32.mxu0 %v4242
    %4937 = vmatmul.mubr.f32.gmra.mrb[0].mxu0 %v4404
    %v4938 = vpop.f32.mrb[0].mxu0
    %v4939 = vadd.f32 %v4739, %v4938
    %v4940 = vpop.f32.mrb[0].mxu0
    %4941 = vmatprep.mubr.f32.mxu0 %v4244
    %4942 = vmatmul.mubr.f32.gmra.mrb[0].mxu0 %v4405
    %v4943 = vpop.f32.mrb[0].mxu0
    %v4944 = vadd.f32 %v4744, %v4943
    %v4945 = vpop.f32.mrb[0].mxu0
    %4946 = vmatprep.mubr.f32.mxu0 %v4246
    %4947 = vmatmul.mubr.f32.gmra.mrb[0].mxu0 %v4406
    %v4948 = vpop.f32.mrb[0].mxu0
    %v4949 = vadd.f32 %v4749, %v4948
    %v4950 = vpop.f32.mrb[0].mxu0
    %4951 = vmatprep.mubr.f32.mxu0 %v4248
    %4952 = vmatmul.mubr.f32.gmra.mrb[0].mxu0 %v4407
    %v4953 = vpop.f32.mrb[0].mxu0
    %v4954 = vadd.f32 %v4754, %v4953
    %v4955 = vpop.f32.mrb[0].mxu0
    %4956 = vmatprep.mubr.f32.mxu0 %v4250
    %4957 = vmatmul.mubr.f32.gmra.mrb[0].mxu0 %v4408
    %v4958 = vpop.f32.mrb[0].mxu0
    %v4959 = vadd.f32 %v4759, %v4958
    %v4960 = vpop.f32.mrb[0].mxu0
    %4961 = vmatprep.mubr.f32.mxu0 %v4252
    %4962 = vmatmul.mubr.f32.gmra.mrb[0].mxu0 %v4409
    %v4963 = vpop.f32.mrb[0].mxu0
    %v4964 = vadd.f32 %v4764, %v4963
    %v4965 = vpop.f32.mrb[0].mxu0
    %4966 = vmatprep.mubr.f32.mxu0 %v4254
    %4967 = vmatmul.mubr.f32.gmra.mrb[0].mxu0 %v4410
    %v4968 = vpop.f32.mrb[0].mxu0
    %v4969 = vadd.f32 %v4769, %v4968
    %v4970 = vpop.f32.mrb[0].mxu0
    %4971 = vmatprep.mubr.f32.mxu0 %v4256
    %4972 = vmatmul.mubr.f32.gmra.mrb[0].mxu0 %v4411
    %v4973 = vpop.f32.mrb[0].mxu0
    %v4974 = vadd.f32 %v4774, %v4973
    %v4975 = vpop.f32.mrb[0].mxu0
    %4976 = vmatprep.mubr.f32.mxu0 %v4258
    %4977 = vmatmul.mubr.f32.gmra.mrb[0].mxu0 %v4412
    %v4978 = vpop.f32.mrb[0].mxu0
    %v4979 = vadd.f32 %v4779, %v4978
    %v4980 = vpop.f32.mrb[0].mxu0
    %4981 = vmatprep.mubr.f32.mxu0 %v4260
    %4982 = vmatmul.mubr.f32.gmra.mrb[0].mxu0 %v4413
    %v4983 = vpop.f32.mrb[0].mxu0
    %v4984 = vadd.f32 %v4784, %v4983
    %v4985 = vpop.f32.mrb[0].mxu0
    %4986 = vmatprep.mubr.f32.mxu0 %v4262
    %4987 = vmatmul.mubr.f32.gmra.mrb[0].mxu0 %v4414
    %v4988 = vpop.f32.mrb[0].mxu0
    %v4989 = vadd.f32 %v4789, %v4988
    %v4990 = vpop.f32.mrb[0].mxu0
    %4991 = vmatprep.mubr.f32.mxu0 %v4264
    %4992 = vmatmul.mubr.f32.gmra.mrb[0].mxu0 %v4415
    %v4993 = vpop.f32.mrb[0].mxu0
    %v4994 = vadd.f32 %v4794, %v4993
    %v4995 = vpop.f32.mrb[0].mxu0
    %4996 = vmatprep.mubr.f32.mxu0 %v4266
    %4997 = vmatmul.mubr.f32.gmra.mrb[0].mxu0 %v4416
    %v4998 = vpop.f32.mrb[0].mxu0
    %v4999 = vadd.f32 %v4799, %v4998
    %v5000 = vpop.f32.mrb[0].mxu0
    %5001 = vmatprep.mubr.f32.mxu0 %v4268
    %5002 = vmatmul.mubr.f32.gmra.mrb[0].mxu0 %v4417
    %v5003 = vpop.f32.mrb[0].mxu0
    %v5004 = vadd.f32 %v4804, %v5003
    %v5005 = vpop.f32.mrb[0].mxu0
    %5006 = vmatprep.mubr.f32.mxu0 %v4270
    %5007 = vmatmul.mubr.f32.gmra.mrb[0].mxu0 %v4418
    %v5008 = vpop.f32.mrb[0].mxu0
    %v5009 = vadd.f32 %v4809, %v5008
    %v5010 = vpop.f32.mrb[0].mxu0
    %5011 = vmatprep.mubr.f32.mxu0 %v4272
    %5012 = vmatmul.mubr.f32.gmra.mrb[0].mxu0 %v4419
    %v5013 = vpop.f32.mrb[0].mxu0
    %v5014 = vadd.f32 %v4814, %v5013
    %v5015 = vpop.f32.mrb[0].mxu0
    %5016 = vmatprep.mubr.f32.mxu0 %v4274
    %5017 = vmatmul.mubr.f32.gmra.mrb[0].mxu0 %v4420
    %v5018 = vpop.f32.mrb[0].mxu0
    %v5019 = vadd.f32 %v4819, %v5018
    %v5020 = vpop.f32.mrb[0].mxu0
    %5021 = vmatprep.mubr.f32.mxu0 %v4276
    %5022 = vmatmul.mubr.f32.gmra.mrb[0].mxu0 %v4421
    %v5023 = vpop.f32.mrb[0].mxu0
    %v5024 = vadd.f32 %v4824, %v5023
    %v5025 = vpop.f32.mrb[0].mxu0
    %5026 = vmatprep.mubr.f32.mxu0 %v4278
    %5027 = vmatmul.mubr.f32.gmra.mrb[0].mxu0 %v4422
    %v5028 = vpop.f32.mrb[0].mxu0
    %v5029 = vadd.f32 %v4829, %v5028
    %v5030 = vpop.f32.mrb[0].mxu0
    %5031 = vmatprep.mubr.f32.mxu0 %v4280
    %5032 = vmatmul.mubr.f32.gmra.mrb[0].mxu0 %v4423
    %v5033 = vpop.f32.mrb[0].mxu0
    %v5034 = vadd.f32 %v4834, %v5033
    %v5035 = vpop.f32.mrb[0].mxu0
    %5036 = vmatprep.mubr.f32.mxu0 %v4282
    %5037 = vmatmul.mubr.f32.gmra.mrb[0].mxu0 %v4424
    %v5038 = vpop.f32.mrb[0].mxu0
    %v5039 = vadd.f32 %v4839, %v5038
    %v5040 = vpop.f32.mrb[0].mxu0
    %5041 = vmatprep.mubr.f32.mxu0 %v4284
    %5042 = vmatmul.mubr.f32.gmra.mrb[0].mxu0 %v4425
    %v5043 = vpop.f32.mrb[0].mxu0
    %v5044 = vadd.f32 %v4844, %v5043
    %v5045 = vpop.f32.mrb[0].mxu0
    %5046 = vmatprep.mubr.f32.mxu0 %v4286
    %5047 = vmatmul.mubr.f32.gmra.mrb[0].mxu0 %v4426
    %v5048 = vpop.f32.mrb[0].mxu0
    %v5049 = vadd.f32 %v4849, %v5048
    %v5050 = vpop.f32.mrb[0].mxu0
    %5051 = vmatprep.mubr.f32.mxu0 %v4288
    %5052 = vmatmul.mubr.f32.gmra.mrb[0].mxu0 %v4427
    %v5053 = vpop.f32.mrb[0].mxu0
    %v5054 = vadd.f32 %v4854, %v5053
    %v5055 = vpop.f32.mrb[0].mxu0
    %5056 = vmatprep.mubr.f32.mxu0 %v4290
    %5057 = vmatmul.mubr.f32.gmra.mrb[0].mxu0 %v4428
    %v5058 = vpop.f32.mrb[0].mxu0
    %v5059 = vadd.f32 %v4859, %v5058
    %v5060 = vpop.f32.mrb[0].mxu0
    %5061 = vmatprep.mubr.f32.mxu0 %v4292
    %5062 = vmatmul.mubr.f32.gmra.mrb[0].mxu0 %v4429
    %v5063 = vpop.f32.mrb[0].mxu0
    %v5064 = vadd.f32 %v4864, %v5063
    %v5065 = vpop.f32.mrb[0].mxu0
    %5066 = vmatprep.mubr.f32.mxu0 %v4294
    %5067 = vmatmul.mubr.f32.gmra.mrb[0].mxu0 %v4430
    %v5068 = vpop.f32.mrb[0].mxu0
    %v5069 = vadd.f32 %v4869, %v5068
    %v5070 = vpop.f32.mrb[0].mxu0
    %5071 = vdwg.mxu0
    %5072 = vmatprep.subr.mxu0 0.0
    %5073 = vmatpush1.msra.mxu0 %v4576
    %5074 = vmatprep.subr.mxu0 0.0
    %5075 = vmatpush1.msra.mxu0 %v4577
    %5076 = vmatprep.subr.mxu0 0.0
    %5077 = vmatpush1.msra.mxu0 %v4578
    %5078 = vmatprep.subr.mxu0 0.0
    %5079 = vmatpush1.msra.mxu0 %v4579
    %5080 = vmatprep.subr.mxu0 0.0
    %5081 = vmatpush1.msra.mxu0 %v4580
    %5082 = vmatprep.subr.mxu0 0.0
    %5083 = vmatpush1.msra.mxu0 %v4581
    %5084 = vmatprep.subr.mxu0 0.0
    %5085 = vmatpush1.msra.mxu0 %v4582
    %5086 = vmatprep.subr.mxu0 0.0
    %5087 = vmatpush1.msra.mxu0 %v4583
    %5088 = vmatprep.subr.mxu0 0.0
    %5089 = vmatpush1.msra.mxu0 0.0
    %5090 = vmatprep.subr.mxu0 0.0
    %5091 = vmatpush1.msra.mxu0 0.0
    %5092 = vmatprep.subr.mxu0 0.0
    %5093 = vmatpush1.msra.mxu0 0.0
    %5094 = vmatprep.subr.mxu0 0.0
    %5095 = vmatpush1.msra.mxu0 0.0
    %5096 = vmatprep.subr.mxu0 0.0
    %5097 = vmatpush1.msra.mxu0 0.0
    %5098 = vmatprep.subr.mxu0 0.0
    %5099 = vmatpush1.msra.mxu0 0.0
    %5100 = vmatprep.subr.mxu0 0.0
    %5101 = vmatpush1.msra.mxu0 0.0
    %5102 = vmatprep.subr.mxu0 0.0
    %5103 = vmatpush1.msra.mxu0 0.0
    %5104 = vmatprep.subr.mxu0 0.0
    %5105 = vmatpush1.msra.mxu0 0.0
    %5106 = vmatprep.subr.mxu0 0.0
    %5107 = vmatpush1.msra.mxu0 0.0
    %5108 = vmatprep.subr.mxu0 0.0
    %5109 = vmatpush1.msra.mxu0 0.0
    %5110 = vmatprep.subr.mxu0 0.0
    %5111 = vmatpush1.msra.mxu0 0.0
    %5112 = vmatprep.subr.mxu0 0.0
    %5113 = vmatpush1.msra.mxu0 0.0
    %5114 = vmatprep.subr.mxu0 0.0
    %5115 = vmatpush1.msra.mxu0 0.0
    %5116 = vmatprep.subr.mxu0 0.0
    %5117 = vmatpush1.msra.mxu0 0.0
    %5118 = vmatprep.subr.mxu0 0.0
    %5119 = vmatpush1.msra.mxu0 0.0
    %5120 = vmatprep.subr.mxu0 0.0
    %5121 = vmatpush1.msra.mxu0 0.0
    %5122 = vmatprep.subr.mxu0 0.0
    %5123 = vmatpush1.msra.mxu0 0.0
    %5124 = vmatprep.subr.mxu0 0.0
    %5125 = vmatpush1.msra.mxu0 0.0
    %5126 = vmatprep.subr.mxu0 0.0
    %5127 = vmatpush1.msra.mxu0 0.0
    %5128 = vmatprep.subr.mxu0 0.0
    %5129 = vmatpush1.msra.mxu0 0.0
    %5130 = vmatprep.subr.mxu0 0.0
    %5131 = vmatpush1.msra.mxu0 0.0
    %5132 = vmatprep.subr.mxu0 0.0
    %5133 = vmatpush1.msra.mxu0 0.0
    %5134 = vmatprep.subr.mxu0 0.0
    %5135 = vmatpush1.msra.mxu0 0.0
    %5136 = vmatprep.mubr.f32.mxu0 0.0
    %5137 = vmatmul.mubr.f32.gmra.mrb[0].mxu0 %v4592
    %v5138 = vpop.f32.mrb[0].mxu0
    %v5139 = vadd.f32 %v4939, %v5138
    %v5140 = vpop.f32.mrb[0].mxu0
    %5141 = vmatprep.mubr.f32.mxu0 0.0
    %5142 = vmatmul.mubr.f32.gmra.mrb[0].mxu0 %v4595
    %v5143 = vpop.f32.mrb[0].mxu0
    %v5144 = vadd.f32 %v4944, %v5143
    %v5145 = vpop.f32.mrb[0].mxu0
    %5146 = vmatprep.mubr.f32.mxu0 0.0
    %5147 = vmatmul.mubr.f32.gmra.mrb[0].mxu0 %v4598
    %v5148 = vpop.f32.mrb[0].mxu0
    %v5149 = vadd.f32 %v4949, %v5148
    %v5150 = vpop.f32.mrb[0].mxu0
    %5151 = vmatprep.mubr.f32.mxu0 0.0
    %5152 = vmatmul.mubr.f32.gmra.mrb[0].mxu0 %v4601
    %v5153 = vpop.f32.mrb[0].mxu0
    %v5154 = vadd.f32 %v4954, %v5153
    %v5155 = vpop.f32.mrb[0].mxu0
    %5156 = vmatprep.mubr.f32.mxu0 0.0
    %5157 = vmatmul.mubr.f32.gmra.mrb[0].mxu0 %v4604
    %v5158 = vpop.f32.mrb[0].mxu0
    %v5159 = vadd.f32 %v4959, %v5158
    %v5160 = vpop.f32.mrb[0].mxu0
    %5161 = vmatprep.mubr.f32.mxu0 0.0
    %5162 = vmatmul.mubr.f32.gmra.mrb[0].mxu0 %v4607
    %v5163 = vpop.f32.mrb[0].mxu0
    %v5164 = vadd.f32 %v4964, %v5163
    %v5165 = vpop.f32.mrb[0].mxu0
    %5166 = vmatprep.mubr.f32.mxu0 0.0
    %5167 = vmatmul.mubr.f32.gmra.mrb[0].mxu0 %v4610
    %v5168 = vpop.f32.mrb[0].mxu0
    %v5169 = vadd.f32 %v4969, %v5168
    %v5170 = vpop.f32.mrb[0].mxu0
    %5171 = vmatprep.mubr.f32.mxu0 0.0
    %5172 = vmatmul.mubr.f32.gmra.mrb[0].mxu0 %v4613
    %v5173 = vpop.f32.mrb[0].mxu0
    %v5174 = vadd.f32 %v4974, %v5173
    %v5175 = vpop.f32.mrb[0].mxu0
    %5176 = vmatprep.mubr.f32.mxu0 0.0
    %5177 = vmatmul.mubr.f32.gmra.mrb[0].mxu0 %v4616
    %v5178 = vpop.f32.mrb[0].mxu0
    %v5179 = vadd.f32 %v4979, %v5178
    %v5180 = vpop.f32.mrb[0].mxu0
    %5181 = vmatprep.mubr.f32.mxu0 0.0
    %5182 = vmatmul.mubr.f32.gmra.mrb[0].mxu0 %v4619
    %v5183 = vpop.f32.mrb[0].mxu0
    %v5184 = vadd.f32 %v4984, %v5183
    %v5185 = vpop.f32.mrb[0].mxu0
    %5186 = vmatprep.mubr.f32.mxu0 0.0
    %5187 = vmatmul.mubr.f32.gmra.mrb[0].mxu0 %v4622
    %v5188 = vpop.f32.mrb[0].mxu0
    %v5189 = vadd.f32 %v4989, %v5188
    %v5190 = vpop.f32.mrb[0].mxu0
    %5191 = vmatprep.mubr.f32.mxu0 0.0
    %5192 = vmatmul.mubr.f32.gmra.mrb[0].mxu0 %v4625
    %v5193 = vpop.f32.mrb[0].mxu0
    %v5194 = vadd.f32 %v4994, %v5193
    %v5195 = vpop.f32.mrb[0].mxu0
    %5196 = vmatprep.mubr.f32.mxu0 0.0
    %5197 = vmatmul.mubr.f32.gmra.mrb[0].mxu0 %v4628
    %v5198 = vpop.f32.mrb[0].mxu0
    %v5199 = vadd.f32 %v4999, %v5198
    %v5200 = vpop.f32.mrb[0].mxu0
    %5201 = vmatprep.mubr.f32.mxu0 0.0
    %5202 = vmatmul.mubr.f32.gmra.mrb[0].mxu0 %v4631
    %v5203 = vpop.f32.mrb[0].mxu0
    %v5204 = vadd.f32 %v5004, %v5203
    %v5205 = vpop.f32.mrb[0].mxu0
    %5206 = vmatprep.mubr.f32.mxu0 0.0
    %5207 = vmatmul.mubr.f32.gmra.mrb[0].mxu0 %v4634
    %v5208 = vpop.f32.mrb[0].mxu0
    %v5209 = vadd.f32 %v5009, %v5208
    %v5210 = vpop.f32.mrb[0].mxu0
    %5211 = vmatprep.mubr.f32.mxu0 0.0
    %5212 = vmatmul.mubr.f32.gmra.mrb[0].mxu0 %v4637
    %v5213 = vpop.f32.mrb[0].mxu0
    %v5214 = vadd.f32 %v5014, %v5213
    %v5215 = vpop.f32.mrb[0].mxu0
    %5216 = vmatprep.mubr.f32.mxu0 0.0
    %5217 = vmatmul.mubr.f32.gmra.mrb[0].mxu0 %v4640
    %v5218 = vpop.f32.mrb[0].mxu0
    %v5219 = vadd.f32 %v5019, %v5218
    %v5220 = vpop.f32.mrb[0].mxu0
    %5221 = vmatprep.mubr.f32.mxu0 0.0
    %5222 = vmatmul.mubr.f32.gmra.mrb[0].mxu0 %v4643
    %v5223 = vpop.f32.mrb[0].mxu0
    %v5224 = vadd.f32 %v5024, %v5223
    %v5225 = vpop.f32.mrb[0].mxu0
    %5226 = vmatprep.mubr.f32.mxu0 0.0
    %5227 = vmatmul.mubr.f32.gmra.mrb[0].mxu0 %v4646
    %v5228 = vpop.f32.mrb[0].mxu0
    %v5229 = vadd.f32 %v5029, %v5228
    %v5230 = vpop.f32.mrb[0].mxu0
    %5231 = vmatprep.mubr.f32.mxu0 0.0
    %5232 = vmatmul.mubr.f32.gmra.mrb[0].mxu0 %v4649
    %v5233 = vpop.f32.mrb[0].mxu0
    %v5234 = vadd.f32 %v5034, %v5233
    %v5235 = vpop.f32.mrb[0].mxu0
    %5236 = vmatprep.mubr.f32.mxu0 0.0
    %5237 = vmatmul.mubr.f32.gmra.mrb[0].mxu0 %v4652
    %v5238 = vpop.f32.mrb[0].mxu0
    %v5239 = vadd.f32 %v5039, %v5238
    %v5240 = vpop.f32.mrb[0].mxu0
    %5241 = vmatprep.mubr.f32.mxu0 0.0
    %5242 = vmatmul.mubr.f32.gmra.mrb[0].mxu0 %v4655
    %v5243 = vpop.f32.mrb[0].mxu0
    %v5244 = vadd.f32 %v5044, %v5243
    %v5245 = vpop.f32.mrb[0].mxu0
    %5246 = vmatprep.mubr.f32.mxu0 0.0
    %5247 = vmatmul.mubr.f32.gmra.mrb[0].mxu0 %v4658
    %v5248 = vpop.f32.mrb[0].mxu0
    %v5249 = vadd.f32 %v5049, %v5248
    %v5250 = vpop.f32.mrb[0].mxu0
    %5251 = vmatprep.mubr.f32.mxu0 0.0
    %5252 = vmatmul.mubr.f32.gmra.mrb[0].mxu0 %v4661
    %v5253 = vpop.f32.mrb[0].mxu0
    %v5254 = vadd.f32 %v5054, %v5253
    %v5255 = vpop.f32.mrb[0].mxu0
    %5256 = vmatprep.mubr.f32.mxu0 0.0
    %5257 = vmatmul.mubr.f32.gmra.mrb[0].mxu0 %v4664
    %v5258 = vpop.f32.mrb[0].mxu0
    %v5259 = vadd.f32 %v5059, %v5258
    %v5260 = vpop.f32.mrb[0].mxu0
    %5261 = vmatprep.mubr.f32.mxu0 0.0
    %5262 = vmatmul.mubr.f32.gmra.mrb[0].mxu0 %v4667
    %v5263 = vpop.f32.mrb[0].mxu0
    %v5264 = vadd.f32 %v5064, %v5263
    %v5265 = vpop.f32.mrb[0].mxu0
    %5266 = vmatprep.mubr.f32.mxu0 0.0
    %5267 = vmatmul.mubr.f32.gmra.mrb[0].mxu0 %v4670
    %v5268 = vpop.f32.mrb[0].mxu0
    %v5269 = vadd.f32 %v5069, %v5268
    %v5270 = vpop.f32.mrb[0].mxu0
    %5271 = vdwg.mxu0
    %v5272 = vmax.f32 %v5139, 0.0
    %v5273 = vmax.f32 %v5144, 0.0
    %v5274 = vmax.f32 %v5149, 0.0
    %v5275 = vmax.f32 %v5154, 0.0
    %v5276 = vmax.f32 %v5159, 0.0
    %v5277 = vmax.f32 %v5164, 0.0
    %v5278 = vmax.f32 %v5169, 0.0
    %v5279 = vmax.f32 %v5174, 0.0
    %v5280 = vmax.f32 %v5179, 0.0
    %v5281 = vmax.f32 %v5184, 0.0
    %v5282 = vmax.f32 %v5189, 0.0
    %v5283 = vmax.f32 %v5194, 0.0
    %v5284 = vmax.f32 %v5199, 0.0
    %v5285 = vmax.f32 %v5204, 0.0
    %v5286 = vmax.f32 %v5209, 0.0
    %v5287 = vmax.f32 %v5214, 0.0
    %v5288 = vmax.f32 %v5219, 0.0
    %v5289 = vmax.f32 %v5224, 0.0
    %v5290 = vmax.f32 %v5229, 0.0
    %v5291 = vmax.f32 %v5234, 0.0
    %v5292 = vmax.f32 %v5239, 0.0
    %v5293 = vmax.f32 %v5244, 0.0
    %v5294 = vmax.f32 %v5249, 0.0
    %v5295 = vmax.f32 %v5254, 0.0
    %v5296 = vmax.f32 %v5259, 0.0
    %v5297 = vmax.f32 %v5264, 0.0
    %v5298 = vmax.f32 %v5269, 0.0
    %5326 = vrot.lane.b32.xlu0 %v5272, 96
    %v5327 = vpop.permute.xlu0 %5326
    %5328 = vrot.lane.b32.xlu0 %v5273, 96
    %v5329 = vpop.permute.xlu0 %5328
    %5330 = vrot.lane.b32.xlu0 %v5274, 96
    %v5331 = vpop.permute.xlu0 %5330
    %5332 = vrot.lane.b32.xlu0 %v5275, 96
    %v5333 = vpop.permute.xlu0 %5332
    %5334 = vrot.lane.b32.xlu0 %v5276, 96
    %v5335 = vpop.permute.xlu0 %5334
    %5336 = vrot.lane.b32.xlu0 %v5277, 96
    %v5337 = vpop.permute.xlu0 %5336
    %5338 = vrot.lane.b32.xlu0 %v5278, 96
    %v5339 = vpop.permute.xlu0 %5338
    %5340 = vrot.lane.b32.xlu0 %v5279, 96
    %v5341 = vpop.permute.xlu0 %5340
    %5342 = vrot.lane.b32.xlu0 %v5280, 96
    %v5343 = vpop.permute.xlu0 %5342
    %5344 = vrot.lane.b32.xlu0 %v5281, 96
    %v5345 = vpop.permute.xlu0 %5344
    %5346 = vrot.lane.b32.xlu0 %v5282, 96
    %v5347 = vpop.permute.xlu0 %5346
    %5348 = vrot.lane.b32.xlu0 %v5283, 96
    %v5349 = vpop.permute.xlu0 %5348
    %5350 = vrot.lane.b32.xlu0 %v5284, 96
    %v5351 = vpop.permute.xlu0 %5350
    %5352 = vrot.lane.b32.xlu0 %v5285, 96
    %v5353 = vpop.permute.xlu0 %5352
    %5354 = vrot.lane.b32.xlu0 %v5286, 96
    %v5355 = vpop.permute.xlu0 %5354
    %5356 = vrot.lane.b32.xlu0 %v5287, 96
    %v5357 = vpop.permute.xlu0 %5356
    %5358 = vrot.lane.b32.xlu0 %v5288, 96
    %v5359 = vpop.permute.xlu0 %5358
    %5360 = vrot.lane.b32.xlu0 %v5289, 96
    %v5361 = vpop.permute.xlu0 %5360
    %5362 = vrot.lane.b32.xlu0 %v5290, 96
    %v5363 = vpop.permute.xlu0 %5362
    %5364 = vrot.lane.b32.xlu0 %v5291, 96
    %v5365 = vpop.permute.xlu0 %5364
    %5366 = vrot.lane.b32.xlu0 %v5292, 96
    %v5367 = vpop.permute.xlu0 %5366
    %5368 = vrot.lane.b32.xlu0 %v5293, 96
    %v5369 = vpop.permute.xlu0 %5368
    %5370 = vrot.lane.b32.xlu0 %v5294, 96
    %v5371 = vpop.permute.xlu0 %5370
    %5372 = vrot.lane.b32.xlu0 %v5295, 96
    %v5373 = vpop.permute.xlu0 %5372
    %5374 = vrot.lane.b32.xlu0 %v5296, 96
    %v5375 = vpop.permute.xlu0 %5374
    %5376 = vrot.lane.b32.xlu0 %v5297, 96
    %v5377 = vpop.permute.xlu0 %5376
    %5378 = vrot.lane.b32.xlu0 %v5298, 96
    %v5379 = vpop.permute.xlu0 %5378
    %v5407 = vmax.f32 %v5272, %v5327
    %v5408 = vmax.f32 %v5273, %v5329
    %v5409 = vmax.f32 %v5274, %v5331
    %v5410 = vmax.f32 %v5275, %v5333
    %v5411 = vmax.f32 %v5276, %v5335
    %v5412 = vmax.f32 %v5277, %v5337
    %v5413 = vmax.f32 %v5278, %v5339
    %v5414 = vmax.f32 %v5279, %v5341
    %v5415 = vmax.f32 %v5280, %v5343
    %v5416 = vmax.f32 %v5281, %v5345
    %v5417 = vmax.f32 %v5282, %v5347
    %v5418 = vmax.f32 %v5283, %v5349
    %v5419 = vmax.f32 %v5284, %v5351
    %v5420 = vmax.f32 %v5285, %v5353
    %v5421 = vmax.f32 %v5286, %v5355
    %v5422 = vmax.f32 %v5287, %v5357
    %v5423 = vmax.f32 %v5288, %v5359
    %v5424 = vmax.f32 %v5289, %v5361
    %v5425 = vmax.f32 %v5290, %v5363
    %v5426 = vmax.f32 %v5291, %v5365
    %v5427 = vmax.f32 %v5292, %v5367
    %v5428 = vmax.f32 %v5293, %v5369
    %v5429 = vmax.f32 %v5294, %v5371
    %v5430 = vmax.f32 %v5295, %v5373
    %v5431 = vmax.f32 %v5296, %v5375
    %v5432 = vmax.f32 %v5297, %v5377
    %v5433 = vmax.f32 %v5298, %v5379
    %5434 = vrot.lane.b32.xlu0 %v5272, 64
    %v5435 = vpop.permute.xlu0 %5434
    %5436 = vrot.lane.b32.xlu0 %v5273, 64
    %v5437 = vpop.permute.xlu0 %5436
    %5438 = vrot.lane.b32.xlu0 %v5274, 64
    %v5439 = vpop.permute.xlu0 %5438
    %5440 = vrot.lane.b32.xlu0 %v5275, 64
    %v5441 = vpop.permute.xlu0 %5440
    %5442 = vrot.lane.b32.xlu0 %v5276, 64
    %v5443 = vpop.permute.xlu0 %5442
    %5444 = vrot.lane.b32.xlu0 %v5277, 64
    %v5445 = vpop.permute.xlu0 %5444
    %5446 = vrot.lane.b32.xlu0 %v5278, 64
    %v5447 = vpop.permute.xlu0 %5446
    %5448 = vrot.lane.b32.xlu0 %v5279, 64
    %v5449 = vpop.permute.xlu0 %5448
    %5450 = vrot.lane.b32.xlu0 %v5280, 64
    %v5451 = vpop.permute.xlu0 %5450
    %5452 = vrot.lane.b32.xlu0 %v5281, 64
    %v5453 = vpop.permute.xlu0 %5452
    %5454 = vrot.lane.b32.xlu0 %v5282, 64
    %v5455 = vpop.permute.xlu0 %5454
    %5456 = vrot.lane.b32.xlu0 %v5283, 64
    %v5457 = vpop.permute.xlu0 %5456
    %5458 = vrot.lane.b32.xlu0 %v5284, 64
    %v5459 = vpop.permute.xlu0 %5458
    %5460 = vrot.lane.b32.xlu0 %v5285, 64
    %v5461 = vpop.permute.xlu0 %5460
    %5462 = vrot.lane.b32.xlu0 %v5286, 64
    %v5463 = vpop.permute.xlu0 %5462
    %5464 = vrot.lane.b32.xlu0 %v5287, 64
    %v5465 = vpop.permute.xlu0 %5464
    %5466 = vrot.lane.b32.xlu0 %v5288, 64
    %v5467 = vpop.permute.xlu0 %5466
    %5468 = vrot.lane.b32.xlu0 %v5289, 64
    %v5469 = vpop.permute.xlu0 %5468
    %5470 = vrot.lane.b32.xlu0 %v5290, 64
    %v5471 = vpop.permute.xlu0 %5470
    %5472 = vrot.lane.b32.xlu0 %v5291, 64
    %v5473 = vpop.permute.xlu0 %5472
    %5474 = vrot.lane.b32.xlu0 %v5292, 64
    %v5475 = vpop.permute.xlu0 %5474
    %5476 = vrot.lane.b32.xlu0 %v5293, 64
    %v5477 = vpop.permute.xlu0 %5476
    %5478 = vrot.lane.b32.xlu0 %v5294, 64
    %v5479 = vpop.permute.xlu0 %5478
    %5480 = vrot.lane.b32.xlu0 %v5295, 64
    %v5481 = vpop.permute.xlu0 %5480
    %5482 = vrot.lane.b32.xlu0 %v5296, 64
    %v5483 = vpop.permute.xlu0 %5482
    %5484 = vrot.lane.b32.xlu0 %v5297, 64
    %v5485 = vpop.permute.xlu0 %5484
    %5486 = vrot.lane.b32.xlu0 %v5298, 64
    %v5487 = vpop.permute.xlu0 %5486
    %v5515 = vmax.f32 %v5407, %v5435
    %v5516 = vmax.f32 %v5408, %v5437
    %v5517 = vmax.f32 %v5409, %v5439
    %v5518 = vmax.f32 %v5410, %v5441
    %v5519 = vmax.f32 %v5411, %v5443
    %v5520 = vmax.f32 %v5412, %v5445
    %v5521 = vmax.f32 %v5413, %v5447
    %v5522 = vmax.f32 %v5414, %v5449
    %v5523 = vmax.f32 %v5415, %v5451
    %v5524 = vmax.f32 %v5416, %v5453
    %v5525 = vmax.f32 %v5417, %v5455
    %v5526 = vmax.f32 %v5418, %v5457
    %v5527 = vmax.f32 %v5419, %v5459
    %v5528 = vmax.f32 %v5420, %v5461
    %v5529 = vmax.f32 %v5421, %v5463
    %v5530 = vmax.f32 %v5422, %v5465
    %v5531 = vmax.f32 %v5423, %v5467
    %v5532 = vmax.f32 %v5424, %v5469
    %v5533 = vmax.f32 %v5425, %v5471
    %v5534 = vmax.f32 %v5426, %v5473
    %v5535 = vmax.f32 %v5427, %v5475
    %v5536 = vmax.f32 %v5428, %v5477
    %v5537 = vmax.f32 %v5429, %v5479
    %v5538 = vmax.f32 %v5430, %v5481
    %v5539 = vmax.f32 %v5431, %v5483
    %v5540 = vmax.f32 %v5432, %v5485
    %v5541 = vmax.f32 %v5433, %v5487
    %v5569 = vrot.slane %v5515, 3
    %v5570 = vrot.slane %v5516, 3
    %v5571 = vsel %vm3944, %v5569, %v5570
    %v5572 = vrot.slane %v5517, 3
    %v5573 = vsel %vm3944, %v5570, %v5572
    %v5574 = vrot.slane %v5518, 3
    %v5575 = vsel %vm3944, %v5572, %v5574
    %v5576 = vrot.slane %v5519, 3
    %v5577 = vsel %vm3944, %v5574, %v5576
    %v5578 = vrot.slane %v5520, 3
    %v5579 = vsel %vm3944, %v5576, %v5578
    %v5580 = vrot.slane %v5521, 3
    %v5581 = vsel %vm3944, %v5578, %v5580
    %v5582 = vrot.slane %v5522, 3
    %v5583 = vsel %vm3944, %v5580, %v5582
    %v5584 = vrot.slane %v5523, 3
    %v5585 = vsel %vm3944, %v5582, %v5584
    %v5586 = vrot.slane %v5524, 3
    %v5587 = vsel %vm3944, %v5584, %v5586
    %v5588 = vrot.slane %v5525, 3
    %v5589 = vsel %vm3944, %v5586, %v5588
    %v5590 = vrot.slane %v5526, 3
    %v5591 = vsel %vm3944, %v5588, %v5590
    %v5592 = vrot.slane %v5527, 3
    %v5593 = vsel %vm3944, %v5590, %v5592
    %v5594 = vrot.slane %v5528, 3
    %v5595 = vsel %vm3944, %v5592, %v5594
    %v5596 = vrot.slane %v5529, 3
    %v5597 = vsel %vm3944, %v5594, %v5596
    %v5598 = vrot.slane %v5530, 3
    %v5599 = vsel %vm3944, %v5596, %v5598
    %v5600 = vrot.slane %v5531, 3
    %v5601 = vsel %vm3944, %v5598, %v5600
    %v5602 = vrot.slane %v5532, 3
    %v5603 = vsel %vm3944, %v5600, %v5602
    %v5604 = vrot.slane %v5533, 3
    %v5605 = vsel %vm3944, %v5602, %v5604
    %v5606 = vrot.slane %v5534, 3
    %v5607 = vsel %vm3944, %v5604, %v5606
    %v5608 = vrot.slane %v5535, 3
    %v5609 = vsel %vm3944, %v5606, %v5608
    %v5610 = vrot.slane %v5536, 3
    %v5611 = vsel %vm3944, %v5608, %v5610
    %v5612 = vrot.slane %v5537, 3
    %v5613 = vsel %vm3944, %v5610, %v5612
    %v5614 = vrot.slane %v5538, 3
    %v5615 = vsel %vm3944, %v5612, %v5614
    %v5616 = vrot.slane %v5539, 3
    %v5617 = vsel %vm3944, %v5614, %v5616
    %v5618 = vrot.slane %v5540, 3
    %v5619 = vsel %vm3944, %v5616, %v5618
    %v5620 = vrot.slane %v5541, 3
    %v5621 = vsel %vm3944, %v5618, %v5620
    %v5649 = vsel %vm3944, %v5620, 0.0
    %v5650 = vmax.f32 %v5515, %v5571
    %v5651 = vmax.f32 %v5516, %v5573
    %v5652 = vmax.f32 %v5517, %v5575
    %v5653 = vmax.f32 %v5518, %v5577
    %v5654 = vmax.f32 %v5519, %v5579
    %v5655 = vmax.f32 %v5520, %v5581
    %v5656 = vmax.f32 %v5521, %v5583
    %v5657 = vmax.f32 %v5522, %v5585
    %v5658 = vmax.f32 %v5523, %v5587
    %v5659 = vmax.f32 %v5524, %v5589
    %v5660 = vmax.f32 %v5525, %v5591
    %v5661 = vmax.f32 %v5526, %v5593
    %v5662 = vmax.f32 %v5527, %v5595
    %v5663 = vmax.f32 %v5528, %v5597
    %v5664 = vmax.f32 %v5529, %v5599
    %v5665 = vmax.f32 %v5530, %v5601
    %v5666 = vmax.f32 %v5531, %v5603
    %v5667 = vmax.f32 %v5532, %v5605
    %v5668 = vmax.f32 %v5533, %v5607
    %v5669 = vmax.f32 %v5534, %v5609
    %v5670 = vmax.f32 %v5535, %v5611
    %v5671 = vmax.f32 %v5536, %v5613
    %v5672 = vmax.f32 %v5537, %v5615
    %v5673 = vmax.f32 %v5538, %v5617
    %v5674 = vmax.f32 %v5539, %v5619
    %v5675 = vmax.f32 %v5540, %v5621
    %v5676 = vmax.f32 %v5541, %v5649
    %vm5677 = vcmask 1041408
    %v5678 = vrot.slane %v5515, 6
    %v5679 = vrot.slane %v5516, 6
    %v5680 = vsel %vm5677, %v5678, %v5679
    %v5681 = vrot.slane %v5517, 6
    %v5682 = vsel %vm5677, %v5679, %v5681
    %v5683 = vrot.slane %v5518, 6
    %v5684 = vsel %vm5677, %v5681, %v5683
    %v5685 = vrot.slane %v5519, 6
    %v5686 = vsel %vm5677, %v5683, %v5685
    %v5687 = vrot.slane %v5520, 6
    %v5688 = vsel %vm5677, %v5685, %v5687
    %v5689 = vrot.slane %v5521, 6
    %v5690 = vsel %vm5677, %v5687, %v5689
    %v5691 = vrot.slane %v5522, 6
    %v5692 = vsel %vm5677, %v5689, %v5691
    %v5693 = vrot.slane %v5523, 6
    %v5694 = vsel %vm5677, %v5691, %v5693
    %v5695 = vrot.slane %v5524, 6
    %v5696 = vsel %vm5677, %v5693, %v5695
    %v5697 = vrot.slane %v5525, 6
    %v5698 = vsel %vm5677, %v5695, %v5697
    %v5699 = vrot.slane %v5526, 6
    %v5700 = vsel %vm5677, %v5697, %v5699
    %v5701 = vrot.slane %v5527, 6
    %v5702 = vsel %vm5677, %v5699, %v5701
    %v5703 = vrot.slane %v5528, 6
    %v5704 = vsel %vm5677, %v5701, %v5703
    %v5705 = vrot.slane %v5529, 6
    %v5706 = vsel %vm5677, %v5703, %v5705
    %v5707 = vrot.slane %v5530, 6
    %v5708 = vsel %vm5677, %v5705, %v5707
    %v5709 = vrot.slane %v5531, 6
    %v5710 = vsel %vm5677, %v5707, %v5709
    %v5711 = vrot.slane %v5532, 6
    %v5712 = vsel %vm5677, %v5709, %v5711
    %v5713 = vrot.slane %v5533, 6
    %v5714 = vsel %vm5677, %v5711, %v5713
    %v5715 = vrot.slane %v5534, 6
    %v5716 = vsel %vm5677, %v5713, %v5715
    %v5717 = vrot.slane %v5535, 6
    %v5718 = vsel %vm5677, %v5715, %v5717
    %v5719 = vrot.slane %v5536, 6
    %v5720 = vsel %vm5677, %v5717, %v5719
    %v5721 = vrot.slane %v5537, 6
    %v5722 = vsel %vm5677, %v5719, %v5721
    %v5723 = vrot.slane %v5538, 6
    %v5724 = vsel %vm5677, %v5721, %v5723
    %v5725 = vrot.slane %v5539, 6
    %v5726 = vsel %vm5677, %v5723, %v5725
    %v5727 = vrot.slane %v5540, 6
    %v5728 = vsel %vm5677, %v5725, %v5727
    %v5729 = vrot.slane %v5541, 6
    %v5730 = vsel %vm5677, %v5727, %v5729
    %v5758 = vsel %vm5677, %v5729, 0.0
    %v5759 = vmax.f32 %v5650, %v5680
    %v5760 = vmax.f32 %v5651, %v5682
    %v5761 = vmax.f32 %v5652, %v5684
    %v5762 = vmax.f32 %v5653, %v5686
    %v5763 = vmax.f32 %v5654, %v5688
    %v5764 = vmax.f32 %v5655, %v5690
    %v5765 = vmax.f32 %v5656, %v5692
    %v5766 = vmax.f32 %v5657, %v5694
    %v5767 = vmax.f32 %v5658, %v5696
    %v5768 = vmax.f32 %v5659, %v5698
    %v5769 = vmax.f32 %v5660, %v5700
    %v5770 = vmax.f32 %v5661, %v5702
    %v5771 = vmax.f32 %v5662, %v5704
    %v5772 = vmax.f32 %v5663, %v5706
    %v5773 = vmax.f32 %v5664, %v5708
    %v5774 = vmax.f32 %v5665, %v5710
    %v5775 = vmax.f32 %v5666, %v5712
    %v5776 = vmax.f32 %v5667, %v5714
    %v5777 = vmax.f32 %v5668, %v5716
    %v5778 = vmax.f32 %v5669, %v5718
    %v5779 = vmax.f32 %v5670, %v5720
    %v5780 = vmax.f32 %v5671, %v5722
    %v5781 = vmax.f32 %v5672, %v5724
    %v5782 = vmax.f32 %v5673, %v5726
    %v5783 = vmax.f32 %v5674, %v5728
    %v5784 = vmax.f32 %v5675, %v5730
    %v5785 = vmax.f32 %v5676, %v5758
    %v5786 = vld [vmem:[%s8] sm:$0xff]
    %v5787 = vld [vmem:[%s8 + $0x8] sm:$0xff]
    %v5788 = vld [vmem:[%s8 + $0x10] sm:$0xff]
    %v5789 = vld [vmem:[%s8 + $0x18] sm:$0xff]
    %v5791 = vsel %vm744, %v5759, 0
    %v5794 = vsel %vm744, %v5760, 0
    %v5797 = vsel %vm744, %v5761, 0
    %v5800 = vsel %vm744, %v5762, 0
    %v5803 = vsel %vm744, %v5763, 0
    %v5806 = vsel %vm744, %v5764, 0
    %v5809 = vsel %vm744, %v5765, 0
    %v5812 = vsel %vm744, %v5766, 0
    %v5815 = vsel %vm744, %v5767, 0
    %v5818 = vsel %vm744, %v5768, 0
    %v5821 = vsel %vm744, %v5769, 0
    %v5824 = vsel %vm744, %v5770, 0
    %v5827 = vsel %vm744, %v5771, 0
    %v5830 = vsel %vm744, %v5772, 0
    %v5833 = vsel %vm744, %v5773, 0
    %v5836 = vsel %vm744, %v5774, 0
    %v5839 = vsel %vm744, %v5775, 0
    %v5842 = vsel %vm744, %v5776, 0
    %v5845 = vsel %vm744, %v5777, 0
    %v5848 = vsel %vm744, %v5778, 0
    %v5851 = vsel %vm744, %v5779, 0
    %v5854 = vsel %vm744, %v5780, 0
    %v5857 = vsel %vm744, %v5781, 0
    %v5860 = vsel %vm744, %v5782, 0
    %v5863 = vsel %vm744, %v5783, 0
    %v5866 = vsel %vm744, %v5784, 0
    %v5869 = vsel %vm744, %v5785, 0
    %5871 = vmatprep.subr.mxu0 0.0
    %5872 = vmatpush1.msra.mxu0 %v5786
    %5873 = vmatprep.subr.mxu0 0.0
    %5874 = vmatpush1.msra.mxu0 %v5787
    %5875 = vmatprep.subr.mxu0 0.0
    %5876 = vmatpush1.msra.mxu0 %v5788
    %5877 = vmatprep.subr.mxu0 0.0
    %5878 = vmatpush1.msra.mxu0 %v5789
    %5879 = vmatprep.subr.mxu0 0.0
    %5880 = vmatpush1.msra.mxu0 0.0
    %5881 = vmatprep.subr.mxu0 0.0
    %5882 = vmatpush1.msra.mxu0 0.0
    %5883 = vmatprep.subr.mxu0 0.0
    %5884 = vmatpush1.msra.mxu0 0.0
    %5885 = vmatprep.subr.mxu0 0.0
    %5886 = vmatpush1.msra.mxu0 0.0
    %5887 = vmatprep.subr.mxu0 0.0
    %5888 = vmatpush1.msra.mxu0 0.0
    %5889 = vmatprep.subr.mxu0 0.0
    %5890 = vmatpush1.msra.mxu0 0.0
    %5891 = vmatprep.subr.mxu0 0.0
    %5892 = vmatpush1.msra.mxu0 0.0
    %5893 = vmatprep.subr.mxu0 0.0
    %5894 = vmatpush1.msra.mxu0 0.0
    %5895 = vmatprep.subr.mxu0 0.0
    %5896 = vmatpush1.msra.mxu0 0.0
    %5897 = vmatprep.subr.mxu0 0.0
    %5898 = vmatpush1.msra.mxu0 0.0
    %5899 = vmatprep.subr.mxu0 0.0
    %5900 = vmatpush1.msra.mxu0 0.0
    %5901 = vmatprep.subr.mxu0 0.0
    %5902 = vmatpush1.msra.mxu0 0.0
    %5903 = vmatprep.subr.mxu0 0.0
    %5904 = vmatpush1.msra.mxu0 0.0
    %5905 = vmatprep.subr.mxu0 0.0
    %5906 = vmatpush1.msra.mxu0 0.0
    %5907 = vmatprep.subr.mxu0 0.0
    %5908 = vmatpush1.msra.mxu0 0.0
    %5909 = vmatprep.subr.mxu0 0.0
    %5910 = vmatpush1.msra.mxu0 0.0
    %5911 = vmatprep.subr.mxu0 0.0
    %5912 = vmatpush1.msra.mxu0 0.0
    %5913 = vmatprep.subr.mxu0 0.0
    %5914 = vmatpush1.msra.mxu0 0.0
    %5915 = vmatprep.subr.mxu0 0.0
    %5916 = vmatpush1.msra.mxu0 0.0
    %5917 = vmatprep.subr.mxu0 0.0
    %5918 = vmatpush1.msra.mxu0 0.0
    %5919 = vmatprep.subr.mxu0 0.0
    %5920 = vmatpush1.msra.mxu0 0.0
    %5921 = vmatprep.subr.mxu0 0.0
    %5922 = vmatpush1.msra.mxu0 0.0
    %5923 = vmatprep.subr.mxu0 0.0
    %5924 = vmatpush1.msra.mxu0 0.0
    %5925 = vmatprep.subr.mxu0 0.0
    %5926 = vmatpush1.msra.mxu0 0.0
    %5927 = vmatprep.subr.mxu0 0.0
    %5928 = vmatpush1.msra.mxu0 0.0
    %5929 = vmatprep.subr.mxu0 0.0
    %5930 = vmatpush1.msra.mxu0 0.0
    %5931 = vmatprep.subr.mxu0 0.0
    %5932 = vmatpush1.msra.mxu0 0.0
    %5933 = vmatprep.subr.mxu0 0.0
    %5934 = vmatpush1.msra.mxu0 0.0
    %5935 = vmatprep.mubr.f32.mxu0 0.0
    %5936 = vmatmul.mubr.f32.gmra.mrb[0].mxu0 %v5791
    %v5937 = vpop.f32.mrb[0].mxu0
    %v5938 = vadd.f32 0.0, %v5937
    %v5939 = vpop.f32.mrb[0].mxu0
    %5940 = vmatprep.mubr.f32.mxu0 0.0
    %5941 = vmatmul.mubr.f32.gmra.mrb[0].mxu0 %v5794
    %v5942 = vpop.f32.mrb[0].mxu0
    %v5943 = vadd.f32 0.0, %v5942
    %v5944 = vpop.f32.mrb[0].mxu0
    %5945 = vmatprep.mubr.f32.mxu0 0.0
    %5946 = vmatmul.mubr.f32.gmra.mrb[0].mxu0 %v5797
    %v5947 = vpop.f32.mrb[0].mxu0
    %v5948 = vadd.f32 0.0, %v5947
    %v5949 = vpop.f32.mrb[0].mxu0
    %5950 = vmatprep.mubr.f32.mxu0 0.0
    %5951 = vmatmul.mubr.f32.gmra.mrb[0].mxu0 %v5800
    %v5952 = vpop.f32.mrb[0].mxu0
    %v5953 = vadd.f32 0.0, %v5952
    %v5954 = vpop.f32.mrb[0].mxu0
    %5955 = vmatprep.mubr.f32.mxu0 0.0
    %5956 = vmatmul.mubr.f32.gmra.mrb[0].mxu0 %v5803
    %v5957 = vpop.f32.mrb[0].mxu0
    %v5958 = vadd.f32 0.0, %v5957
    %v5959 = vpop.f32.mrb[0].mxu0
    %5960 = vmatprep.mubr.f32.mxu0 0.0
    %5961 = vmatmul.mubr.f32.gmra.mrb[0].mxu0 %v5806
    %v5962 = vpop.f32.mrb[0].mxu0
    %v5963 = vadd.f32 0.0, %v5962
    %v5964 = vpop.f32.mrb[0].mxu0
    %5965 = vmatprep.mubr.f32.mxu0 0.0
    %5966 = vmatmul.mubr.f32.gmra.mrb[0].mxu0 %v5809
    %v5967 = vpop.f32.mrb[0].mxu0
    %v5968 = vadd.f32 0.0, %v5967
    %v5969 = vpop.f32.mrb[0].mxu0
    %5970 = vmatprep.mubr.f32.mxu0 0.0
    %5971 = vmatmul.mubr.f32.gmra.mrb[0].mxu0 %v5812
    %v5972 = vpop.f32.mrb[0].mxu0
    %v5973 = vadd.f32 0.0, %v5972
    %v5974 = vpop.f32.mrb[0].mxu0
    %5975 = vmatprep.mubr.f32.mxu0 0.0
    %5976 = vmatmul.mubr.f32.gmra.mrb[0].mxu0 %v5815
    %v5977 = vpop.f32.mrb[0].mxu0
    %v5978 = vadd.f32 0.0, %v5977
    %v5979 = vpop.f32.mrb[0].mxu0
    %5980 = vmatprep.mubr.f32.mxu0 0.0
    %5981 = vmatmul.mubr.f32.gmra.mrb[0].mxu0 %v5818
    %v5982 = vpop.f32.mrb[0].mxu0
    %v5983 = vadd.f32 0.0, %v5982
    %v5984 = vpop.f32.mrb[0].mxu0
    %5985 = vmatprep.mubr.f32.mxu0 0.0
    %5986 = vmatmul.mubr.f32.gmra.mrb[0].mxu0 %v5821
    %v5987 = vpop.f32.mrb[0].mxu0
    %v5988 = vadd.f32 0.0, %v5987
    %v5989 = vpop.f32.mrb[0].mxu0
    %5990 = vmatprep.mubr.f32.mxu0 0.0
    %5991 = vmatmul.mubr.f32.gmra.mrb[0].mxu0 %v5824
    %v5992 = vpop.f32.mrb[0].mxu0
    %v5993 = vadd.f32 0.0, %v5992
    %v5994 = vpop.f32.mrb[0].mxu0
    %5995 = vmatprep.mubr.f32.mxu0 0.0
    %5996 = vmatmul.mubr.f32.gmra.mrb[0].mxu0 %v5827
    %v5997 = vpop.f32.mrb[0].mxu0
    %v5998 = vadd.f32 0.0, %v5997
    %v5999 = vpop.f32.mrb[0].mxu0
    %6000 = vmatprep.mubr.f32.mxu0 0.0
    %6001 = vmatmul.mubr.f32.gmra.mrb[0].mxu0 %v5830
    %v6002 = vpop.f32.mrb[0].mxu0
    %v6003 = vadd.f32 0.0, %v6002
    %v6004 = vpop.f32.mrb[0].mxu0
    %6005 = vmatprep.mubr.f32.mxu0 0.0
    %6006 = vmatmul.mubr.f32.gmra.mrb[0].mxu0 %v5833
    %v6007 = vpop.f32.mrb[0].mxu0
    %v6008 = vadd.f32 0.0, %v6007
    %v6009 = vpop.f32.mrb[0].mxu0
    %6010 = vmatprep.mubr.f32.mxu0 0.0
    %6011 = vmatmul.mubr.f32.gmra.mrb[0].mxu0 %v5836
    %v6012 = vpop.f32.mrb[0].mxu0
    %v6013 = vadd.f32 0.0, %v6012
    %v6014 = vpop.f32.mrb[0].mxu0
    %6015 = vmatprep.mubr.f32.mxu0 0.0
    %6016 = vmatmul.mubr.f32.gmra.mrb[0].mxu0 %v5839
    %v6017 = vpop.f32.mrb[0].mxu0
    %v6018 = vadd.f32 0.0, %v6017
    %v6019 = vpop.f32.mrb[0].mxu0
    %6020 = vmatprep.mubr.f32.mxu0 0.0
    %6021 = vmatmul.mubr.f32.gmra.mrb[0].mxu0 %v5842
    %v6022 = vpop.f32.mrb[0].mxu0
    %v6023 = vadd.f32 0.0, %v6022
    %v6024 = vpop.f32.mrb[0].mxu0
    %6025 = vmatprep.mubr.f32.mxu0 0.0
    %6026 = vmatmul.mubr.f32.gmra.mrb[0].mxu0 %v5845
    %v6027 = vpop.f32.mrb[0].mxu0
    %v6028 = vadd.f32 0.0, %v6027
    %v6029 = vpop.f32.mrb[0].mxu0
    %6030 = vmatprep.mubr.f32.mxu0 0.0
    %6031 = vmatmul.mubr.f32.gmra.mrb[0].mxu0 %v5848
    %v6032 = vpop.f32.mrb[0].mxu0
    %v6033 = vadd.f32 0.0, %v6032
    %v6034 = vpop.f32.mrb[0].mxu0
    %6035 = vmatprep.mubr.f32.mxu0 0.0
    %6036 = vmatmul.mubr.f32.gmra.mrb[0].mxu0 %v5851
    %v6037 = vpop.f32.mrb[0].mxu0
    %v6038 = vadd.f32 0.0, %v6037
    %v6039 = vpop.f32.mrb[0].mxu0
    %6040 = vmatprep.mubr.f32.mxu0 0.0
    %6041 = vmatmul.mubr.f32.gmra.mrb[0].mxu0 %v5854
    %v6042 = vpop.f32.mrb[0].mxu0
    %v6043 = vadd.f32 0.0, %v6042
    %v6044 = vpop.f32.mrb[0].mxu0
    %6045 = vmatprep.mubr.f32.mxu0 0.0
    %6046 = vmatmul.mubr.f32.gmra.mrb[0].mxu0 %v5857
    %v6047 = vpop.f32.mrb[0].mxu0
    %v6048 = vadd.f32 0.0, %v6047
    %v6049 = vpop.f32.mrb[0].mxu0
    %6050 = vmatprep.mubr.f32.mxu0 0.0
    %6051 = vmatmul.mubr.f32.gmra.mrb[0].mxu0 %v5860
    %v6052 = vpop.f32.mrb[0].mxu0
    %v6053 = vadd.f32 0.0, %v6052
    %v6054 = vpop.f32.mrb[0].mxu0
    %6055 = vmatprep.mubr.f32.mxu0 0.0
    %6056 = vmatmul.mubr.f32.gmra.mrb[0].mxu0 %v5863
    %v6057 = vpop.f32.mrb[0].mxu0
    %v6058 = vadd.f32 0.0, %v6057
    %v6059 = vpop.f32.mrb[0].mxu0
    %6060 = vmatprep.mubr.f32.mxu0 0.0
    %6061 = vmatmul.mubr.f32.gmra.mrb[0].mxu0 %v5866
    %v6062 = vpop.f32.mrb[0].mxu0
    %v6063 = vadd.f32 0.0, %v6062
    %v6064 = vpop.f32.mrb[0].mxu0
    %6065 = vmatprep.mubr.f32.mxu0 0.0
    %6066 = vmatmul.mubr.f32.gmra.mrb[0].mxu0 %v5869
    %v6067 = vpop.f32.mrb[0].mxu0
    %v6068 = vadd.f32 0.0, %v6067
    %v6069 = vpop.f32.mrb[0].mxu0
    %6070 = vdwg.mxu0
    %v6071 = vld [vmem:[%s9] sm:$0xff]
    %v6072 = vld [vmem:[%s9 + $0x8] sm:$0xff]
    %v6073 = vld [vmem:[%s9 + $0x10] sm:$0xff]
    %v6074 = vld [vmem:[%s9 + $0x18] sm:$0xff]
    %v6075 = vld [vmem:[%s9 + $0x20] sm:$0xff]
    %v6076 = vld [vmem:[%s9 + $0x28] sm:$0xff]
    %v6077 = vld [vmem:[%s9 + $0x30] sm:$0xff]
    %v6078 = vld [vmem:[%s9 + $0x38] sm:$0xff]
    %v6079 = vld [vmem:[%s9 + $0x40] sm:$0xff]
    %v6080 = vld [vmem:[%s9 + $0x48] sm:$0xff]
    %v6081 = vld [vmem:[%s9 + $0x50] sm:$0xff]
    %v6082 = vld [vmem:[%s9 + $0x58] sm:$0xff]
    %v6083 = vld [vmem:[%s9 + $0x60] sm:$0xff]
    %v6084 = vld [vmem:[%s9 + $0x68] sm:$0xff]
    %v6085 = vld [vmem:[%s9 + $0x70] sm:$0xff]
    %v6086 = vld [vmem:[%s9 + $0x78] sm:$0xff]
    %v6087 = vld [vmem:[%s9 + $0x80] sm:$0xff]
    %v6088 = vld [vmem:[%s9 + $0x88] sm:$0xff]
    %v6089 = vld [vmem:[%s9 + $0x90] sm:$0xff]
    %v6090 = vld [vmem:[%s9 + $0x98] sm:$0xff]
    %v6091 = vld [vmem:[%s9 + $0xa0] sm:$0xff]
    %v6092 = vld [vmem:[%s9 + $0xa8] sm:$0xff]
    %v6093 = vld [vmem:[%s9 + $0xb0] sm:$0xff]
    %v6094 = vld [vmem:[%s9 + $0xb8] sm:$0xff]
    %v6095 = vld [vmem:[%s9 + $0xc0] sm:$0xff]
    %v6096 = vld [vmem:[%s9 + $0xc8] sm:$0xff]
    %v6097 = vld [vmem:[%s9 + $0xd0] sm:$0xff]
    %6099 = vset.pattern.permute.xlu0 0
    %6100 = vperm.xlu0 %6099, %v5938
    %v6101 = vpop.permute.xlu0 %6100
    %6104 = vset.pattern.permute.xlu0 0
    %6105 = vperm.xlu0 %6104, %v5943
    %v6106 = vpop.permute.xlu0 %6105
    %6109 = vset.pattern.permute.xlu0 0
    %6110 = vperm.xlu0 %6109, %v5948
    %v6111 = vpop.permute.xlu0 %6110
    %6114 = vset.pattern.permute.xlu0 0
    %6115 = vperm.xlu0 %6114, %v5953
    %v6116 = vpop.permute.xlu0 %6115
    %6119 = vset.pattern.permute.xlu0 0
    %6120 = vperm.xlu0 %6119, %v5958
    %v6121 = vpop.permute.xlu0 %6120
    %6124 = vset.pattern.permute.xlu0 0
    %6125 = vperm.xlu0 %6124, %v5963
    %v6126 = vpop.permute.xlu0 %6125
    %6129 = vset.pattern.permute.xlu0 0
    %6130 = vperm.xlu0 %6129, %v5968
    %v6131 = vpop.permute.xlu0 %6130
    %6134 = vset.pattern.permute.xlu0 0
    %6135 = vperm.xlu0 %6134, %v5973
    %v6136 = vpop.permute.xlu0 %6135
    %6139 = vset.pattern.permute.xlu0 0
    %6140 = vperm.xlu0 %6139, %v5978
    %v6141 = vpop.permute.xlu0 %6140
    %6144 = vset.pattern.permute.xlu0 0
    %6145 = vperm.xlu0 %6144, %v5983
    %v6146 = vpop.permute.xlu0 %6145
    %6149 = vset.pattern.permute.xlu0 0
    %6150 = vperm.xlu0 %6149, %v5988
    %v6151 = vpop.permute.xlu0 %6150
    %6154 = vset.pattern.permute.xlu0 0
    %6155 = vperm.xlu0 %6154, %v5993
    %v6156 = vpop.permute.xlu0 %6155
    %6159 = vset.pattern.permute.xlu0 0
    %6160 = vperm.xlu0 %6159, %v5998
    %v6161 = vpop.permute.xlu0 %6160
    %6164 = vset.pattern.permute.xlu0 0
    %6165 = vperm.xlu0 %6164, %v6003
    %v6166 = vpop.permute.xlu0 %6165
    %6169 = vset.pattern.permute.xlu0 0
    %6170 = vperm.xlu0 %6169, %v6008
    %v6171 = vpop.permute.xlu0 %6170
    %6174 = vset.pattern.permute.xlu0 0
    %6175 = vperm.xlu0 %6174, %v6013
    %v6176 = vpop.permute.xlu0 %6175
    %6179 = vset.pattern.permute.xlu0 0
    %6180 = vperm.xlu0 %6179, %v6018
    %v6181 = vpop.permute.xlu0 %6180
    %6184 = vset.pattern.permute.xlu0 0
    %6185 = vperm.xlu0 %6184, %v6023
    %v6186 = vpop.permute.xlu0 %6185
    %6189 = vset.pattern.permute.xlu0 0
    %6190 = vperm.xlu0 %6189, %v6028
    %v6191 = vpop.permute.xlu0 %6190
    %6194 = vset.pattern.permute.xlu0 0
    %6195 = vperm.xlu0 %6194, %v6033
    %v6196 = vpop.permute.xlu0 %6195
    %6199 = vset.pattern.permute.xlu0 0
    %6200 = vperm.xlu0 %6199, %v6038
    %v6201 = vpop.permute.xlu0 %6200
    %6204 = vset.pattern.permute.xlu0 0
    %6205 = vperm.xlu0 %6204, %v6043
    %v6206 = vpop.permute.xlu0 %6205
    %6209 = vset.pattern.permute.xlu0 0
    %6210 = vperm.xlu0 %6209, %v6048
    %v6211 = vpop.permute.xlu0 %6210
    %6214 = vset.pattern.permute.xlu0 0
    %6215 = vperm.xlu0 %6214, %v6053
    %v6216 = vpop.permute.xlu0 %6215
    %6219 = vset.pattern.permute.xlu0 0
    %6220 = vperm.xlu0 %6219, %v6058
    %v6221 = vpop.permute.xlu0 %6220
    %6224 = vset.pattern.permute.xlu0 0
    %6225 = vperm.xlu0 %6224, %v6063
    %v6226 = vpop.permute.xlu0 %6225
    %6229 = vset.pattern.permute.xlu0 0
    %6230 = vperm.xlu0 %6229, %v6068
    %v6231 = vpop.permute.xlu0 %6230
    %v6233 = vmul.f32 %v6101, %v6071
    %v6234 = vmul.f32 %v6106, %v6072
    %v6235 = vmul.f32 %v6111, %v6073
    %v6236 = vmul.f32 %v6116, %v6074
    %v6237 = vmul.f32 %v6121, %v6075
    %v6238 = vmul.f32 %v6126, %v6076
    %v6239 = vmul.f32 %v6131, %v6077
    %v6240 = vmul.f32 %v6136, %v6078
    %v6241 = vmul.f32 %v6141, %v6079
    %v6242 = vmul.f32 %v6146, %v6080
    %v6243 = vmul.f32 %v6151, %v6081
    %v6244 = vmul.f32 %v6156, %v6082
    %v6245 = vmul.f32 %v6161, %v6083
    %v6246 = vmul.f32 %v6166, %v6084
    %v6247 = vmul.f32 %v6171, %v6085
    %v6248 = vmul.f32 %v6176, %v6086
    %v6249 = vmul.f32 %v6181, %v6087
    %v6250 = vmul.f32 %v6186, %v6088
    %v6251 = vmul.f32 %v6191, %v6089
    %v6252 = vmul.f32 %v6196, %v6090
    %v6253 = vmul.f32 %v6201, %v6091
    %v6254 = vmul.f32 %v6206, %v6092
    %v6255 = vmul.f32 %v6211, %v6093
    %v6256 = vmul.f32 %v6216, %v6094
    %v6257 = vmul.f32 %v6221, %v6095
    %v6258 = vmul.f32 %v6226, %v6096
    %v6259 = vmul.f32 %v6231, %v6097
    %v6260 = vld [vmem:[%s10] sm:$0xff]
    %v6261 = vld [vmem:[%s10 + $0x8] sm:$0xff]
    %v6262 = vld [vmem:[%s10 + $0x10] sm:$0xff]
    %v6263 = vld [vmem:[%s10 + $0x18] sm:$0xff]
    %v6264 = vld [vmem:[%s10 + $0x20] sm:$0xff]
    %v6265 = vld [vmem:[%s10 + $0x28] sm:$0xff]
    %v6266 = vld [vmem:[%s10 + $0x30] sm:$0xff]
    %v6267 = vld [vmem:[%s10 + $0x38] sm:$0xff]
    %v6268 = vld [vmem:[%s10 + $0x40] sm:$0xff]
    %v6269 = vld [vmem:[%s10 + $0x48] sm:$0xff]
    %v6270 = vld [vmem:[%s10 + $0x50] sm:$0xff]
    %v6271 = vld [vmem:[%s10 + $0x58] sm:$0xff]
    %v6272 = vld [vmem:[%s10 + $0x60] sm:$0xff]
    %v6273 = vld [vmem:[%s10 + $0x68] sm:$0xff]
    %v6274 = vld [vmem:[%s10 + $0x70] sm:$0xff]
    %v6275 = vld [vmem:[%s10 + $0x78] sm:$0xff]
    %v6276 = vld [vmem:[%s10 + $0x80] sm:$0xff]
    %v6277 = vld [vmem:[%s10 + $0x88] sm:$0xff]
    %v6278 = vld [vmem:[%s10 + $0x90] sm:$0xff]
    %v6279 = vld [vmem:[%s10 + $0x98] sm:$0xff]
    %v6280 = vld [vmem:[%s10 + $0xa0] sm:$0xff]
    %v6281 = vld [vmem:[%s10 + $0xa8] sm:$0xff]
    %v6282 = vld [vmem:[%s10 + $0xb0] sm:$0xff]
    %v6283 = vld [vmem:[%s10 + $0xb8] sm:$0xff]
    %v6284 = vld [vmem:[%s10 + $0xc0] sm:$0xff]
    %v6285 = vld [vmem:[%s10 + $0xc8] sm:$0xff]
    %v6286 = vld [vmem:[%s10 + $0xd0] sm:$0xff]
    %6287 = vset.pattern.permute.xlu0 1
    %6288 = vperm.xlu0 %6287, %v5938
    %v6289 = vpop.permute.xlu0 %6288
    %6291 = vset.pattern.permute.xlu0 1
    %6292 = vperm.xlu0 %6291, %v5943
    %v6293 = vpop.permute.xlu0 %6292
    %6295 = vset.pattern.permute.xlu0 1
    %6296 = vperm.xlu0 %6295, %v5948
    %v6297 = vpop.permute.xlu0 %6296
    %6299 = vset.pattern.permute.xlu0 1
    %6300 = vperm.xlu0 %6299, %v5953
    %v6301 = vpop.permute.xlu0 %6300
    %6303 = vset.pattern.permute.xlu0 1
    %6304 = vperm.xlu0 %6303, %v5958
    %v6305 = vpop.permute.xlu0 %6304
    %6307 = vset.pattern.permute.xlu0 1
    %6308 = vperm.xlu0 %6307, %v5963
    %v6309 = vpop.permute.xlu0 %6308
    %6311 = vset.pattern.permute.xlu0 1
    %6312 = vperm.xlu0 %6311, %v5968
    %v6313 = vpop.permute.xlu0 %6312
    %6315 = vset.pattern.permute.xlu0 1
    %6316 = vperm.xlu0 %6315, %v5973
    %v6317 = vpop.permute.xlu0 %6316
    %6319 = vset.pattern.permute.xlu0 1
    %6320 = vperm.xlu0 %6319, %v5978
    %v6321 = vpop.permute.xlu0 %6320
    %6323 = vset.pattern.permute.xlu0 1
    %6324 = vperm.xlu0 %6323, %v5983
    %v6325 = vpop.permute.xlu0 %6324
    %6327 = vset.pattern.permute.xlu0 1
    %6328 = vperm.xlu0 %6327, %v5988
    %v6329 = vpop.permute.xlu0 %6328
    %6331 = vset.pattern.permute.xlu0 1
    %6332 = vperm.xlu0 %6331, %v5993
    %v6333 = vpop.permute.xlu0 %6332
    %6335 = vset.pattern.permute.xlu0 1
    %6336 = vperm.xlu0 %6335, %v5998
    %v6337 = vpop.permute.xlu0 %6336
    %6339 = vset.pattern.permute.xlu0 1
    %6340 = vperm.xlu0 %6339, %v6003
    %v6341 = vpop.permute.xlu0 %6340
    %6343 = vset.pattern.permute.xlu0 1
    %6344 = vperm.xlu0 %6343, %v6008
    %v6345 = vpop.permute.xlu0 %6344
    %6347 = vset.pattern.permute.xlu0 1
    %6348 = vperm.xlu0 %6347, %v6013
    %v6349 = vpop.permute.xlu0 %6348
    %6351 = vset.pattern.permute.xlu0 1
    %6352 = vperm.xlu0 %6351, %v6018
    %v6353 = vpop.permute.xlu0 %6352
    %6355 = vset.pattern.permute.xlu0 1
    %6356 = vperm.xlu0 %6355, %v6023
    %v6357 = vpop.permute.xlu0 %6356
    %6359 = vset.pattern.permute.xlu0 1
    %6360 = vperm.xlu0 %6359, %v6028
    %v6361 = vpop.permute.xlu0 %6360
    %6363 = vset.pattern.permute.xlu0 1
    %6364 = vperm.xlu0 %6363, %v6033
    %v6365 = vpop.permute.xlu0 %6364
    %6367 = vset.pattern.permute.xlu0 1
    %6368 = vperm.xlu0 %6367, %v6038
    %v6369 = vpop.permute.xlu0 %6368
    %6371 = vset.pattern.permute.xlu0 1
    %6372 = vperm.xlu0 %6371, %v6043
    %v6373 = vpop.permute.xlu0 %6372
    %6375 = vset.pattern.permute.xlu0 1
    %6376 = vperm.xlu0 %6375, %v6048
    %v6377 = vpop.permute.xlu0 %6376
    %6379 = vset.pattern.permute.xlu0 1
    %6380 = vperm.xlu0 %6379, %v6053
    %v6381 = vpop.permute.xlu0 %6380
    %6383 = vset.pattern.permute.xlu0 1
    %6384 = vperm.xlu0 %6383, %v6058
    %v6385 = vpop.permute.xlu0 %6384
    %6387 = vset.pattern.permute.xlu0 1
    %6388 = vperm.xlu0 %6387, %v6063
    %v6389 = vpop.permute.xlu0 %6388
    %6391 = vset.pattern.permute.xlu0 1
    %6392 = vperm.xlu0 %6391, %v6068
    %v6393 = vpop.permute.xlu0 %6392
    %v6395 = vmul.f32 %v6289, %v6260
    %v6396 = vmul.f32 %v6293, %v6261
    %v6397 = vmul.f32 %v6297, %v6262
    %v6398 = vmul.f32 %v6301, %v6263
    %v6399 = vmul.f32 %v6305, %v6264
    %v6400 = vmul.f32 %v6309, %v6265
    %v6401 = vmul.f32 %v6313, %v6266
    %v6402 = vmul.f32 %v6317, %v6267
    %v6403 = vmul.f32 %v6321, %v6268
    %v6404 = vmul.f32 %v6325, %v6269
    %v6405 = vmul.f32 %v6329, %v6270
    %v6406 = vmul.f32 %v6333, %v6271
    %v6407 = vmul.f32 %v6337, %v6272
    %v6408 = vmul.f32 %v6341, %v6273
    %v6409 = vmul.f32 %v6345, %v6274
    %v6410 = vmul.f32 %v6349, %v6275
    %v6411 = vmul.f32 %v6353, %v6276
    %v6412 = vmul.f32 %v6357, %v6277
    %v6413 = vmul.f32 %v6361, %v6278
    %v6414 = vmul.f32 %v6365, %v6279
    %v6415 = vmul.f32 %v6369, %v6280
    %v6416 = vmul.f32 %v6373, %v6281
    %v6417 = vmul.f32 %v6377, %v6282
    %v6418 = vmul.f32 %v6381, %v6283
    %v6419 = vmul.f32 %v6385, %v6284
    %v6420 = vmul.f32 %v6389, %v6285
    %v6421 = vmul.f32 %v6393, %v6286
    %v6422 = vadd.f32 %v6233, %v6395
    %v6423 = vadd.f32 %v6234, %v6396
    %v6424 = vadd.f32 %v6235, %v6397
    %v6425 = vadd.f32 %v6236, %v6398
    %v6426 = vadd.f32 %v6237, %v6399
    %v6427 = vadd.f32 %v6238, %v6400
    %v6428 = vadd.f32 %v6239, %v6401
    %v6429 = vadd.f32 %v6240, %v6402
    %v6430 = vadd.f32 %v6241, %v6403
    %v6431 = vadd.f32 %v6242, %v6404
    %v6432 = vadd.f32 %v6243, %v6405
    %v6433 = vadd.f32 %v6244, %v6406
    %v6434 = vadd.f32 %v6245, %v6407
    %v6435 = vadd.f32 %v6246, %v6408
    %v6436 = vadd.f32 %v6247, %v6409
    %v6437 = vadd.f32 %v6248, %v6410
    %v6438 = vadd.f32 %v6249, %v6411
    %v6439 = vadd.f32 %v6250, %v6412
    %v6440 = vadd.f32 %v6251, %v6413
    %v6441 = vadd.f32 %v6252, %v6414
    %v6442 = vadd.f32 %v6253, %v6415
    %v6443 = vadd.f32 %v6254, %v6416
    %v6444 = vadd.f32 %v6255, %v6417
    %v6445 = vadd.f32 %v6256, %v6418
    %v6446 = vadd.f32 %v6257, %v6419
    %v6447 = vadd.f32 %v6258, %v6420
    %v6448 = vadd.f32 %v6259, %v6421
    %v6449 = vld [vmem:[%s11] sm:$0xf]
    %v6450 = vld [vmem:[#allocation2] sm:$0x1]
    %v6452 = vlaneseq
    %v6453 = vshrl.u32 %v6452, 7
    %v6454 = vsub.s32 0, %v6453
    %v6455 = vrot.slane %v6450, %v6454
    %6456 = vset.pattern.permute.xlu0 0
    %6457 = vperm.xlu0 %6456, %v6455
    %v6458 = vpop.permute.xlu0 %6457
    %v6462 = vunpack.c.l.s4 1983009808
    %v6463 = vunpack.c.0.s8 %v6462
    %v6464 = vlaneseq
    %v6465 = vshrl.u32 %v6464, 7
    %v6466 = vsub.s32 %v6463, %v6465
    %v6467 = vrot.slane %v6449, %v6466
    %v6468 = vcombine.high %v6467, %v6467
    %vm6470 = vcmask 719872
    %v6471 = vsel %vm6470, %v6468, 0
    %6473 = vmatprep.subr.mxu0 0.0
    %6474 = vmatpush1.msra.mxu0 %v6422
    %6475 = vmatprep.subr.mxu0 0.0
    %6476 = vmatpush1.msra.mxu0 %v6423
    %6477 = vmatprep.subr.mxu0 0.0
    %6478 = vmatpush1.msra.mxu0 %v6424
    %6479 = vmatprep.subr.mxu0 0.0
    %6480 = vmatpush1.msra.mxu0 %v6425
    %6481 = vmatprep.subr.mxu0 0.0
    %6482 = vmatpush1.msra.mxu0 %v6426
    %6483 = vmatprep.subr.mxu0 0.0
    %6484 = vmatpush1.msra.mxu0 %v6427
    %6485 = vmatprep.subr.mxu0 0.0
    %6486 = vmatpush1.msra.mxu0 %v6428
    %6487 = vmatprep.subr.mxu0 0.0
    %6488 = vmatpush1.msra.mxu0 %v6429
    %6489 = vmatprep.subr.mxu0 0.0
    %6490 = vmatpush1.msra.mxu0 %v6430
    %6491 = vmatprep.subr.mxu0 0.0
    %6492 = vmatpush1.msra.mxu0 %v6431
    %6493 = vmatprep.subr.mxu0 0.0
    %6494 = vmatpush1.msra.mxu0 %v6432
    %6495 = vmatprep.subr.mxu0 0.0
    %6496 = vmatpush1.msra.mxu0 %v6433
    %6497 = vmatprep.subr.mxu0 0.0
    %6498 = vmatpush1.msra.mxu0 %v6434
    %6499 = vmatprep.subr.mxu0 0.0
    %6500 = vmatpush1.msra.mxu0 %v6435
    %6501 = vmatprep.subr.mxu0 0.0
    %6502 = vmatpush1.msra.mxu0 %v6436
    %6503 = vmatprep.subr.mxu0 0.0
    %6504 = vmatpush1.msra.mxu0 %v6437
    %6505 = vmatprep.subr.mxu0 0.0
    %6506 = vmatpush1.msra.mxu0 %v6438
    %6507 = vmatprep.subr.mxu0 0.0
    %6508 = vmatpush1.msra.mxu0 %v6439
    %6509 = vmatprep.subr.mxu0 0.0
    %6510 = vmatpush1.msra.mxu0 %v6440
    %6511 = vmatprep.subr.mxu0 0.0
    %6512 = vmatpush1.msra.mxu0 %v6441
    %6513 = vmatprep.subr.mxu0 0.0
    %6514 = vmatpush1.msra.mxu0 %v6442
    %6515 = vmatprep.subr.mxu0 0.0
    %6516 = vmatpush1.msra.mxu0 %v6443
    %6517 = vmatprep.subr.mxu0 0.0
    %6518 = vmatpush1.msra.mxu0 %v6444
    %6519 = vmatprep.subr.mxu0 0.0
    %6520 = vmatpush1.msra.mxu0 %v6445
    %6521 = vmatprep.subr.mxu0 0.0
    %6522 = vmatpush1.msra.mxu0 %v6446
    %6523 = vmatprep.subr.mxu0 0.0
    %6524 = vmatpush1.msra.mxu0 %v6447
    %6525 = vmatprep.subr.mxu0 0.0
    %6526 = vmatpush1.msra.mxu0 %v6448
    %6527 = vmatprep.subr.mxu0 0.0
    %6528 = vmatpush1.msra.mxu0 0.0
    %6529 = vmatprep.subr.mxu0 0.0
    %6530 = vmatpush1.msra.mxu0 0.0
    %6531 = vmatprep.subr.mxu0 0.0
    %6532 = vmatpush1.msra.mxu0 0.0
    %6533 = vmatprep.subr.mxu0 0.0
    %6534 = vmatpush1.msra.mxu0 0.0
    %6535 = vmatprep.subr.mxu0 0.0
    %6536 = vmatpush1.msra.mxu0 0.0
    %6537 = vmatprep.mubr.f32.mxu0 %v6471
    %6538 = vmatmul.mubr.f32.gmra.mrb[0].mxu0 %v6467
    %v6539 = vpop.f32.mrb[0].mxu0
    %v6540 = vadd.f32 %v6458, %v6539
    %v6541 = vpop.f32.mrb[0].mxu0
    %6542 = vdwg.mxu0
    %vm6543 = vcmask 9216
    %v6544 = vsel %vm6543, %v6540, -inf
    %6545 = vmax.xlane.f32.xlu0 %v6544
    %v6546 = vpop.xlane.xlu0 %6545
    %v6547 = vsub.f32 %v6540, %v6546
    %v6548 = vmul.f32 %v6547, 1.442695
    %v6549 = vpow.pop %v6548
    %v6550 = vsel %vm6543, %v6549, 0.0
    %6551 = vadd.xlane.f32.xlu0 %v6550
    %v6552 = vpop.xlane.xlu0 %6551
    %v6553 = vlog2.pop %v6552
    %v6554 = vmul.f32 %v6553, 0.6931472
    %v6555 = vsub.f32 %v6547, %v6554
    %6556 = vst.msk [vmem:[#allocation3] sm:$0x3] %vm6543, %v6555
    // Predicated region
    $region54: #{gca_forward_pallas.1} parent=1 // pred_check
      _
    $region55: #{gca_forward_pallas.1} parent=1 // pred_check_branch
      %6558 = sbr.rel (0) target = $region57
    $region56: #{gca_forward_pallas.1} parent=1 // pred_region
      %s6560 = ssub.s32 32, 32
      %6561 = vsyncadd [#allocation4], %s6560
      %s6563 = sshll.u32 [#allocation3], 4
      %s6564 = int_to_ptr.vmem [resolvable:$true] %s6563
      %6566 = dma.vmem_to_hbm [thread:$0]  %s6564, 32, %s13, [#allocation4]
    $region57: #{gca_forward_pallas.1} parent=1 // pred_fallthru
      _
    // Predicated region
    $region58: #{gca_forward_pallas.1} parent=1 // pred_check
      _
    $region59: #{gca_forward_pallas.1} parent=1 // pred_check_branch
      %6568 = sbr.rel (0) target = $region61
    $region60: #{gca_forward_pallas.1} parent=1 // pred_region
      %6569 = dma.done [#allocation4], 32
    $region61: #{gca_forward_pallas.1} parent=1 // pred_fallthru
      _
    %6570 = vsyncpa [#allocation4], 1

</llo_original>
